<compile_context>
chip_gen: v7x
topology: tpu7x:2x2x1
jax: 0.10.0
libtpu: 0.0.40
codegen_flags: <defaults>
</compile_context>

<pallas_src>
import functools

import jax
import jax.numpy as jnp
from jax.experimental import pallas as pl
from jax.experimental.pallas import tpu as pltpu

# ----------------------------- config (small shapes) -----------------------------
BATCH = 2
SEQ_LEN = 8
EMB = 32
HID = 32
N_GLIMPSES = 1
TANH_EXPLORATION = 10.0
USE_TANH = True
NEG_BIG = -1e9          # additive mask value (finite, avoids -inf NaN pitfalls)


# ----------------------------- in-kernel helpers -----------------------------
def _lstm_cell(x, h, c, w_ih, w_hh, b):
    """PyTorch LSTMCell semantics (gate order i,f,g,o). x:[B,E] h,c:[B,H]
    w_ih:[E,4H] w_hh:[H,4H] b:[1,4H] (= b_ih + b_hh folded)."""
    gates = (jnp.dot(x, w_ih, preferred_element_type=jnp.float32)
             + jnp.dot(h, w_hh, preferred_element_type=jnp.float32) + b)
    hdim = h.shape[-1]
    i = jax.nn.sigmoid(gates[:, 0:hdim])
    f = jax.nn.sigmoid(gates[:, hdim:2 * hdim])
    g = jnp.tanh(gates[:, 2 * hdim:3 * hdim])
    o = jax.nn.sigmoid(gates[:, 3 * hdim:4 * hdim])
    c_new = f * c + i * g
    h_new = o * jnp.tanh(c_new)
    return h_new, c_new


def _softmax(x):
    m = jnp.max(x, axis=-1, keepdims=True)
    e = jnp.exp(x - m)
    return e / jnp.sum(e, axis=-1, keepdims=True)


# ----------------------------- fused kernel -----------------------------
def pointer_net_kernel(coords_ref, gumbel_ref,
                       emb_w_ref, emb_b_ref,
                       enc_wih_ref, enc_whh_ref, enc_b_ref,
                       wref_ref, bref_ref,
                       dec_wih_ref, dec_whh_ref, dec_b_ref,
                       g_wq_ref, g_bq_ref, g_v_ref,
                       p_wq_ref, p_bq_ref, p_v_ref,
                       dec_start_ref,
                       probs_ref, idxs_ref,
                       emb_sc, refg_sc, refp_sc, h_sc, c_sc, mask_sc, dec_in_sc,
                       *, n_glimpses, use_tanh, c_scale, neg_big):
    t = pl.program_id(0)
    B, S, E = emb_sc.shape
    H = h_sc.shape[-1]

    # ---------------- step 0: embedding + encoder + W_ref projections ----------------
    @pl.when(t == 0)
    def _():
        # GraphEmbedding: 1x1 Conv1d == one [B*S,2] x [2,E] matmul.
        coords = coords_ref[...].reshape(B * S, 2)
        emb = (jnp.dot(coords, emb_w_ref[...], preferred_element_type=jnp.float32)
               + emb_b_ref[...])
        emb3 = emb.reshape(B, S, E)
        emb_sc[...] = emb3

        # Encoder LSTM, statically unrolled over time (weights read once).
        wih = enc_wih_ref[...]
        whh = enc_whh_ref[...]
        b = enc_b_ref[...]
        h = jnp.zeros((B, H), dtype=jnp.float32)
        c = jnp.zeros((B, H), dtype=jnp.float32)
        enc_steps = []
        for s in range(S):
            h, c = _lstm_cell(emb3[:, s, :], h, c, wih, whh, b)
            enc_steps.append(h)
        h_sc[...] = h
        c_sc[...] = c
        enc = jnp.stack(enc_steps, axis=1)                               # [B, S, H]

        # Glimpse + pointer W_ref projections in ONE [B*S,H] x [H,2H] matmul.
        refs = (jnp.dot(enc.reshape(B * S, H), wref_ref[...],
                        preferred_element_type=jnp.float32) + bref_ref[...])
        refs = refs.reshape(B, S, 2 * H)
        refg_sc[...] = refs[:, :, :H]
        refp_sc[...] = refs[:, :, H:]

        mask_sc[...] = jnp.zeros((B, S), dtype=jnp.float32)
        dec_in_sc[...] = jnp.broadcast_to(dec_start_ref[...], (B, E))

    # ---------------- decode step t: decoder LSTM ----------------
    h_new, c_new = _lstm_cell(dec_in_sc[...], h_sc[...], c_sc[...],
                              dec_wih_ref[...], dec_whh_ref[...], dec_b_ref[...])
    h_sc[...] = h_new
    c_sc[...] = c_new

    mask = mask_sc[...]                     # [B, S], 1.0 == already visited
    mask_bias = mask * neg_big              # additive mask (no per-element select later)
    refg = refg_sc[...]                     # [B, S, H]
    refp = refp_sc[...]                     # [B, S, H]

    # Glimpse attention (Bahdanau, use_tanh=False).
    query = h_new
    for _ in range(n_glimpses):
        q = jnp.dot(query, g_wq_ref[...], preferred_element_type=jnp.float32) + g_bq_ref[...]
        u = jnp.tanh(q[:, None, :] + refg)                               # [B, S, H]
        g_logits = jnp.sum(u * g_v_ref[...][None, :, :], axis=-1) + mask_bias
        g_probs = _softmax(g_logits)
        query = jnp.sum(refg * g_probs[:, :, None], axis=1)              # [B, H]

    # Pointer attention (Bahdanau, optional C*tanh exploration).
    q = jnp.dot(query, p_wq_ref[...], preferred_element_type=jnp.float32) + p_bq_ref[...]
    u = jnp.tanh(q[:, None, :] + refp)
    logits = jnp.sum(u * p_v_ref[...][None, :, :], axis=-1)              # [B, S]
    if use_tanh:
        logits = c_scale * jnp.tanh(logits)
    logits = logits + mask_bias

    probs = _softmax(logits)
    probs_ref[t] = probs

    # ---------------- sampling: Gumbel-max == multinomial(probs) ----------------
    perturbed = logits + gumbel_ref[t]                                   # [B, S]
    ids = jax.lax.broadcasted_iota(jnp.int32, (B, S), 1)
    row_max = jnp.max(perturbed, axis=-1, keepdims=True)
    idx = jnp.min(jnp.where(perturbed >= row_max, ids, S),
                  axis=-1, keepdims=True)                                # [B, 1]
    idxs_ref[t] = idx

    # ---------------- bookkeeping: mask update + next decoder input ----------------
    onehot = (ids == idx).astype(jnp.float32)                            # [B, S]
    mask_sc[...] = jnp.maximum(mask, onehot)
    dec_in_sc[...] = jnp.sum(emb_sc[...] * onehot[:, :, None], axis=1)   # [B, E]


# ----------------------------- jitted forward wrapper -----------------------------
@jax.jit
def pointer_net_forward(inputs, params, key):
    """inputs: [B, 2, S] float32 city coords. Returns (probs [S,B,S], idxs [S,B])."""
    B = inputs.shape[0]
    S = inputs.shape[2]
    E = params['emb_w'].shape[1]
    H = params['g_wq'].shape[0]

    coords = jnp.transpose(inputs, (0, 2, 1)).astype(jnp.float32)        # [B, S, 2]

    # Precomputed Gumbel noise for the in-kernel multinomial sampling.
    u = jax.random.uniform(key, (S, B, S), jnp.float32, minval=1e-9, maxval=1.0)
    u = jnp.minimum(u, 1.0 - 1e-6)
    gumbel = -jnp.log(-jnp.log(u))                                       # [S, B, S]

    kernel = functools.partial(pointer_net_kernel,
                               n_glimpses=N_GLIMPSES,
                               use_tanh=USE_TANH,
                               c_scale=float(TANH_EXPLORATION),
                               neg_big=float(NEG_BIG))

    operands = (coords, gumbel,
                params['emb_w'], params['emb_b'],
                params['enc_wih'], params['enc_whh'], params['enc_b'],
                params['wref'], params['bref'],
                params['dec_wih'], params['dec_whh'], params['dec_b'],
                params['g_wq'], params['g_bq'], params['g_v'],
                params['p_wq'], params['p_bq'], params['p_v'],
                params['dec_start'])

    def full_spec(x):
        # Whole array resident in VMEM; constant index_map => fetched once, no re-DMA.
        zero = (0,) * x.ndim
        return pl.BlockSpec(x.shape, lambda t, _z=zero: _z)

    grid_spec = pltpu.PrefetchScalarGridSpec(
        num_scalar_prefetch=0,
        grid=(S,),
        in_specs=[full_spec(x) for x in operands],
        out_specs=[pl.BlockSpec((S, B, S), lambda t: (0, 0, 0)),
                   pl.BlockSpec((S, B, 1), lambda t: (0, 0, 0))],
        scratch_shapes=[pltpu.VMEM((B, S, E), jnp.float32),   # embedded
                        pltpu.VMEM((B, S, H), jnp.float32),   # glimpse ref
                        pltpu.VMEM((B, S, H), jnp.float32),   # pointer ref
                        pltpu.VMEM((B, H), jnp.float32),      # h
                        pltpu.VMEM((B, H), jnp.float32),      # c
                        pltpu.VMEM((B, S), jnp.float32),      # visited mask
                        pltpu.VMEM((B, E), jnp.float32)],     # decoder input
    )

    probs, idxs = pl.pallas_call(
        kernel,
        grid_spec=grid_spec,
        out_shape=(jax.ShapeDtypeStruct((S, B, S), jnp.float32),
                   jax.ShapeDtypeStruct((S, B, 1), jnp.int32)),
        compiler_params=pltpu.CompilerParams(dimension_semantics=("arbitrary",)),
    )(*operands)
    return probs, idxs[:, :, 0]


# ----------------------------- parameters -----------------------------
def init_params(key):
    E, H = EMB, HID
    s_e = 1.0 / (E ** 0.5)
    s_h = 1.0 / (H ** 0.5)
    s_xav = (6.0 / (2 + E)) ** 0.5

    def u(k, shape, scale):
        return jax.random.uniform(k, shape, jnp.float32, -scale, scale)

    ks = jax.random.split(key, 20)
    return {
        # GraphEmbedding: assumed Conv1d(2, E, 1); weight pre-transposed to [2, E].
        'emb_w': u(ks[0], (2, E), s_xav),
        'emb_b': jnp.zeros((1, E), jnp.float32),
        # encoder LSTM (PyTorch i,f,g,o gate order); weights pre-transposed, b_ih+b_hh folded.
        'enc_wih': u(ks[1], (E, 4 * H), s_h),
        'enc_whh': u(ks[2], (H, 4 * H), s_h),
        'enc_b':   u(ks[3], (1, 4 * H), s_h) + u(ks[4], (1, 4 * H), s_h),
        # decoder LSTM
        'dec_wih': u(ks[5], (E, 4 * H), s_h),
        'dec_whh': u(ks[6], (H, 4 * H), s_h),
        'dec_b':   u(ks[7], (1, 4 * H), s_h) + u(ks[8], (1, 4 * H), s_h),
        # W_ref Conv1d(H,H,1) for glimpse & pointer, concatenated into one [H, 2H] matmul.
        'wref': u(ks[9], (H, 2 * H), s_h),
        'bref': u(ks[10], (1, 2 * H), s_h),
        # glimpse attention (Bahdanau)
        'g_wq': u(ks[11], (H, H), s_h),
        'g_bq': u(ks[12], (1, H), s_h),
        'g_v':  u(ks[13], (1, H), s_h),
        # pointer attention (Bahdanau)
        'p_wq': u(ks[14], (H, H), s_h),
        'p_bq': u(ks[15], (1, H), s_h),
        'p_v':  u(ks[16], (1, H), s_h),
        # decoder start input
        'dec_start': u(ks[17], (1, E), s_e),
    }


# ----------------------------- main -----------------------------
if __name__ == "__main__":
    key = jax.random.PRNGKey(0)
    pkey, dkey, skey = jax.random.split(key, 3)
    params = init_params(pkey)
    inputs = jax.random.uniform(dkey, (BATCH, 2, SEQ_LEN), jnp.float32)  # TSP city coords

    probs, idxs = pointer_net_forward(inputs, params, skey)
    probs = jax.block_until_ready(probs)   # [S, B, S]
    idxs = jax.block_until_ready(idxs)     # [S, B]

    assert probs.shape == (SEQ_LEN, BATCH, SEQ_LEN)
    assert idxs.shape == (SEQ_LEN, BATCH)
    # each batch element's tour must be a permutation (masking guarantees it)
    for b in range(BATCH):
        tour = [int(i) for i in idxs[:, b]]
        assert len(set(tour)) == SEQ_LEN, f"tour is not a permutation: {tour}"
    # per-step probabilities are valid distributions
    assert bool(jnp.all(jnp.isfinite(probs)))
    assert bool(jnp.all(jnp.abs(jnp.sum(probs, axis=-1) - 1.0) < 1e-3))
    print("KERNEL_OK")
</pallas_src>

<mosaic_0001>
module attributes {stable_mosaic.version = 11 : i64} {
  func.func @pointer_net_kernel(%arg0: i32, %arg1: memref<2x8x2xf32, #tpu.memory_space<vmem>>, %arg2: memref<8x2x8xf32, #tpu.memory_space<vmem>>, %arg3: memref<2x32xf32, #tpu.memory_space<vmem>>, %arg4: memref<1x32xf32, #tpu.memory_space<vmem>>, %arg5: memref<32x128xf32, #tpu.memory_space<vmem>>, %arg6: memref<32x128xf32, #tpu.memory_space<vmem>>, %arg7: memref<1x128xf32, #tpu.memory_space<vmem>>, %arg8: memref<32x64xf32, #tpu.memory_space<vmem>>, %arg9: memref<1x64xf32, #tpu.memory_space<vmem>>, %arg10: memref<32x128xf32, #tpu.memory_space<vmem>>, %arg11: memref<32x128xf32, #tpu.memory_space<vmem>>, %arg12: memref<1x128xf32, #tpu.memory_space<vmem>>, %arg13: memref<32x32xf32, #tpu.memory_space<vmem>>, %arg14: memref<1x32xf32, #tpu.memory_space<vmem>>, %arg15: memref<1x32xf32, #tpu.memory_space<vmem>>, %arg16: memref<32x32xf32, #tpu.memory_space<vmem>>, %arg17: memref<1x32xf32, #tpu.memory_space<vmem>>, %arg18: memref<1x32xf32, #tpu.memory_space<vmem>>, %arg19: memref<1x32xf32, #tpu.memory_space<vmem>>, %arg20: memref<8x2x8xf32, #tpu.memory_space<vmem>>, %arg21: memref<8x2x1xi32, #tpu.memory_space<vmem>>, %arg22: memref<2x8x32xf32, #tpu.memory_space<vmem>>, %arg23: memref<2x8x32xf32, #tpu.memory_space<vmem>>, %arg24: memref<2x8x32xf32, #tpu.memory_space<vmem>>, %arg25: memref<2x32xf32, #tpu.memory_space<vmem>>, %arg26: memref<2x32xf32, #tpu.memory_space<vmem>>, %arg27: memref<2x8xf32, #tpu.memory_space<vmem>>, %arg28: memref<2x32xf32, #tpu.memory_space<vmem>>) attributes {dimension_semantics = [#tpu.dimension_semantics<arbitrary>], iteration_bounds = array<i64: 8>, scalar_prefetch = 0 : i64, scratch_operands = 7 : i64, tpu.core_type = #tpu.core_type<tc>, window_params = [{pipeline_mode = #tpu.pipeline_mode<synchronous>, transform_indices = @transform_0, window_bounds = array<i64: 2, 8, 2>}, {pipeline_mode = #tpu.pipeline_mode<synchronous>, transform_indices = @transform_1, window_bounds = array<i64: 8, 2, 8>}, {pipeline_mode = #tpu.pipeline_mode<synchronous>, transform_indices = @transform_2, window_bounds = array<i64: 2, 32>}, {pipeline_mode = #tpu.pipeline_mode<synchronous>, transform_indices = @transform_3, window_bounds = array<i64: 1, 32>}, {pipeline_mode = #tpu.pipeline_mode<synchronous>, transform_indices = @transform_4, window_bounds = array<i64: 32, 128>}, {pipeline_mode = #tpu.pipeline_mode<synchronous>, transform_indices = @transform_5, window_bounds = array<i64: 32, 128>}, {pipeline_mode = #tpu.pipeline_mode<synchronous>, transform_indices = @transform_6, window_bounds = array<i64: 1, 128>}, {pipeline_mode = #tpu.pipeline_mode<synchronous>, transform_indices = @transform_7, window_bounds = array<i64: 32, 64>}, {pipeline_mode = #tpu.pipeline_mode<synchronous>, transform_indices = @transform_8, window_bounds = array<i64: 1, 64>}, {pipeline_mode = #tpu.pipeline_mode<synchronous>, transform_indices = @transform_9, window_bounds = array<i64: 32, 128>}, {pipeline_mode = #tpu.pipeline_mode<synchronous>, transform_indices = @transform_10, window_bounds = array<i64: 32, 128>}, {pipeline_mode = #tpu.pipeline_mode<synchronous>, transform_indices = @transform_11, window_bounds = array<i64: 1, 128>}, {pipeline_mode = #tpu.pipeline_mode<synchronous>, transform_indices = @transform_12, window_bounds = array<i64: 32, 32>}, {pipeline_mode = #tpu.pipeline_mode<synchronous>, transform_indices = @transform_13, window_bounds = array<i64: 1, 32>}, {pipeline_mode = #tpu.pipeline_mode<synchronous>, transform_indices = @transform_14, window_bounds = array<i64: 1, 32>}, {pipeline_mode = #tpu.pipeline_mode<synchronous>, transform_indices = @transform_15, window_bounds = array<i64: 32, 32>}, {pipeline_mode = #tpu.pipeline_mode<synchronous>, transform_indices = @transform_16, window_bounds = array<i64: 1, 32>}, {pipeline_mode = #tpu.pipeline_mode<synchronous>, transform_indices = @transform_17, window_bounds = array<i64: 1, 32>}, {pipeline_mode = #tpu.pipeline_mode<synchronous>, transform_indices = @transform_18, window_bounds = array<i64: 1, 32>}, {pipeline_mode = #tpu.pipeline_mode<synchronous>, transform_indices = @transform_19, window_bounds = array<i64: 8, 2, 8>}, {pipeline_mode = #tpu.pipeline_mode<synchronous>, transform_indices = @transform_20, window_bounds = array<i64: 8, 2, 1>}]} {
    %c0_i32 = arith.constant 0 : i32
    %0 = arith.cmpi eq, %arg0, %c0_i32 : i32
    %1 = arith.extui %0 : i1 to i32
    %c0_i32_0 = arith.constant 0 : i32
    %2 = arith.cmpi ne, %1, %c0_i32_0 : i32
    scf.if %2 {
      %c0_67 = arith.constant 0 : index
      %c0_68 = arith.constant 0 : index
      %c0_69 = arith.constant 0 : index
      %134 = vector.load %arg1[%c0_67, %c0_68, %c0_69] : memref<2x8x2xf32, #tpu.memory_space<vmem>>, vector<2x8x2xf32>
      %135 = vector.shape_cast %134 : vector<2x8x2xf32> to vector<16x2xf32>
      %c0_70 = arith.constant 0 : index
      %c0_71 = arith.constant 0 : index
      %136 = vector.load %arg3[%c0_70, %c0_71] : memref<2x32xf32, #tpu.memory_space<vmem>>, vector<2x32xf32>
      %cst_72 = arith.constant dense<0.000000e+00> : vector<16x32xf32>
      %137 = tpu.matmul %135, %136, %cst_72 {dimension_numbers = #tpu.dot_dimension_numbers<[1], [0], [0], [1], [0, 0, 1, 1], [], []>} : vector<16x2xf32>, vector<2x32xf32>, vector<16x32xf32> -> vector<16x32xf32>
      %c0_73 = arith.constant 0 : index
      %c0_74 = arith.constant 0 : index
      %138 = vector.load %arg4[%c0_73, %c0_74] : memref<1x32xf32, #tpu.memory_space<vmem>>, vector<1x32xf32>
      %139 = vector.broadcast %138 : vector<1x32xf32> to vector<16x32xf32>
      %140 = arith.addf %137, %139 : vector<16x32xf32>
      %141 = vector.shape_cast %140 : vector<16x32xf32> to vector<2x8x32xf32>
      %c0_75 = arith.constant 0 : index
      %c0_76 = arith.constant 0 : index
      %c0_77 = arith.constant 0 : index
      %142 = vector.load %arg22[%c0_75, %c0_76, %c0_77] : memref<2x8x32xf32, #tpu.memory_space<vmem>>, vector<2x8x32xf32>
      tpu.vector_store %arg22[%c0_75, %c0_76, %c0_77], %141 {strides = array<i32>} : memref<2x8x32xf32, #tpu.memory_space<vmem>>, vector<2x8x32xf32>,
      %c0_78 = arith.constant 0 : index
      %c0_79 = arith.constant 0 : index
      %143 = vector.load %arg5[%c0_78, %c0_79] : memref<32x128xf32, #tpu.memory_space<vmem>>, vector<32x128xf32>
      %c0_80 = arith.constant 0 : index
      %c0_81 = arith.constant 0 : index
      %144 = vector.load %arg6[%c0_80, %c0_81] : memref<32x128xf32, #tpu.memory_space<vmem>>, vector<32x128xf32>
      %c0_82 = arith.constant 0 : index
      %c0_83 = arith.constant 0 : index
      %145 = vector.load %arg7[%c0_82, %c0_83] : memref<1x128xf32, #tpu.memory_space<vmem>>, vector<1x128xf32>
      %cst_84 = arith.constant 0.000000e+00 : f32
      %146 = vector.broadcast %cst_84 : f32 to vector<2x32xf32>
      %cst_85 = arith.constant 0.000000e+00 : f32
      %147 = vector.broadcast %cst_85 : f32 to vector<2x32xf32>
      %148 = vector.extract_strided_slice %141 {offsets = [0, 0, 0], sizes = [2, 1, 32], strides = [1, 1, 1]} : vector<2x8x32xf32> to vector<2x1x32xf32>
      %149 = vector.shape_cast %148 : vector<2x1x32xf32> to vector<2x32xf32>
      %cst_86 = arith.constant dense<0.000000e+00> : vector<2x128xf32>
      %150 = tpu.matmul %149, %143, %cst_86 {dimension_numbers = #tpu.dot_dimension_numbers<[1], [0], [0], [1], [0, 0, 1, 1], [], []>} : vector<2x32xf32>, vector<32x128xf32>, vector<2x128xf32> -> vector<2x128xf32>
      %cst_87 = arith.constant dense<0.000000e+00> : vector<2x128xf32>
      %151 = tpu.matmul %146, %144, %cst_87 {dimension_numbers = #tpu.dot_dimension_numbers<[1], [0], [0], [1], [0, 0, 1, 1], [], []>} : vector<2x32xf32>, vector<32x128xf32>, vector<2x128xf32> -> vector<2x128xf32>
      %152 = arith.addf %150, %151 : vector<2x128xf32>
      %153 = vector.broadcast %145 : vector<1x128xf32> to vector<2x128xf32>
      %154 = arith.addf %152, %153 : vector<2x128xf32>
      %155 = vector.extract_strided_slice %154 {offsets = [0, 0], sizes = [2, 32], strides = [1, 1]} : vector<2x128xf32> to vector<2x32xf32>
      %156 = arith.negf %155 : vector<2x32xf32>
      %157 = math.exp %156 : vector<2x32xf32>
      %cst_88 = arith.constant 1.000000e+00 : f32
      %158 = vector.broadcast %cst_88 : f32 to vector<2x32xf32>
      %159 = arith.addf %158, %157 : vector<2x32xf32>
      %160 = arith.divf %158, %159 : vector<2x32xf32>
      %161 = vector.extract_strided_slice %154 {offsets = [0, 32], sizes = [2, 32], strides = [1, 1]} : vector<2x128xf32> to vector<2x32xf32>
      %162 = arith.negf %161 : vector<2x32xf32>
      %163 = math.exp %162 : vector<2x32xf32>
      %cst_89 = arith.constant 1.000000e+00 : f32
      %164 = vector.broadcast %cst_89 : f32 to vector<2x32xf32>
      %165 = arith.addf %164, %163 : vector<2x32xf32>
      %166 = arith.divf %164, %165 : vector<2x32xf32>
      %167 = vector.extract_strided_slice %154 {offsets = [0, 64], sizes = [2, 32], strides = [1, 1]} : vector<2x128xf32> to vector<2x32xf32>
      %168 = math.tanh %167 : vector<2x32xf32>
      %169 = vector.extract_strided_slice %154 {offsets = [0, 96], sizes = [2, 32], strides = [1, 1]} : vector<2x128xf32> to vector<2x32xf32>
      %170 = arith.negf %169 : vector<2x32xf32>
      %171 = math.exp %170 : vector<2x32xf32>
      %cst_90 = arith.constant 1.000000e+00 : f32
      %172 = vector.broadcast %cst_90 : f32 to vector<2x32xf32>
      %173 = arith.addf %172, %171 : vector<2x32xf32>
      %174 = arith.divf %172, %173 : vector<2x32xf32>
      %175 = arith.mulf %166, %147 : vector<2x32xf32>
      %176 = arith.mulf %160, %168 : vector<2x32xf32>
      %177 = arith.addf %175, %176 : vector<2x32xf32>
      %178 = math.tanh %177 : vector<2x32xf32>
      %179 = arith.mulf %174, %178 : vector<2x32xf32>
      %180 = vector.extract_strided_slice %141 {offsets = [0, 1, 0], sizes = [2, 1, 32], strides = [1, 1, 1]} : vector<2x8x32xf32> to vector<2x1x32xf32>
      %181 = vector.shape_cast %180 : vector<2x1x32xf32> to vector<2x32xf32>
      %cst_91 = arith.constant dense<0.000000e+00> : vector<2x128xf32>
      %182 = tpu.matmul %181, %143, %cst_91 {dimension_numbers = #tpu.dot_dimension_numbers<[1], [0], [0], [1], [0, 0, 1, 1], [], []>} : vector<2x32xf32>, vector<32x128xf32>, vector<2x128xf32> -> vector<2x128xf32>
      %cst_92 = arith.constant dense<0.000000e+00> : vector<2x128xf32>
      %183 = tpu.matmul %179, %144, %cst_92 {dimension_numbers = #tpu.dot_dimension_numbers<[1], [0], [0], [1], [0, 0, 1, 1], [], []>} : vector<2x32xf32>, vector<32x128xf32>, vector<2x128xf32> -> vector<2x128xf32>
      %184 = arith.addf %182, %183 : vector<2x128xf32>
      %185 = vector.broadcast %145 : vector<1x128xf32> to vector<2x128xf32>
      %186 = arith.addf %184, %185 : vector<2x128xf32>
      %187 = vector.extract_strided_slice %186 {offsets = [0, 0], sizes = [2, 32], strides = [1, 1]} : vector<2x128xf32> to vector<2x32xf32>
      %188 = arith.negf %187 : vector<2x32xf32>
      %189 = math.exp %188 : vector<2x32xf32>
      %cst_93 = arith.constant 1.000000e+00 : f32
      %190 = vector.broadcast %cst_93 : f32 to vector<2x32xf32>
      %191 = arith.addf %190, %189 : vector<2x32xf32>
      %192 = arith.divf %190, %191 : vector<2x32xf32>
      %193 = vector.extract_strided_slice %186 {offsets = [0, 32], sizes = [2, 32], strides = [1, 1]} : vector<2x128xf32> to vector<2x32xf32>
      %194 = arith.negf %193 : vector<2x32xf32>
      %195 = math.exp %194 : vector<2x32xf32>
      %cst_94 = arith.constant 1.000000e+00 : f32
      %196 = vector.broadcast %cst_94 : f32 to vector<2x32xf32>
      %197 = arith.addf %196, %195 : vector<2x32xf32>
      %198 = arith.divf %196, %197 : vector<2x32xf32>
      %199 = vector.extract_strided_slice %186 {offsets = [0, 64], sizes = [2, 32], strides = [1, 1]} : vector<2x128xf32> to vector<2x32xf32>
      %200 = math.tanh %199 : vector<2x32xf32>
      %201 = vector.extract_strided_slice %186 {offsets = [0, 96], sizes = [2, 32], strides = [1, 1]} : vector<2x128xf32> to vector<2x32xf32>
      %202 = arith.negf %201 : vector<2x32xf32>
      %203 = math.exp %202 : vector<2x32xf32>
      %cst_95 = arith.constant 1.000000e+00 : f32
      %204 = vector.broadcast %cst_95 : f32 to vector<2x32xf32>
      %205 = arith.addf %204, %203 : vector<2x32xf32>
      %206 = arith.divf %204, %205 : vector<2x32xf32>
      %207 = arith.mulf %198, %177 : vector<2x32xf32>
      %208 = arith.mulf %192, %200 : vector<2x32xf32>
      %209 = arith.addf %207, %208 : vector<2x32xf32>
      %210 = math.tanh %209 : vector<2x32xf32>
      %211 = arith.mulf %206, %210 : vector<2x32xf32>
      %212 = vector.extract_strided_slice %141 {offsets = [0, 2, 0], sizes = [2, 1, 32], strides = [1, 1, 1]} : vector<2x8x32xf32> to vector<2x1x32xf32>
      %213 = vector.shape_cast %212 : vector<2x1x32xf32> to vector<2x32xf32>
      %cst_96 = arith.constant dense<0.000000e+00> : vector<2x128xf32>
      %214 = tpu.matmul %213, %143, %cst_96 {dimension_numbers = #tpu.dot_dimension_numbers<[1], [0], [0], [1], [0, 0, 1, 1], [], []>} : vector<2x32xf32>, vector<32x128xf32>, vector<2x128xf32> -> vector<2x128xf32>
      %cst_97 = arith.constant dense<0.000000e+00> : vector<2x128xf32>
      %215 = tpu.matmul %211, %144, %cst_97 {dimension_numbers = #tpu.dot_dimension_numbers<[1], [0], [0], [1], [0, 0, 1, 1], [], []>} : vector<2x32xf32>, vector<32x128xf32>, vector<2x128xf32> -> vector<2x128xf32>
      %216 = arith.addf %214, %215 : vector<2x128xf32>
      %217 = vector.broadcast %145 : vector<1x128xf32> to vector<2x128xf32>
      %218 = arith.addf %216, %217 : vector<2x128xf32>
      %219 = vector.extract_strided_slice %218 {offsets = [0, 0], sizes = [2, 32], strides = [1, 1]} : vector<2x128xf32> to vector<2x32xf32>
      %220 = arith.negf %219 : vector<2x32xf32>
      %221 = math.exp %220 : vector<2x32xf32>
      %cst_98 = arith.constant 1.000000e+00 : f32
      %222 = vector.broadcast %cst_98 : f32 to vector<2x32xf32>
      %223 = arith.addf %222, %221 : vector<2x32xf32>
      %224 = arith.divf %222, %223 : vector<2x32xf32>
      %225 = vector.extract_strided_slice %218 {offsets = [0, 32], sizes = [2, 32], strides = [1, 1]} : vector<2x128xf32> to vector<2x32xf32>
      %226 = arith.negf %225 : vector<2x32xf32>
      %227 = math.exp %226 : vector<2x32xf32>
      %cst_99 = arith.constant 1.000000e+00 : f32
      %228 = vector.broadcast %cst_99 : f32 to vector<2x32xf32>
      %229 = arith.addf %228, %227 : vector<2x32xf32>
      %230 = arith.divf %228, %229 : vector<2x32xf32>
      %231 = vector.extract_strided_slice %218 {offsets = [0, 64], sizes = [2, 32], strides = [1, 1]} : vector<2x128xf32> to vector<2x32xf32>
      %232 = math.tanh %231 : vector<2x32xf32>
      %233 = vector.extract_strided_slice %218 {offsets = [0, 96], sizes = [2, 32], strides = [1, 1]} : vector<2x128xf32> to vector<2x32xf32>
      %234 = arith.negf %233 : vector<2x32xf32>
      %235 = math.exp %234 : vector<2x32xf32>
      %cst_100 = arith.constant 1.000000e+00 : f32
      %236 = vector.broadcast %cst_100 : f32 to vector<2x32xf32>
      %237 = arith.addf %236, %235 : vector<2x32xf32>
      %238 = arith.divf %236, %237 : vector<2x32xf32>
      %239 = arith.mulf %230, %209 : vector<2x32xf32>
      %240 = arith.mulf %224, %232 : vector<2x32xf32>
      %241 = arith.addf %239, %240 : vector<2x32xf32>
      %242 = math.tanh %241 : vector<2x32xf32>
      %243 = arith.mulf %238, %242 : vector<2x32xf32>
      %244 = vector.extract_strided_slice %141 {offsets = [0, 3, 0], sizes = [2, 1, 32], strides = [1, 1, 1]} : vector<2x8x32xf32> to vector<2x1x32xf32>
      %245 = vector.shape_cast %244 : vector<2x1x32xf32> to vector<2x32xf32>
      %cst_101 = arith.constant dense<0.000000e+00> : vector<2x128xf32>
      %246 = tpu.matmul %245, %143, %cst_101 {dimension_numbers = #tpu.dot_dimension_numbers<[1], [0], [0], [1], [0, 0, 1, 1], [], []>} : vector<2x32xf32>, vector<32x128xf32>, vector<2x128xf32> -> vector<2x128xf32>
      %cst_102 = arith.constant dense<0.000000e+00> : vector<2x128xf32>
      %247 = tpu.matmul %243, %144, %cst_102 {dimension_numbers = #tpu.dot_dimension_numbers<[1], [0], [0], [1], [0, 0, 1, 1], [], []>} : vector<2x32xf32>, vector<32x128xf32>, vector<2x128xf32> -> vector<2x128xf32>
      %248 = arith.addf %246, %247 : vector<2x128xf32>
      %249 = vector.broadcast %145 : vector<1x128xf32> to vector<2x128xf32>
      %250 = arith.addf %248, %249 : vector<2x128xf32>
      %251 = vector.extract_strided_slice %250 {offsets = [0, 0], sizes = [2, 32], strides = [1, 1]} : vector<2x128xf32> to vector<2x32xf32>
      %252 = arith.negf %251 : vector<2x32xf32>
      %253 = math.exp %252 : vector<2x32xf32>
      %cst_103 = arith.constant 1.000000e+00 : f32
      %254 = vector.broadcast %cst_103 : f32 to vector<2x32xf32>
      %255 = arith.addf %254, %253 : vector<2x32xf32>
      %256 = arith.divf %254, %255 : vector<2x32xf32>
      %257 = vector.extract_strided_slice %250 {offsets = [0, 32], sizes = [2, 32], strides = [1, 1]} : vector<2x128xf32> to vector<2x32xf32>
      %258 = arith.negf %257 : vector<2x32xf32>
      %259 = math.exp %258 : vector<2x32xf32>
      %cst_104 = arith.constant 1.000000e+00 : f32
      %260 = vector.broadcast %cst_104 : f32 to vector<2x32xf32>
      %261 = arith.addf %260, %259 : vector<2x32xf32>
      %262 = arith.divf %260, %261 : vector<2x32xf32>
      %263 = vector.extract_strided_slice %250 {offsets = [0, 64], sizes = [2, 32], strides = [1, 1]} : vector<2x128xf32> to vector<2x32xf32>
      %264 = math.tanh %263 : vector<2x32xf32>
      %265 = vector.extract_strided_slice %250 {offsets = [0, 96], sizes = [2, 32], strides = [1, 1]} : vector<2x128xf32> to vector<2x32xf32>
      %266 = arith.negf %265 : vector<2x32xf32>
      %267 = math.exp %266 : vector<2x32xf32>
      %cst_105 = arith.constant 1.000000e+00 : f32
      %268 = vector.broadcast %cst_105 : f32 to vector<2x32xf32>
      %269 = arith.addf %268, %267 : vector<2x32xf32>
      %270 = arith.divf %268, %269 : vector<2x32xf32>
      %271 = arith.mulf %262, %241 : vector<2x32xf32>
      %272 = arith.mulf %256, %264 : vector<2x32xf32>
      %273 = arith.addf %271, %272 : vector<2x32xf32>
      %274 = math.tanh %273 : vector<2x32xf32>
      %275 = arith.mulf %270, %274 : vector<2x32xf32>
      %276 = vector.extract_strided_slice %141 {offsets = [0, 4, 0], sizes = [2, 1, 32], strides = [1, 1, 1]} : vector<2x8x32xf32> to vector<2x1x32xf32>
      %277 = vector.shape_cast %276 : vector<2x1x32xf32> to vector<2x32xf32>
      %cst_106 = arith.constant dense<0.000000e+00> : vector<2x128xf32>
      %278 = tpu.matmul %277, %143, %cst_106 {dimension_numbers = #tpu.dot_dimension_numbers<[1], [0], [0], [1], [0, 0, 1, 1], [], []>} : vector<2x32xf32>, vector<32x128xf32>, vector<2x128xf32> -> vector<2x128xf32>
      %cst_107 = arith.constant dense<0.000000e+00> : vector<2x128xf32>
      %279 = tpu.matmul %275, %144, %cst_107 {dimension_numbers = #tpu.dot_dimension_numbers<[1], [0], [0], [1], [0, 0, 1, 1], [], []>} : vector<2x32xf32>, vector<32x128xf32>, vector<2x128xf32> -> vector<2x128xf32>
      %280 = arith.addf %278, %279 : vector<2x128xf32>
      %281 = vector.broadcast %145 : vector<1x128xf32> to vector<2x128xf32>
      %282 = arith.addf %280, %281 : vector<2x128xf32>
      %283 = vector.extract_strided_slice %282 {offsets = [0, 0], sizes = [2, 32], strides = [1, 1]} : vector<2x128xf32> to vector<2x32xf32>
      %284 = arith.negf %283 : vector<2x32xf32>
      %285 = math.exp %284 : vector<2x32xf32>
      %cst_108 = arith.constant 1.000000e+00 : f32
      %286 = vector.broadcast %cst_108 : f32 to vector<2x32xf32>
      %287 = arith.addf %286, %285 : vector<2x32xf32>
      %288 = arith.divf %286, %287 : vector<2x32xf32>
      %289 = vector.extract_strided_slice %282 {offsets = [0, 32], sizes = [2, 32], strides = [1, 1]} : vector<2x128xf32> to vector<2x32xf32>
      %290 = arith.negf %289 : vector<2x32xf32>
      %291 = math.exp %290 : vector<2x32xf32>
      %cst_109 = arith.constant 1.000000e+00 : f32
      %292 = vector.broadcast %cst_109 : f32 to vector<2x32xf32>
      %293 = arith.addf %292, %291 : vector<2x32xf32>
      %294 = arith.divf %292, %293 : vector<2x32xf32>
      %295 = vector.extract_strided_slice %282 {offsets = [0, 64], sizes = [2, 32], strides = [1, 1]} : vector<2x128xf32> to vector<2x32xf32>
      %296 = math.tanh %295 : vector<2x32xf32>
      %297 = vector.extract_strided_slice %282 {offsets = [0, 96], sizes = [2, 32], strides = [1, 1]} : vector<2x128xf32> to vector<2x32xf32>
      %298 = arith.negf %297 : vector<2x32xf32>
      %299 = math.exp %298 : vector<2x32xf32>
      %cst_110 = arith.constant 1.000000e+00 : f32
      %300 = vector.broadcast %cst_110 : f32 to vector<2x32xf32>
      %301 = arith.addf %300, %299 : vector<2x32xf32>
      %302 = arith.divf %300, %301 : vector<2x32xf32>
      %303 = arith.mulf %294, %273 : vector<2x32xf32>
      %304 = arith.mulf %288, %296 : vector<2x32xf32>
      %305 = arith.addf %303, %304 : vector<2x32xf32>
      %306 = math.tanh %305 : vector<2x32xf32>
      %307 = arith.mulf %302, %306 : vector<2x32xf32>
      %308 = vector.extract_strided_slice %141 {offsets = [0, 5, 0], sizes = [2, 1, 32], strides = [1, 1, 1]} : vector<2x8x32xf32> to vector<2x1x32xf32>
      %309 = vector.shape_cast %308 : vector<2x1x32xf32> to vector<2x32xf32>
      %cst_111 = arith.constant dense<0.000000e+00> : vector<2x128xf32>
      %310 = tpu.matmul %309, %143, %cst_111 {dimension_numbers = #tpu.dot_dimension_numbers<[1], [0], [0], [1], [0, 0, 1, 1], [], []>} : vector<2x32xf32>, vector<32x128xf32>, vector<2x128xf32> -> vector<2x128xf32>
      %cst_112 = arith.constant dense<0.000000e+00> : vector<2x128xf32>
      %311 = tpu.matmul %307, %144, %cst_112 {dimension_numbers = #tpu.dot_dimension_numbers<[1], [0], [0], [1], [0, 0, 1, 1], [], []>} : vector<2x32xf32>, vector<32x128xf32>, vector<2x128xf32> -> vector<2x128xf32>
      %312 = arith.addf %310, %311 : vector<2x128xf32>
      %313 = vector.broadcast %145 : vector<1x128xf32> to vector<2x128xf32>
      %314 = arith.addf %312, %313 : vector<2x128xf32>
      %315 = vector.extract_strided_slice %314 {offsets = [0, 0], sizes = [2, 32], strides = [1, 1]} : vector<2x128xf32> to vector<2x32xf32>
      %316 = arith.negf %315 : vector<2x32xf32>
      %317 = math.exp %316 : vector<2x32xf32>
      %cst_113 = arith.constant 1.000000e+00 : f32
      %318 = vector.broadcast %cst_113 : f32 to vector<2x32xf32>
      %319 = arith.addf %318, %317 : vector<2x32xf32>
      %320 = arith.divf %318, %319 : vector<2x32xf32>
      %321 = vector.extract_strided_slice %314 {offsets = [0, 32], sizes = [2, 32], strides = [1, 1]} : vector<2x128xf32> to vector<2x32xf32>
      %322 = arith.negf %321 : vector<2x32xf32>
      %323 = math.exp %322 : vector<2x32xf32>
      %cst_114 = arith.constant 1.000000e+00 : f32
      %324 = vector.broadcast %cst_114 : f32 to vector<2x32xf32>
      %325 = arith.addf %324, %323 : vector<2x32xf32>
      %326 = arith.divf %324, %325 : vector<2x32xf32>
      %327 = vector.extract_strided_slice %314 {offsets = [0, 64], sizes = [2, 32], strides = [1, 1]} : vector<2x128xf32> to vector<2x32xf32>
      %328 = math.tanh %327 : vector<2x32xf32>
      %329 = vector.extract_strided_slice %314 {offsets = [0, 96], sizes = [2, 32], strides = [1, 1]} : vector<2x128xf32> to vector<2x32xf32>
      %330 = arith.negf %329 : vector<2x32xf32>
      %331 = math.exp %330 : vector<2x32xf32>
      %cst_115 = arith.constant 1.000000e+00 : f32
      %332 = vector.broadcast %cst_115 : f32 to vector<2x32xf32>
      %333 = arith.addf %332, %331 : vector<2x32xf32>
      %334 = arith.divf %332, %333 : vector<2x32xf32>
      %335 = arith.mulf %326, %305 : vector<2x32xf32>
      %336 = arith.mulf %320, %328 : vector<2x32xf32>
      %337 = arith.addf %335, %336 : vector<2x32xf32>
      %338 = math.tanh %337 : vector<2x32xf32>
      %339 = arith.mulf %334, %338 : vector<2x32xf32>
      %340 = vector.extract_strided_slice %141 {offsets = [0, 6, 0], sizes = [2, 1, 32], strides = [1, 1, 1]} : vector<2x8x32xf32> to vector<2x1x32xf32>
      %341 = vector.shape_cast %340 : vector<2x1x32xf32> to vector<2x32xf32>
      %cst_116 = arith.constant dense<0.000000e+00> : vector<2x128xf32>
      %342 = tpu.matmul %341, %143, %cst_116 {dimension_numbers = #tpu.dot_dimension_numbers<[1], [0], [0], [1], [0, 0, 1, 1], [], []>} : vector<2x32xf32>, vector<32x128xf32>, vector<2x128xf32> -> vector<2x128xf32>
      %cst_117 = arith.constant dense<0.000000e+00> : vector<2x128xf32>
      %343 = tpu.matmul %339, %144, %cst_117 {dimension_numbers = #tpu.dot_dimension_numbers<[1], [0], [0], [1], [0, 0, 1, 1], [], []>} : vector<2x32xf32>, vector<32x128xf32>, vector<2x128xf32> -> vector<2x128xf32>
      %344 = arith.addf %342, %343 : vector<2x128xf32>
      %345 = vector.broadcast %145 : vector<1x128xf32> to vector<2x128xf32>
      %346 = arith.addf %344, %345 : vector<2x128xf32>
      %347 = vector.extract_strided_slice %346 {offsets = [0, 0], sizes = [2, 32], strides = [1, 1]} : vector<2x128xf32> to vector<2x32xf32>
      %348 = arith.negf %347 : vector<2x32xf32>
      %349 = math.exp %348 : vector<2x32xf32>
      %cst_118 = arith.constant 1.000000e+00 : f32
      %350 = vector.broadcast %cst_118 : f32 to vector<2x32xf32>
      %351 = arith.addf %350, %349 : vector<2x32xf32>
      %352 = arith.divf %350, %351 : vector<2x32xf32>
      %353 = vector.extract_strided_slice %346 {offsets = [0, 32], sizes = [2, 32], strides = [1, 1]} : vector<2x128xf32> to vector<2x32xf32>
      %354 = arith.negf %353 : vector<2x32xf32>
      %355 = math.exp %354 : vector<2x32xf32>
      %cst_119 = arith.constant 1.000000e+00 : f32
      %356 = vector.broadcast %cst_119 : f32 to vector<2x32xf32>
      %357 = arith.addf %356, %355 : vector<2x32xf32>
      %358 = arith.divf %356, %357 : vector<2x32xf32>
      %359 = vector.extract_strided_slice %346 {offsets = [0, 64], sizes = [2, 32], strides = [1, 1]} : vector<2x128xf32> to vector<2x32xf32>
      %360 = math.tanh %359 : vector<2x32xf32>
      %361 = vector.extract_strided_slice %346 {offsets = [0, 96], sizes = [2, 32], strides = [1, 1]} : vector<2x128xf32> to vector<2x32xf32>
      %362 = arith.negf %361 : vector<2x32xf32>
      %363 = math.exp %362 : vector<2x32xf32>
      %cst_120 = arith.constant 1.000000e+00 : f32
      %364 = vector.broadcast %cst_120 : f32 to vector<2x32xf32>
      %365 = arith.addf %364, %363 : vector<2x32xf32>
      %366 = arith.divf %364, %365 : vector<2x32xf32>
      %367 = arith.mulf %358, %337 : vector<2x32xf32>
      %368 = arith.mulf %352, %360 : vector<2x32xf32>
      %369 = arith.addf %367, %368 : vector<2x32xf32>
      %370 = math.tanh %369 : vector<2x32xf32>
      %371 = arith.mulf %366, %370 : vector<2x32xf32>
      %372 = vector.extract_strided_slice %141 {offsets = [0, 7, 0], sizes = [2, 1, 32], strides = [1, 1, 1]} : vector<2x8x32xf32> to vector<2x1x32xf32>
      %373 = vector.shape_cast %372 : vector<2x1x32xf32> to vector<2x32xf32>
      %cst_121 = arith.constant dense<0.000000e+00> : vector<2x128xf32>
      %374 = tpu.matmul %373, %143, %cst_121 {dimension_numbers = #tpu.dot_dimension_numbers<[1], [0], [0], [1], [0, 0, 1, 1], [], []>} : vector<2x32xf32>, vector<32x128xf32>, vector<2x128xf32> -> vector<2x128xf32>
      %cst_122 = arith.constant dense<0.000000e+00> : vector<2x128xf32>
      %375 = tpu.matmul %371, %144, %cst_122 {dimension_numbers = #tpu.dot_dimension_numbers<[1], [0], [0], [1], [0, 0, 1, 1], [], []>} : vector<2x32xf32>, vector<32x128xf32>, vector<2x128xf32> -> vector<2x128xf32>
      %376 = arith.addf %374, %375 : vector<2x128xf32>
      %377 = vector.broadcast %145 : vector<1x128xf32> to vector<2x128xf32>
      %378 = arith.addf %376, %377 : vector<2x128xf32>
      %379 = vector.extract_strided_slice %378 {offsets = [0, 0], sizes = [2, 32], strides = [1, 1]} : vector<2x128xf32> to vector<2x32xf32>
      %380 = arith.negf %379 : vector<2x32xf32>
      %381 = math.exp %380 : vector<2x32xf32>
      %cst_123 = arith.constant 1.000000e+00 : f32
      %382 = vector.broadcast %cst_123 : f32 to vector<2x32xf32>
      %383 = arith.addf %382, %381 : vector<2x32xf32>
      %384 = arith.divf %382, %383 : vector<2x32xf32>
      %385 = vector.extract_strided_slice %378 {offsets = [0, 32], sizes = [2, 32], strides = [1, 1]} : vector<2x128xf32> to vector<2x32xf32>
      %386 = arith.negf %385 : vector<2x32xf32>
      %387 = math.exp %386 : vector<2x32xf32>
      %cst_124 = arith.constant 1.000000e+00 : f32
      %388 = vector.broadcast %cst_124 : f32 to vector<2x32xf32>
      %389 = arith.addf %388, %387 : vector<2x32xf32>
      %390 = arith.divf %388, %389 : vector<2x32xf32>
      %391 = vector.extract_strided_slice %378 {offsets = [0, 64], sizes = [2, 32], strides = [1, 1]} : vector<2x128xf32> to vector<2x32xf32>
      %392 = math.tanh %391 : vector<2x32xf32>
      %393 = vector.extract_strided_slice %378 {offsets = [0, 96], sizes = [2, 32], strides = [1, 1]} : vector<2x128xf32> to vector<2x32xf32>
      %394 = arith.negf %393 : vector<2x32xf32>
      %395 = math.exp %394 : vector<2x32xf32>
      %cst_125 = arith.constant 1.000000e+00 : f32
      %396 = vector.broadcast %cst_125 : f32 to vector<2x32xf32>
      %397 = arith.addf %396, %395 : vector<2x32xf32>
      %398 = arith.divf %396, %397 : vector<2x32xf32>
      %399 = arith.mulf %390, %369 : vector<2x32xf32>
      %400 = arith.mulf %384, %392 : vector<2x32xf32>
      %401 = arith.addf %399, %400 : vector<2x32xf32>
      %402 = math.tanh %401 : vector<2x32xf32>
      %403 = arith.mulf %398, %402 : vector<2x32xf32>
      %c0_126 = arith.constant 0 : index
      %c0_127 = arith.constant 0 : index
      %404 = vector.load %arg25[%c0_126, %c0_127] : memref<2x32xf32, #tpu.memory_space<vmem>>, vector<2x32xf32>
      tpu.vector_store %arg25[%c0_126, %c0_127], %403 {strides = array<i32>} : memref<2x32xf32, #tpu.memory_space<vmem>>, vector<2x32xf32>,
      %c0_128 = arith.constant 0 : index
      %c0_129 = arith.constant 0 : index
      %405 = vector.load %arg26[%c0_128, %c0_129] : memref<2x32xf32, #tpu.memory_space<vmem>>, vector<2x32xf32>
      tpu.vector_store %arg26[%c0_128, %c0_129], %401 {strides = array<i32>} : memref<2x32xf32, #tpu.memory_space<vmem>>, vector<2x32xf32>,
      %406 = vector.shape_cast %179 : vector<2x32xf32> to vector<2x1x32xf32>
      %407 = vector.shape_cast %211 : vector<2x32xf32> to vector<2x1x32xf32>
      %408 = vector.shape_cast %243 : vector<2x32xf32> to vector<2x1x32xf32>
      %409 = vector.shape_cast %275 : vector<2x32xf32> to vector<2x1x32xf32>
      %410 = vector.shape_cast %307 : vector<2x32xf32> to vector<2x1x32xf32>
      %411 = vector.shape_cast %339 : vector<2x32xf32> to vector<2x1x32xf32>
      %412 = vector.shape_cast %371 : vector<2x32xf32> to vector<2x1x32xf32>
      %413 = vector.shape_cast %403 : vector<2x32xf32> to vector<2x1x32xf32>
      %414 = tpu.concatenate %406, %407, %408, %409, %410, %411, %412, %413 in 1 : vector<2x1x32xf32>, vector<2x1x32xf32>, vector<2x1x32xf32>, vector<2x1x32xf32>, vector<2x1x32xf32>, vector<2x1x32xf32>, vector<2x1x32xf32>, vector<2x1x32xf32> -> vector<2x8x32xf32>
      %415 = vector.shape_cast %414 : vector<2x8x32xf32> to vector<16x32xf32>
      %c0_130 = arith.constant 0 : index
      %c0_131 = arith.constant 0 : index
      %416 = vector.load %arg8[%c0_130, %c0_131] : memref<32x64xf32, #tpu.memory_space<vmem>>, vector<32x64xf32>
      %cst_132 = arith.constant dense<0.000000e+00> : vector<16x64xf32>
      %417 = tpu.matmul %415, %416, %cst_132 {dimension_numbers = #tpu.dot_dimension_numbers<[1], [0], [0], [1], [0, 0, 1, 1], [], []>} : vector<16x32xf32>, vector<32x64xf32>, vector<16x64xf32> -> vector<16x64xf32>
      %c0_133 = arith.constant 0 : index
      %c0_134 = arith.constant 0 : index
      %418 = vector.load %arg9[%c0_133, %c0_134] : memref<1x64xf32, #tpu.memory_space<vmem>>, vector<1x64xf32>
      %419 = vector.broadcast %418 : vector<1x64xf32> to vector<16x64xf32>
      %420 = arith.addf %417, %419 : vector<16x64xf32>
      %421 = vector.shape_cast %420 : vector<16x64xf32> to vector<2x8x64xf32>
      %422 = vector.extract_strided_slice %421 {offsets = [0, 0, 0], sizes = [2, 8, 32], strides = [1, 1, 1]} : vector<2x8x64xf32> to vector<2x8x32xf32>
      %c0_135 = arith.constant 0 : index
      %c0_136 = arith.constant 0 : index
      %c0_137 = arith.constant 0 : index
      %423 = vector.load %arg23[%c0_135, %c0_136, %c0_137] : memref<2x8x32xf32, #tpu.memory_space<vmem>>, vector<2x8x32xf32>
      tpu.vector_store %arg23[%c0_135, %c0_136, %c0_137], %422 {strides = array<i32>} : memref<2x8x32xf32, #tpu.memory_space<vmem>>, vector<2x8x32xf32>,
      %424 = vector.extract_strided_slice %421 {offsets = [0, 0, 32], sizes = [2, 8, 32], strides = [1, 1, 1]} : vector<2x8x64xf32> to vector<2x8x32xf32>
      %c0_138 = arith.constant 0 : index
      %c0_139 = arith.constant 0 : index
      %c0_140 = arith.constant 0 : index
      %425 = vector.load %arg24[%c0_138, %c0_139, %c0_140] : memref<2x8x32xf32, #tpu.memory_space<vmem>>, vector<2x8x32xf32>
      tpu.vector_store %arg24[%c0_138, %c0_139, %c0_140], %424 {strides = array<i32>} : memref<2x8x32xf32, #tpu.memory_space<vmem>>, vector<2x8x32xf32>,
      %cst_141 = arith.constant 0.000000e+00 : f32
      %426 = vector.broadcast %cst_141 : f32 to vector<2x8xf32>
      %c0_142 = arith.constant 0 : index
      %c0_143 = arith.constant 0 : index
      %427 = vector.load %arg27[%c0_142, %c0_143] : memref<2x8xf32, #tpu.memory_space<vmem>>, vector<2x8xf32>
      tpu.vector_store %arg27[%c0_142, %c0_143], %426 {strides = array<i32>} : memref<2x8xf32, #tpu.memory_space<vmem>>, vector<2x8xf32>,
      %c0_144 = arith.constant 0 : index
      %c0_145 = arith.constant 0 : index
      %428 = vector.load %arg19[%c0_144, %c0_145] : memref<1x32xf32, #tpu.memory_space<vmem>>, vector<1x32xf32>
      %429 = vector.shape_cast %428 : vector<1x32xf32> to vector<1x32xf32>
      %430 = vector.broadcast %429 : vector<1x32xf32> to vector<2x32xf32>
      %c0_146 = arith.constant 0 : index
      %c0_147 = arith.constant 0 : index
      %431 = vector.load %arg28[%c0_146, %c0_147] : memref<2x32xf32, #tpu.memory_space<vmem>>, vector<2x32xf32>
      tpu.vector_store %arg28[%c0_146, %c0_147], %430 {strides = array<i32>} : memref<2x32xf32, #tpu.memory_space<vmem>>, vector<2x32xf32>,
    } else {
    }
    %c0 = arith.constant 0 : index
    %c0_1 = arith.constant 0 : index
    %3 = vector.load %arg28[%c0, %c0_1] : memref<2x32xf32, #tpu.memory_space<vmem>>, vector<2x32xf32>
    %c0_2 = arith.constant 0 : index
    %c0_3 = arith.constant 0 : index
    %4 = vector.load %arg25[%c0_2, %c0_3] : memref<2x32xf32, #tpu.memory_space<vmem>>, vector<2x32xf32>
    %c0_4 = arith.constant 0 : index
    %c0_5 = arith.constant 0 : index
    %5 = vector.load %arg26[%c0_4, %c0_5] : memref<2x32xf32, #tpu.memory_space<vmem>>, vector<2x32xf32>
    %c0_6 = arith.constant 0 : index
    %c0_7 = arith.constant 0 : index
    %6 = vector.load %arg10[%c0_6, %c0_7] : memref<32x128xf32, #tpu.memory_space<vmem>>, vector<32x128xf32>
    %c0_8 = arith.constant 0 : index
    %c0_9 = arith.constant 0 : index
    %7 = vector.load %arg11[%c0_8, %c0_9] : memref<32x128xf32, #tpu.memory_space<vmem>>, vector<32x128xf32>
    %c0_10 = arith.constant 0 : index
    %c0_11 = arith.constant 0 : index
    %8 = vector.load %arg12[%c0_10, %c0_11] : memref<1x128xf32, #tpu.memory_space<vmem>>, vector<1x128xf32>
    %cst = arith.constant dense<0.000000e+00> : vector<2x128xf32>
    %9 = tpu.matmul %3, %6, %cst {dimension_numbers = #tpu.dot_dimension_numbers<[1], [0], [0], [1], [0, 0, 1, 1], [], []>} : vector<2x32xf32>, vector<32x128xf32>, vector<2x128xf32> -> vector<2x128xf32>
    %cst_12 = arith.constant dense<0.000000e+00> : vector<2x128xf32>
    %10 = tpu.matmul %4, %7, %cst_12 {dimension_numbers = #tpu.dot_dimension_numbers<[1], [0], [0], [1], [0, 0, 1, 1], [], []>} : vector<2x32xf32>, vector<32x128xf32>, vector<2x128xf32> -> vector<2x128xf32>
    %11 = arith.addf %9, %10 : vector<2x128xf32>
    %12 = vector.broadcast %8 : vector<1x128xf32> to vector<2x128xf32>
    %13 = arith.addf %11, %12 : vector<2x128xf32>
    %14 = vector.extract_strided_slice %13 {offsets = [0, 0], sizes = [2, 32], strides = [1, 1]} : vector<2x128xf32> to vector<2x32xf32>
    %15 = arith.negf %14 : vector<2x32xf32>
    %16 = math.exp %15 : vector<2x32xf32>
    %cst_13 = arith.constant 1.000000e+00 : f32
    %17 = vector.broadcast %cst_13 : f32 to vector<2x32xf32>
    %18 = arith.addf %17, %16 : vector<2x32xf32>
    %19 = arith.divf %17, %18 : vector<2x32xf32>
    %20 = vector.extract_strided_slice %13 {offsets = [0, 32], sizes = [2, 32], strides = [1, 1]} : vector<2x128xf32> to vector<2x32xf32>
    %21 = arith.negf %20 : vector<2x32xf32>
    %22 = math.exp %21 : vector<2x32xf32>
    %cst_14 = arith.constant 1.000000e+00 : f32
    %23 = vector.broadcast %cst_14 : f32 to vector<2x32xf32>
    %24 = arith.addf %23, %22 : vector<2x32xf32>
    %25 = arith.divf %23, %24 : vector<2x32xf32>
    %26 = vector.extract_strided_slice %13 {offsets = [0, 64], sizes = [2, 32], strides = [1, 1]} : vector<2x128xf32> to vector<2x32xf32>
    %27 = math.tanh %26 : vector<2x32xf32>
    %28 = vector.extract_strided_slice %13 {offsets = [0, 96], sizes = [2, 32], strides = [1, 1]} : vector<2x128xf32> to vector<2x32xf32>
    %29 = arith.negf %28 : vector<2x32xf32>
    %30 = math.exp %29 : vector<2x32xf32>
    %cst_15 = arith.constant 1.000000e+00 : f32
    %31 = vector.broadcast %cst_15 : f32 to vector<2x32xf32>
    %32 = arith.addf %31, %30 : vector<2x32xf32>
    %33 = arith.divf %31, %32 : vector<2x32xf32>
    %34 = arith.mulf %25, %5 : vector<2x32xf32>
    %35 = arith.mulf %19, %27 : vector<2x32xf32>
    %36 = arith.addf %34, %35 : vector<2x32xf32>
    %37 = math.tanh %36 : vector<2x32xf32>
    %38 = arith.mulf %33, %37 : vector<2x32xf32>
    %c0_16 = arith.constant 0 : index
    %c0_17 = arith.constant 0 : index
    %39 = vector.load %arg25[%c0_16, %c0_17] : memref<2x32xf32, #tpu.memory_space<vmem>>, vector<2x32xf32>
    tpu.vector_store %arg25[%c0_16, %c0_17], %38 {strides = array<i32>} : memref<2x32xf32, #tpu.memory_space<vmem>>, vector<2x32xf32>,
    %c0_18 = arith.constant 0 : index
    %c0_19 = arith.constant 0 : index
    %40 = vector.load %arg26[%c0_18, %c0_19] : memref<2x32xf32, #tpu.memory_space<vmem>>, vector<2x32xf32>
    tpu.vector_store %arg26[%c0_18, %c0_19], %36 {strides = array<i32>} : memref<2x32xf32, #tpu.memory_space<vmem>>, vector<2x32xf32>,
    %c0_20 = arith.constant 0 : index
    %c0_21 = arith.constant 0 : index
    %41 = vector.load %arg27[%c0_20, %c0_21] : memref<2x8xf32, #tpu.memory_space<vmem>>, vector<2x8xf32>
    %cst_22 = arith.constant -1.000000e+09 : f32
    %42 = vector.broadcast %cst_22 : f32 to vector<2x8xf32>
    %43 = arith.mulf %41, %42 : vector<2x8xf32>
    %c0_23 = arith.constant 0 : index
    %c0_24 = arith.constant 0 : index
    %c0_25 = arith.constant 0 : index
    %44 = vector.load %arg23[%c0_23, %c0_24, %c0_25] : memref<2x8x32xf32, #tpu.memory_space<vmem>>, vector<2x8x32xf32>
    %c0_26 = arith.constant 0 : index
    %c0_27 = arith.constant 0 : index
    %c0_28 = arith.constant 0 : index
    %45 = vector.load %arg24[%c0_26, %c0_27, %c0_28] : memref<2x8x32xf32, #tpu.memory_space<vmem>>, vector<2x8x32xf32>
    %c0_29 = arith.constant 0 : index
    %c0_30 = arith.constant 0 : index
    %46 = vector.load %arg13[%c0_29, %c0_30] : memref<32x32xf32, #tpu.memory_space<vmem>>, vector<32x32xf32>
    %cst_31 = arith.constant dense<0.000000e+00> : vector<2x32xf32>
    %47 = tpu.matmul %38, %46, %cst_31 {dimension_numbers = #tpu.dot_dimension_numbers<[1], [0], [0], [1], [0, 0, 1, 1], [], []>} : vector<2x32xf32>, vector<32x32xf32>, vector<2x32xf32> -> vector<2x32xf32>
    %c0_32 = arith.constant 0 : index
    %c0_33 = arith.constant 0 : index
    %48 = vector.load %arg14[%c0_32, %c0_33] : memref<1x32xf32, #tpu.memory_space<vmem>>, vector<1x32xf32>
    %49 = vector.broadcast %48 : vector<1x32xf32> to vector<2x32xf32>
    %50 = arith.addf %47, %49 : vector<2x32xf32>
    %51 = vector.shape_cast %50 : vector<2x32xf32> to vector<2x1x32xf32>
    %52 = vector.broadcast %51 : vector<2x1x32xf32> to vector<2x8x32xf32>
    %53 = arith.addf %52, %44 : vector<2x8x32xf32>
    %54 = math.tanh %53 : vector<2x8x32xf32>
    %c0_34 = arith.constant 0 : index
    %c0_35 = arith.constant 0 : index
    %55 = vector.load %arg15[%c0_34, %c0_35] : memref<1x32xf32, #tpu.memory_space<vmem>>, vector<1x32xf32>
    %56 = vector.shape_cast %55 : vector<1x32xf32> to vector<1x1x32xf32>
    %57 = vector.broadcast %56 : vector<1x1x32xf32> to vector<2x8x32xf32>
    %58 = arith.mulf %54, %57 : vector<2x8x32xf32>
    %cst_36 = arith.constant dense<0.000000e+00> : vector<2x8xf32>
    %59 = vector.multi_reduction <add>, %58, %cst_36 [2] : vector<2x8x32xf32> to vector<2x8xf32>
    %60 = arith.addf %59, %43 : vector<2x8xf32>
    %cst_37 = arith.constant dense<0xFF800000> : vector<2xf32>
    %61 = vector.multi_reduction <maximumf>, %60, %cst_37 [1] : vector<2x8xf32> to vector<2xf32>
    %62 = vector.shape_cast %61 : vector<2xf32> to vector<2x1xf32>
    %63 = vector.broadcast %62 : vector<2x1xf32> to vector<2x8xf32>
    %64 = arith.subf %60, %63 : vector<2x8xf32>
    %65 = math.exp %64 : vector<2x8xf32>
    %cst_38 = arith.constant dense<0.000000e+00> : vector<2xf32>
    %66 = vector.multi_reduction <add>, %65, %cst_38 [1] : vector<2x8xf32> to vector<2xf32>
    %67 = vector.shape_cast %66 : vector<2xf32> to vector<2x1xf32>
    %68 = vector.broadcast %67 : vector<2x1xf32> to vector<2x8xf32>
    %69 = arith.divf %65, %68 : vector<2x8xf32>
    %70 = vector.shape_cast %69 : vector<2x8xf32> to vector<2x8x1xf32>
    %71 = vector.broadcast %70 : vector<2x8x1xf32> to vector<2x8x32xf32>
    %72 = arith.mulf %44, %71 : vector<2x8x32xf32>
    %cst_39 = arith.constant dense<0.000000e+00> : vector<2x32xf32>
    %73 = vector.multi_reduction <add>, %72, %cst_39 [1] : vector<2x8x32xf32> to vector<2x32xf32>
    %c0_40 = arith.constant 0 : index
    %c0_41 = arith.constant 0 : index
    %74 = vector.load %arg16[%c0_40, %c0_41] : memref<32x32xf32, #tpu.memory_space<vmem>>, vector<32x32xf32>
    %cst_42 = arith.constant dense<0.000000e+00> : vector<2x32xf32>
    %75 = tpu.matmul %73, %74, %cst_42 {dimension_numbers = #tpu.dot_dimension_numbers<[1], [0], [0], [1], [0, 0, 1, 1], [], []>} : vector<2x32xf32>, vector<32x32xf32>, vector<2x32xf32> -> vector<2x32xf32>
    %c0_43 = arith.constant 0 : index
    %c0_44 = arith.constant 0 : index
    %76 = vector.load %arg17[%c0_43, %c0_44] : memref<1x32xf32, #tpu.memory_space<vmem>>, vector<1x32xf32>
    %77 = vector.broadcast %76 : vector<1x32xf32> to vector<2x32xf32>
    %78 = arith.addf %75, %77 : vector<2x32xf32>
    %79 = vector.shape_cast %78 : vector<2x32xf32> to vector<2x1x32xf32>
    %80 = vector.broadcast %79 : vector<2x1x32xf32> to vector<2x8x32xf32>
    %81 = arith.addf %80, %45 : vector<2x8x32xf32>
    %82 = math.tanh %81 : vector<2x8x32xf32>
    %c0_45 = arith.constant 0 : index
    %c0_46 = arith.constant 0 : index
    %83 = vector.load %arg18[%c0_45, %c0_46] : memref<1x32xf32, #tpu.memory_space<vmem>>, vector<1x32xf32>
    %84 = vector.shape_cast %83 : vector<1x32xf32> to vector<1x1x32xf32>
    %85 = vector.broadcast %84 : vector<1x1x32xf32> to vector<2x8x32xf32>
    %86 = arith.mulf %82, %85 : vector<2x8x32xf32>
    %cst_47 = arith.constant dense<0.000000e+00> : vector<2x8xf32>
    %87 = vector.multi_reduction <add>, %86, %cst_47 [2] : vector<2x8x32xf32> to vector<2x8xf32>
    %88 = math.tanh %87 : vector<2x8xf32>
    %cst_48 = arith.constant 1.000000e+01 : f32
    %89 = vector.broadcast %cst_48 : f32 to vector<2x8xf32>
    %90 = arith.mulf %89, %88 : vector<2x8xf32>
    %91 = arith.addf %90, %43 : vector<2x8xf32>
    %cst_49 = arith.constant dense<0xFF800000> : vector<2xf32>
    %92 = vector.multi_reduction <maximumf>, %91, %cst_49 [1] : vector<2x8xf32> to vector<2xf32>
    %93 = vector.shape_cast %92 : vector<2xf32> to vector<2x1xf32>
    %94 = vector.broadcast %93 : vector<2x1xf32> to vector<2x8xf32>
    %95 = arith.subf %91, %94 : vector<2x8xf32>
    %96 = math.exp %95 : vector<2x8xf32>
    %cst_50 = arith.constant dense<0.000000e+00> : vector<2xf32>
    %97 = vector.multi_reduction <add>, %96, %cst_50 [1] : vector<2x8xf32> to vector<2xf32>
    %98 = vector.shape_cast %97 : vector<2xf32> to vector<2x1xf32>
    %99 = vector.broadcast %98 : vector<2x1xf32> to vector<2x8xf32>
    %100 = arith.divf %96, %99 : vector<2x8xf32>
    %101 = arith.index_cast %arg0 : i32 to index
    %c0_51 = arith.constant 0 : index
    %c0_52 = arith.constant 0 : index
    %102 = vector.load %arg20[%101, %c0_51, %c0_52] : memref<8x2x8xf32, #tpu.memory_space<vmem>>, vector<1x2x8xf32>
    %103 = vector.shape_cast %102 : vector<1x2x8xf32> to vector<2x8xf32>
    %104 = vector.shape_cast %100 : vector<2x8xf32> to vector<1x2x8xf32>
    tpu.vector_store %arg20[%101, %c0_51, %c0_52], %104 {strides = array<i32>} : memref<8x2x8xf32, #tpu.memory_space<vmem>>, vector<1x2x8xf32>,
    %105 = arith.index_cast %arg0 : i32 to index
    %c0_53 = arith.constant 0 : index
    %c0_54 = arith.constant 0 : index
    %106 = vector.load %arg2[%105, %c0_53, %c0_54] : memref<8x2x8xf32, #tpu.memory_space<vmem>>, vector<1x2x8xf32>
    %107 = vector.shape_cast %106 : vector<1x2x8xf32> to vector<2x8xf32>
    %108 = arith.addf %91, %107 : vector<2x8xf32>
    %109 = tpu.iota {dimensions = array<i32: 1>} : vector<2x8xi32>
    %cst_55 = arith.constant dense<0xFF800000> : vector<2xf32>
    %110 = vector.multi_reduction <maximumf>, %108, %cst_55 [1] : vector<2x8xf32> to vector<2xf32>
    %111 = vector.shape_cast %110 : vector<2xf32> to vector<2x1xf32>
    %112 = vector.broadcast %111 : vector<2x1xf32> to vector<2x8xf32>
    %113 = arith.cmpf oge, %108, %112 : vector<2x8xf32>
    %c8_i32 = arith.constant 8 : i32
    %114 = vector.broadcast %c8_i32 : i32 to vector<2x8xi32>
    %115 = arith.select %113, %109, %114 : vector<2x8xi1>, vector<2x8xi32>
    %cst_56 = arith.constant dense<2147483647> : vector<2xi32>
    %116 = vector.multi_reduction <minsi>, %115, %cst_56 [1] : vector<2x8xi32> to vector<2xi32>
    %117 = vector.shape_cast %116 : vector<2xi32> to vector<2x1xi32>
    %118 = arith.index_cast %arg0 : i32 to index
    %c0_57 = arith.constant 0 : index
    %c0_58 = arith.constant 0 : index
    %119 = vector.load %arg21[%118, %c0_57, %c0_58] : memref<8x2x1xi32, #tpu.memory_space<vmem>>, vector<1x2x1xi32>
    %120 = vector.shape_cast %119 : vector<1x2x1xi32> to vector<2x1xi32>
    %121 = vector.shape_cast %117 : vector<2x1xi32> to vector<1x2x1xi32>
    tpu.vector_store %arg21[%118, %c0_57, %c0_58], %121 {strides = array<i32>} : memref<8x2x1xi32, #tpu.memory_space<vmem>>, vector<1x2x1xi32>,
    %122 = vector.broadcast %117 : vector<2x1xi32> to vector<2x8xi32>
    %123 = arith.cmpi eq, %109, %122 : vector<2x8xi32>
    %124 = arith.extui %123 : vector<2x8xi1> to vector<2x8xi32>
    %125 = arith.sitofp %124 : vector<2x8xi32> to vector<2x8xf32>
    %126 = arith.maximumf %41, %125 : vector<2x8xf32>
    %c0_59 = arith.constant 0 : index
    %c0_60 = arith.constant 0 : index
    %127 = vector.load %arg27[%c0_59, %c0_60] : memref<2x8xf32, #tpu.memory_space<vmem>>, vector<2x8xf32>
    tpu.vector_store %arg27[%c0_59, %c0_60], %126 {strides = array<i32>} : memref<2x8xf32, #tpu.memory_space<vmem>>, vector<2x8xf32>,
    %c0_61 = arith.constant 0 : index
    %c0_62 = arith.constant 0 : index
    %c0_63 = arith.constant 0 : index
    %128 = vector.load %arg22[%c0_61, %c0_62, %c0_63] : memref<2x8x32xf32, #tpu.memory_space<vmem>>, vector<2x8x32xf32>
    %129 = vector.shape_cast %125 : vector<2x8xf32> to vector<2x8x1xf32>
    %130 = vector.broadcast %129 : vector<2x8x1xf32> to vector<2x8x32xf32>
    %131 = arith.mulf %128, %130 : vector<2x8x32xf32>
    %cst_64 = arith.constant dense<0.000000e+00> : vector<2x32xf32>
    %132 = vector.multi_reduction <add>, %131, %cst_64 [1] : vector<2x8x32xf32> to vector<2x32xf32>
    %c0_65 = arith.constant 0 : index
    %c0_66 = arith.constant 0 : index
    %133 = vector.load %arg28[%c0_65, %c0_66] : memref<2x32xf32, #tpu.memory_space<vmem>>, vector<2x32xf32>
    tpu.vector_store %arg28[%c0_65, %c0_66], %132 {strides = array<i32>} : memref<2x32xf32, #tpu.memory_space<vmem>>, vector<2x32xf32>,
    return
  }
  func.func @transform_0(%arg0: i32) -> (i32, i32, i32) {
    %c0_i32 = arith.constant 0 : i32
    %c0_i32_0 = arith.constant 0 : i32
    %c0_i32_1 = arith.constant 0 : i32
    %c0_i32_2 = arith.constant 0 : i32
    return %c0_i32, %c0_i32_0, %c0_i32_1 : i32, i32, i32
  }
  func.func @transform_1(%arg0: i32) -> (i32, i32, i32) {
    %c0_i32 = arith.constant 0 : i32
    %c0_i32_0 = arith.constant 0 : i32
    %c0_i32_1 = arith.constant 0 : i32
    %c0_i32_2 = arith.constant 0 : i32
    return %c0_i32, %c0_i32_0, %c0_i32_1 : i32, i32, i32
  }
  func.func @transform_2(%arg0: i32) -> (i32, i32) {
    %c0_i32 = arith.constant 0 : i32
    %c0_i32_0 = arith.constant 0 : i32
    %c0_i32_1 = arith.constant 0 : i32
    return %c0_i32, %c0_i32_0 : i32, i32
  }
  func.func @transform_3(%arg0: i32) -> (i32, i32) {
    %c0_i32 = arith.constant 0 : i32
    %c0_i32_0 = arith.constant 0 : i32
    %c0_i32_1 = arith.constant 0 : i32
    return %c0_i32, %c0_i32_0 : i32, i32
  }
  func.func @transform_4(%arg0: i32) -> (i32, i32) {
    %c0_i32 = arith.constant 0 : i32
    %c0_i32_0 = arith.constant 0 : i32
    %c0_i32_1 = arith.constant 0 : i32
    return %c0_i32, %c0_i32_0 : i32, i32
  }
  func.func @transform_5(%arg0: i32) -> (i32, i32) {
    %c0_i32 = arith.constant 0 : i32
    %c0_i32_0 = arith.constant 0 : i32
    %c0_i32_1 = arith.constant 0 : i32
    return %c0_i32, %c0_i32_0 : i32, i32
  }
  func.func @transform_6(%arg0: i32) -> (i32, i32) {
    %c0_i32 = arith.constant 0 : i32
    %c0_i32_0 = arith.constant 0 : i32
    %c0_i32_1 = arith.constant 0 : i32
    return %c0_i32, %c0_i32_0 : i32, i32
  }
  func.func @transform_7(%arg0: i32) -> (i32, i32) {
    %c0_i32 = arith.constant 0 : i32
    %c0_i32_0 = arith.constant 0 : i32
    %c0_i32_1 = arith.constant 0 : i32
    return %c0_i32, %c0_i32_0 : i32, i32
  }
  func.func @transform_8(%arg0: i32) -> (i32, i32) {
    %c0_i32 = arith.constant 0 : i32
    %c0_i32_0 = arith.constant 0 : i32
    %c0_i32_1 = arith.constant 0 : i32
    return %c0_i32, %c0_i32_0 : i32, i32
  }
  func.func @transform_9(%arg0: i32) -> (i32, i32) {
    %c0_i32 = arith.constant 0 : i32
    %c0_i32_0 = arith.constant 0 : i32
    %c0_i32_1 = arith.constant 0 : i32
    return %c0_i32, %c0_i32_0 : i32, i32
  }
  func.func @transform_10(%arg0: i32) -> (i32, i32) {
    %c0_i32 = arith.constant 0 : i32
    %c0_i32_0 = arith.constant 0 : i32
    %c0_i32_1 = arith.constant 0 : i32
    return %c0_i32, %c0_i32_0 : i32, i32
  }
  func.func @transform_11(%arg0: i32) -> (i32, i32) {
    %c0_i32 = arith.constant 0 : i32
    %c0_i32_0 = arith.constant 0 : i32
    %c0_i32_1 = arith.constant 0 : i32
    return %c0_i32, %c0_i32_0 : i32, i32
  }
  func.func @transform_12(%arg0: i32) -> (i32, i32) {
    %c0_i32 = arith.constant 0 : i32
    %c0_i32_0 = arith.constant 0 : i32
    %c0_i32_1 = arith.constant 0 : i32
    return %c0_i32, %c0_i32_0 : i32, i32
  }
  func.func @transform_13(%arg0: i32) -> (i32, i32) {
    %c0_i32 = arith.constant 0 : i32
    %c0_i32_0 = arith.constant 0 : i32
    %c0_i32_1 = arith.constant 0 : i32
    return %c0_i32, %c0_i32_0 : i32, i32
  }
  func.func @transform_14(%arg0: i32) -> (i32, i32) {
    %c0_i32 = arith.constant 0 : i32
    %c0_i32_0 = arith.constant 0 : i32
    %c0_i32_1 = arith.constant 0 : i32
    return %c0_i32, %c0_i32_0 : i32, i32
  }
  func.func @transform_15(%arg0: i32) -> (i32, i32) {
    %c0_i32 = arith.constant 0 : i32
    %c0_i32_0 = arith.constant 0 : i32
    %c0_i32_1 = arith.constant 0 : i32
    return %c0_i32, %c0_i32_0 : i32, i32
  }
  func.func @transform_16(%arg0: i32) -> (i32, i32) {
    %c0_i32 = arith.constant 0 : i32
    %c0_i32_0 = arith.constant 0 : i32
    %c0_i32_1 = arith.constant 0 : i32
    return %c0_i32, %c0_i32_0 : i32, i32
  }
  func.func @transform_17(%arg0: i32) -> (i32, i32) {
    %c0_i32 = arith.constant 0 : i32
    %c0_i32_0 = arith.constant 0 : i32
    %c0_i32_1 = arith.constant 0 : i32
    return %c0_i32, %c0_i32_0 : i32, i32
  }
  func.func @transform_18(%arg0: i32) -> (i32, i32) {
    %c0_i32 = arith.constant 0 : i32
    %c0_i32_0 = arith.constant 0 : i32
    %c0_i32_1 = arith.constant 0 : i32
    return %c0_i32, %c0_i32_0 : i32, i32
  }
  func.func @transform_19(%arg0: i32) -> (i32, i32, i32) {
    %c0_i32 = arith.constant 0 : i32
    %c0_i32_0 = arith.constant 0 : i32
    %c0_i32_1 = arith.constant 0 : i32
    %c0_i32_2 = arith.constant 0 : i32
    return %c0_i32, %c0_i32_0, %c0_i32_1 : i32, i32, i32
  }
  func.func @transform_20(%arg0: i32) -> (i32, i32, i32) {
    %c0_i32 = arith.constant 0 : i32
    %c0_i32_0 = arith.constant 0 : i32
    %c0_i32_1 = arith.constant 0 : i32
    %c0_i32_2 = arith.constant 0 : i32
    return %c0_i32, %c0_i32_0, %c0_i32_1 : i32, i32, i32
  }
}

</mosaic_0001>

<llo_original>
// kernel: pointer_net_forward.1
$region0: #{pointer_net_forward.1}
  #allocation0 [shape = 'u32[]', space=smem, size = 0x4, offset = 0x4, fixed_abs, tag = 'smem constant byte address 0x4 - core index']
  #allocation1 [shape = 'u32[144,128]{1,0:T(1,128)}', space=vmem, size = 0x12000, scoped, tag = 'internal scratch']
  #allocation2 [shape = 'f32[2,8,32]{2,1,0:T(8,128)}', space=vmem, size = 0x2000, scoped, tag = 'scratch operand']
  #allocation3 [shape = 'f32[2,8,32]{2,1,0:T(8,128)}', space=vmem, size = 0x2000, scoped, tag = 'scratch operand']
  #allocation4 [shape = 'f32[2,8,32]{2,1,0:T(8,128)}', space=vmem, size = 0x2000, scoped, tag = 'scratch operand']
  #allocation5 [shape = 'f32[2,32]{1,0:T(2,128)}', space=vmem, size = 0x400, scoped, tag = 'scratch operand']
  #allocation6 [shape = 'f32[2,32]{1,0:T(2,128)}', space=vmem, size = 0x400, scoped, tag = 'scratch operand']
  #allocation7 [shape = 'f32[2,8]{1,0:T(2,128)}', space=vmem, size = 0x400, scoped, tag = 'scratch operand']
  #allocation8 [shape = 'f32[2,32]{1,0:T(2,128)}', space=vmem, size = 0x400, scoped, tag = 'scratch operand']
  %s0 = inlined_call_operand.vmem [shape: f32[2,8,2], index: 0, kind: input, shape index: {}]
  %s1 = inlined_call_operand.vmem [shape: f32[8,2,8], index: 1, kind: input, shape index: {}]
  %s2 = inlined_call_operand.hbm [shape: f32[2,32], index: 2, kind: input, shape index: {}]
  %s3 = inlined_call_operand.vmem [shape: f32[1,32], index: 3, kind: input, shape index: {}]
  %s4 = inlined_call_operand.vmem [shape: f32[32,128], index: 4, kind: input, shape index: {}]
  %s5 = inlined_call_operand.vmem [shape: f32[32,128], index: 5, kind: input, shape index: {}]
  %s6 = inlined_call_operand.hbm [shape: f32[1,128], index: 6, kind: input, shape index: {}]
  %s7 = inlined_call_operand.vmem [shape: f32[32,64], index: 7, kind: input, shape index: {}]
  %s8 = inlined_call_operand.hbm [shape: f32[1,64], index: 8, kind: input, shape index: {}]
  %s9 = inlined_call_operand.vmem [shape: f32[32,128], index: 9, kind: input, shape index: {}]
  %s10 = inlined_call_operand.hbm [shape: f32[32,128], index: 10, kind: input, shape index: {}]
  %s11 = inlined_call_operand.vmem [shape: f32[1,128], index: 11, kind: input, shape index: {}]
  %s12 = inlined_call_operand.hbm [shape: f32[32,32], index: 12, kind: input, shape index: {}]
  %s13 = inlined_call_operand.vmem [shape: f32[1,32], index: 13, kind: input, shape index: {}]
  %s14 = inlined_call_operand.vmem [shape: f32[1,32], index: 14, kind: input, shape index: {}]
  %s15 = inlined_call_operand.hbm [shape: f32[32,32], index: 15, kind: input, shape index: {}]
  %s16 = inlined_call_operand.vmem [shape: f32[1,32], index: 16, kind: input, shape index: {}]
  %s17 = inlined_call_operand.vmem [shape: f32[1,32], index: 17, kind: input, shape index: {}]
  %s18 = inlined_call_operand.vmem [shape: f32[1,32], index: 18, kind: input, shape index: {}]
  %s19 = inlined_call_operand.hbm [shape: f32[8,2,8], index: 19, kind: output, shape index: {0}]
  %s20 = inlined_call_operand.vmem [shape: s32[8,2,1], index: 20, kind: output, shape index: {1}]
  %21 = xla_tuple %s19, %s20
  %s22 = sld [smem:[#allocation0]]
  $region145: #{pointer_net_forward.1} parent=0
    _
  %s24 = ssub.s32 1, %s22
  %s25 = scalar_select 0, %s24, %s22
  $region1: #{pointer_net_forward.1} parent=0
    #allocation9 [shape = 'u8[1024]{0}', space=vmem, size = 0x400, scoped, tag = 'input window, operand 2, single buffered']
    #allocation10 [shape = 's32[2]{0}', space=sflag, size = 0x8, scoped, tag = 'scoped memory for pointer_net_forward.1']
    #allocation11 [shape = 's32[2]{0}', space=sflag, size = 0x8, scoped, tag = 'scoped memory for pointer_net_forward.1']
    #allocation12 [shape = 'u8[512]{0}', space=vmem, size = 0x400, scoped, tag = 'input window, operand 6, single buffered']
    #allocation13 [shape = 's32[1]{0}', space=sflag, size = 0x4, scoped, tag = 'scoped memory for pointer_net_forward.1']
    #allocation14 [shape = 'u8[512]{0}', space=vmem, size = 0x400, scoped, tag = 'input window, operand 8, single buffered']
    #allocation15 [shape = 'u8[16384]{0}', space=vmem, size = 0x4000, scoped, tag = 'input window, operand 10, single buffered']
    #allocation16 [shape = 's32[1]{0}', space=sflag, size = 0x4, scoped, tag = 'scoped memory for pointer_net_forward.1']
    #allocation17 [shape = 'u8[16384]{0}', space=vmem, size = 0x4000, scoped, tag = 'input window, operand 12, single buffered']
    #allocation18 [shape = 'u8[16384]{0}', space=vmem, size = 0x4000, scoped, tag = 'input window, operand 15, single buffered']
    #allocation19 [shape = 's32[1]{0}', space=sflag, size = 0x4, scoped, tag = 'scoped memory for pointer_net_forward.1']
    #allocation20 [shape = 'u8[8192]{0}', space=vmem, size = 0x2000, scoped, tag = 'output window, operand 0, single buffered']
    %26 = vsyncpa [#allocation10], 0
    %27 = vsyncpa [#allocation13], 0
    %28 = vsyncpa [#allocation16], 0
    %29 = vsyncpa [#allocation19], 0
    %30 = vsyncpa [#allocation11], 0
    loop: start=0, step=1, limit=10
    $region2: #{pointer_net_forward.1} parent=1 // loop_pre_header
      _
    $region3: #{pointer_net_forward.1} parent=1 // loop_header
      %s32 = sphi 0, %s36
      %p33 = scmp.ge.s32.totalorder %s32, 10
      %s40 = sphi 0, %s40
      %s42 = sphi 0, %s40
      %s43 = sphi 0, %s42
      %s57 = sphi 0, %s43
      %s61 = sphi 0, %s61
      %s63 = sphi 0, %s61
      %s64 = sphi 0, %s63
      %s78 = sphi 0, %s64
      %s82 = sphi 0, %s82
      %s84 = sphi 0, %s82
      %s85 = sphi 0, %s84
      %s99 = sphi 0, %s85
      %s103 = sphi 0, %s103
      %s105 = sphi 0, %s103
      %s106 = sphi 0, %s105
      %s120 = sphi 0, %s106
      %s124 = sphi 0, %s124
      %s126 = sphi 0, %s124
      %s127 = sphi 0, %s126
      %s141 = sphi 0, %s127
      %s145 = sphi 0, %s145
      %s147 = sphi 0, %s145
      %s148 = sphi 0, %s147
      %s162 = sphi 0, %s148
      %s166 = sphi 0, %s166
      %s168 = sphi 0, %s166
      %s169 = sphi 0, %s168
      %s183 = sphi 0, %s169
      %s187 = sphi 0, %s187
      %s189 = sphi 0, %s187
      %s190 = sphi 0, %s189
      %s204 = sphi 0, %s190
      %s208 = sphi 0, %s208
      %s210 = sphi 0, %s208
      %s211 = sphi 0, %s210
      %s225 = sphi 0, %s211
      %s229 = sphi 0, %s229
      %s231 = sphi 0, %s229
      %s232 = sphi 0, %s231
      %s246 = sphi 0, %s232
      %s250 = sphi 0, %s250
      %s252 = sphi 0, %s250
      %s253 = sphi 0, %s252
      %s267 = sphi 0, %s253
      %s271 = sphi 0, %s271
      %s273 = sphi 0, %s271
      %s274 = sphi 0, %s273
      %s288 = sphi 0, %s274
      %s292 = sphi 0, %s292
      %s294 = sphi 0, %s292
      %s295 = sphi 0, %s294
      %s309 = sphi 0, %s295
      %s313 = sphi 0, %s313
      %s315 = sphi 0, %s313
      %s316 = sphi 0, %s315
      %s330 = sphi 0, %s316
      %s334 = sphi 0, %s334
      %s336 = sphi 0, %s334
      %s337 = sphi 0, %s336
      %s351 = sphi 0, %s337
      %s355 = sphi 0, %s355
      %s357 = sphi 0, %s355
      %s358 = sphi 0, %s357
      %s372 = sphi 0, %s358
      %s376 = sphi 0, %s376
      %s378 = sphi 0, %s376
      %s379 = sphi 0, %s378
      %s393 = sphi 0, %s379
      %s397 = sphi 0, %s397
      %s399 = sphi 0, %s397
      %s400 = sphi 0, %s399
      %s414 = sphi 0, %s400
      %s418 = sphi 0, %s418
      %s420 = sphi 0, %s418
      %s421 = sphi 0, %s420
      %s435 = sphi 0, %s421
      %s439 = sphi 0, %s439
      %s441 = sphi 0, %s439
      %s442 = sphi 0, %s441
      %s456 = sphi 0, %s442
      %s460 = sphi 0, %s460
      %s462 = sphi 0, %s460
      %s463 = sphi 0, %s462
      %s477 = sphi 0, %s463
    $region4: #{pointer_net_forward.1} parent=1 // loop_header_branch
      %35 = sbr.rel (%p33) target = $region8
    $region5: #{pointer_net_forward.1} parent=1 // loop_body
      %s37 = ssub.s32 %s32, 1
      %s38 = ssub.s32 %s32, 2
      %s39 = sadd.s32 %s32, 1
      %s41 = sadd.s32 %s40, 1
      %p44 = scmp.eq.s32.totalorder %s32, 7
      %p45 = scmp.ne.s32.totalorder %s40, %s42
      %p46 = scmp.eq.s32.totalorder %s32, 0
      %p47 = por %p45, %p46
      %p48 = scmp.ne.s32.totalorder %s40, %s42
      %p49 = scmp.eq.s32.totalorder %s37, 7
      %p50 = por %p48, %p49
      %p51 = scmp.ne.s32.totalorder %s42, %s43
      %p52 = scmp.eq.s32.totalorder %s37, 0
      %p53 = por %p51, %p52
      %p54 = scmp.ne.s32.totalorder %s42, %s43
      %p55 = scmp.eq.s32.totalorder %s38, 7
      %p56 = por %p54, %p55
      %p58 = scmp.ne.s32.totalorder %s43, %s57
      %p59 = scmp.eq.s32.totalorder %s38, 0
      %p60 = por %p58, %p59
      %s62 = sadd.s32 %s61, 1
      %p65 = scmp.eq.s32.totalorder %s32, 7
      %p66 = scmp.ne.s32.totalorder %s61, %s63
      %p67 = scmp.eq.s32.totalorder %s32, 0
      %p68 = por %p66, %p67
      %p69 = scmp.ne.s32.totalorder %s61, %s63
      %p70 = scmp.eq.s32.totalorder %s37, 7
      %p71 = por %p69, %p70
      %p72 = scmp.ne.s32.totalorder %s63, %s64
      %p73 = scmp.eq.s32.totalorder %s37, 0
      %p74 = por %p72, %p73
      %p75 = scmp.ne.s32.totalorder %s63, %s64
      %p76 = scmp.eq.s32.totalorder %s38, 7
      %p77 = por %p75, %p76
      %p79 = scmp.ne.s32.totalorder %s64, %s78
      %p80 = scmp.eq.s32.totalorder %s38, 0
      %p81 = por %p79, %p80
      %s83 = sadd.s32 %s82, 1
      %p86 = scmp.eq.s32.totalorder %s32, 7
      %p87 = scmp.ne.s32.totalorder %s82, %s84
      %p88 = scmp.eq.s32.totalorder %s32, 0
      %p89 = por %p87, %p88
      %p90 = scmp.ne.s32.totalorder %s82, %s84
      %p91 = scmp.eq.s32.totalorder %s37, 7
      %p92 = por %p90, %p91
      %p93 = scmp.ne.s32.totalorder %s84, %s85
      %p94 = scmp.eq.s32.totalorder %s37, 0
      %p95 = por %p93, %p94
      %p96 = scmp.ne.s32.totalorder %s84, %s85
      %p97 = scmp.eq.s32.totalorder %s38, 7
      %p98 = por %p96, %p97
      %p100 = scmp.ne.s32.totalorder %s85, %s99
      %p101 = scmp.eq.s32.totalorder %s38, 0
      %p102 = por %p100, %p101
      %s104 = sadd.s32 %s103, 1
      %p107 = scmp.eq.s32.totalorder %s32, 7
      %p108 = scmp.ne.s32.totalorder %s103, %s105
      %p109 = scmp.eq.s32.totalorder %s32, 0
      %p110 = por %p108, %p109
      %p111 = scmp.ne.s32.totalorder %s103, %s105
      %p112 = scmp.eq.s32.totalorder %s37, 7
      %p113 = por %p111, %p112
      %p114 = scmp.ne.s32.totalorder %s105, %s106
      %p115 = scmp.eq.s32.totalorder %s37, 0
      %p116 = por %p114, %p115
      %p117 = scmp.ne.s32.totalorder %s105, %s106
      %p118 = scmp.eq.s32.totalorder %s38, 7
      %p119 = por %p117, %p118
      %p121 = scmp.ne.s32.totalorder %s106, %s120
      %p122 = scmp.eq.s32.totalorder %s38, 0
      %p123 = por %p121, %p122
      %s125 = sadd.s32 %s124, 1
      %p128 = scmp.eq.s32.totalorder %s32, 7
      %p129 = scmp.ne.s32.totalorder %s124, %s126
      %p130 = scmp.eq.s32.totalorder %s32, 0
      %p131 = por %p129, %p130
      %p132 = scmp.ne.s32.totalorder %s124, %s126
      %p133 = scmp.eq.s32.totalorder %s37, 7
      %p134 = por %p132, %p133
      %p135 = scmp.ne.s32.totalorder %s126, %s127
      %p136 = scmp.eq.s32.totalorder %s37, 0
      %p137 = por %p135, %p136
      %p138 = scmp.ne.s32.totalorder %s126, %s127
      %p139 = scmp.eq.s32.totalorder %s38, 7
      %p140 = por %p138, %p139
      %p142 = scmp.ne.s32.totalorder %s127, %s141
      %p143 = scmp.eq.s32.totalorder %s38, 0
      %p144 = por %p142, %p143
      %s146 = sadd.s32 %s145, 1
      %p149 = scmp.eq.s32.totalorder %s32, 7
      %p150 = scmp.ne.s32.totalorder %s145, %s147
      %p151 = scmp.eq.s32.totalorder %s32, 0
      %p152 = por %p150, %p151
      %p153 = scmp.ne.s32.totalorder %s145, %s147
      %p154 = scmp.eq.s32.totalorder %s37, 7
      %p155 = por %p153, %p154
      %p156 = scmp.ne.s32.totalorder %s147, %s148
      %p157 = scmp.eq.s32.totalorder %s37, 0
      %p158 = por %p156, %p157
      %p159 = scmp.ne.s32.totalorder %s147, %s148
      %p160 = scmp.eq.s32.totalorder %s38, 7
      %p161 = por %p159, %p160
      %p163 = scmp.ne.s32.totalorder %s148, %s162
      %p164 = scmp.eq.s32.totalorder %s38, 0
      %p165 = por %p163, %p164
      %s167 = sadd.s32 %s166, 1
      %p170 = scmp.eq.s32.totalorder %s32, 7
      %p171 = scmp.ne.s32.totalorder %s166, %s168
      %p172 = scmp.eq.s32.totalorder %s32, 0
      %p173 = por %p171, %p172
      %p174 = scmp.ne.s32.totalorder %s166, %s168
      %p175 = scmp.eq.s32.totalorder %s37, 7
      %p176 = por %p174, %p175
      %p177 = scmp.ne.s32.totalorder %s168, %s169
      %p178 = scmp.eq.s32.totalorder %s37, 0
      %p179 = por %p177, %p178
      %p180 = scmp.ne.s32.totalorder %s168, %s169
      %p181 = scmp.eq.s32.totalorder %s38, 7
      %p182 = por %p180, %p181
      %p184 = scmp.ne.s32.totalorder %s169, %s183
      %p185 = scmp.eq.s32.totalorder %s38, 0
      %p186 = por %p184, %p185
      %s188 = sadd.s32 %s187, 1
      %p191 = scmp.eq.s32.totalorder %s32, 7
      %p192 = scmp.ne.s32.totalorder %s187, %s189
      %p193 = scmp.eq.s32.totalorder %s32, 0
      %p194 = por %p192, %p193
      %p195 = scmp.ne.s32.totalorder %s187, %s189
      %p196 = scmp.eq.s32.totalorder %s37, 7
      %p197 = por %p195, %p196
      %p198 = scmp.ne.s32.totalorder %s189, %s190
      %p199 = scmp.eq.s32.totalorder %s37, 0
      %p200 = por %p198, %p199
      %p201 = scmp.ne.s32.totalorder %s189, %s190
      %p202 = scmp.eq.s32.totalorder %s38, 7
      %p203 = por %p201, %p202
      %p205 = scmp.ne.s32.totalorder %s190, %s204
      %p206 = scmp.eq.s32.totalorder %s38, 0
      %p207 = por %p205, %p206
      %s209 = sadd.s32 %s208, 1
      %p212 = scmp.eq.s32.totalorder %s32, 7
      %p213 = scmp.ne.s32.totalorder %s208, %s210
      %p214 = scmp.eq.s32.totalorder %s32, 0
      %p215 = por %p213, %p214
      %p216 = scmp.ne.s32.totalorder %s208, %s210
      %p217 = scmp.eq.s32.totalorder %s37, 7
      %p218 = por %p216, %p217
      %p219 = scmp.ne.s32.totalorder %s210, %s211
      %p220 = scmp.eq.s32.totalorder %s37, 0
      %p221 = por %p219, %p220
      %p222 = scmp.ne.s32.totalorder %s210, %s211
      %p223 = scmp.eq.s32.totalorder %s38, 7
      %p224 = por %p222, %p223
      %p226 = scmp.ne.s32.totalorder %s211, %s225
      %p227 = scmp.eq.s32.totalorder %s38, 0
      %p228 = por %p226, %p227
      %s230 = sadd.s32 %s229, 1
      %p233 = scmp.eq.s32.totalorder %s32, 7
      %p234 = scmp.ne.s32.totalorder %s229, %s231
      %p235 = scmp.eq.s32.totalorder %s32, 0
      %p236 = por %p234, %p235
      %p237 = scmp.ne.s32.totalorder %s229, %s231
      %p238 = scmp.eq.s32.totalorder %s37, 7
      %p239 = por %p237, %p238
      %p240 = scmp.ne.s32.totalorder %s231, %s232
      %p241 = scmp.eq.s32.totalorder %s37, 0
      %p242 = por %p240, %p241
      %p243 = scmp.ne.s32.totalorder %s231, %s232
      %p244 = scmp.eq.s32.totalorder %s38, 7
      %p245 = por %p243, %p244
      %p247 = scmp.ne.s32.totalorder %s232, %s246
      %p248 = scmp.eq.s32.totalorder %s38, 0
      %p249 = por %p247, %p248
      %s251 = sadd.s32 %s250, 1
      %p254 = scmp.eq.s32.totalorder %s32, 7
      %p255 = scmp.ne.s32.totalorder %s250, %s252
      %p256 = scmp.eq.s32.totalorder %s32, 0
      %p257 = por %p255, %p256
      %p258 = scmp.ne.s32.totalorder %s250, %s252
      %p259 = scmp.eq.s32.totalorder %s37, 7
      %p260 = por %p258, %p259
      %p261 = scmp.ne.s32.totalorder %s252, %s253
      %p262 = scmp.eq.s32.totalorder %s37, 0
      %p263 = por %p261, %p262
      %p264 = scmp.ne.s32.totalorder %s252, %s253
      %p265 = scmp.eq.s32.totalorder %s38, 7
      %p266 = por %p264, %p265
      %p268 = scmp.ne.s32.totalorder %s253, %s267
      %p269 = scmp.eq.s32.totalorder %s38, 0
      %p270 = por %p268, %p269
      %s272 = sadd.s32 %s271, 1
      %p275 = scmp.eq.s32.totalorder %s32, 7
      %p276 = scmp.ne.s32.totalorder %s271, %s273
      %p277 = scmp.eq.s32.totalorder %s32, 0
      %p278 = por %p276, %p277
      %p279 = scmp.ne.s32.totalorder %s271, %s273
      %p280 = scmp.eq.s32.totalorder %s37, 7
      %p281 = por %p279, %p280
      %p282 = scmp.ne.s32.totalorder %s273, %s274
      %p283 = scmp.eq.s32.totalorder %s37, 0
      %p284 = por %p282, %p283
      %p285 = scmp.ne.s32.totalorder %s273, %s274
      %p286 = scmp.eq.s32.totalorder %s38, 7
      %p287 = por %p285, %p286
      %p289 = scmp.ne.s32.totalorder %s274, %s288
      %p290 = scmp.eq.s32.totalorder %s38, 0
      %p291 = por %p289, %p290
      %s293 = sadd.s32 %s292, 1
      %p296 = scmp.eq.s32.totalorder %s32, 7
      %p297 = scmp.ne.s32.totalorder %s292, %s294
      %p298 = scmp.eq.s32.totalorder %s32, 0
      %p299 = por %p297, %p298
      %p300 = scmp.ne.s32.totalorder %s292, %s294
      %p301 = scmp.eq.s32.totalorder %s37, 7
      %p302 = por %p300, %p301
      %p303 = scmp.ne.s32.totalorder %s294, %s295
      %p304 = scmp.eq.s32.totalorder %s37, 0
      %p305 = por %p303, %p304
      %p306 = scmp.ne.s32.totalorder %s294, %s295
      %p307 = scmp.eq.s32.totalorder %s38, 7
      %p308 = por %p306, %p307
      %p310 = scmp.ne.s32.totalorder %s295, %s309
      %p311 = scmp.eq.s32.totalorder %s38, 0
      %p312 = por %p310, %p311
      %s314 = sadd.s32 %s313, 1
      %p317 = scmp.eq.s32.totalorder %s32, 7
      %p318 = scmp.ne.s32.totalorder %s313, %s315
      %p319 = scmp.eq.s32.totalorder %s32, 0
      %p320 = por %p318, %p319
      %p321 = scmp.ne.s32.totalorder %s313, %s315
      %p322 = scmp.eq.s32.totalorder %s37, 7
      %p323 = por %p321, %p322
      %p324 = scmp.ne.s32.totalorder %s315, %s316
      %p325 = scmp.eq.s32.totalorder %s37, 0
      %p326 = por %p324, %p325
      %p327 = scmp.ne.s32.totalorder %s315, %s316
      %p328 = scmp.eq.s32.totalorder %s38, 7
      %p329 = por %p327, %p328
      %p331 = scmp.ne.s32.totalorder %s316, %s330
      %p332 = scmp.eq.s32.totalorder %s38, 0
      %p333 = por %p331, %p332
      %s335 = sadd.s32 %s334, 1
      %p338 = scmp.eq.s32.totalorder %s32, 7
      %p339 = scmp.ne.s32.totalorder %s334, %s336
      %p340 = scmp.eq.s32.totalorder %s32, 0
      %p341 = por %p339, %p340
      %p342 = scmp.ne.s32.totalorder %s334, %s336
      %p343 = scmp.eq.s32.totalorder %s37, 7
      %p344 = por %p342, %p343
      %p345 = scmp.ne.s32.totalorder %s336, %s337
      %p346 = scmp.eq.s32.totalorder %s37, 0
      %p347 = por %p345, %p346
      %p348 = scmp.ne.s32.totalorder %s336, %s337
      %p349 = scmp.eq.s32.totalorder %s38, 7
      %p350 = por %p348, %p349
      %p352 = scmp.ne.s32.totalorder %s337, %s351
      %p353 = scmp.eq.s32.totalorder %s38, 0
      %p354 = por %p352, %p353
      %s356 = sadd.s32 %s355, 1
      %p359 = scmp.eq.s32.totalorder %s32, 7
      %p360 = scmp.ne.s32.totalorder %s355, %s357
      %p361 = scmp.eq.s32.totalorder %s32, 0
      %p362 = por %p360, %p361
      %p363 = scmp.ne.s32.totalorder %s355, %s357
      %p364 = scmp.eq.s32.totalorder %s37, 7
      %p365 = por %p363, %p364
      %p366 = scmp.ne.s32.totalorder %s357, %s358
      %p367 = scmp.eq.s32.totalorder %s37, 0
      %p368 = por %p366, %p367
      %p369 = scmp.ne.s32.totalorder %s357, %s358
      %p370 = scmp.eq.s32.totalorder %s38, 7
      %p371 = por %p369, %p370
      %p373 = scmp.ne.s32.totalorder %s358, %s372
      %p374 = scmp.eq.s32.totalorder %s38, 0
      %p375 = por %p373, %p374
      %s377 = sadd.s32 %s376, 1
      %p380 = scmp.eq.s32.totalorder %s32, 7
      %p381 = scmp.ne.s32.totalorder %s376, %s378
      %p382 = scmp.eq.s32.totalorder %s32, 0
      %p383 = por %p381, %p382
      %p384 = scmp.ne.s32.totalorder %s376, %s378
      %p385 = scmp.eq.s32.totalorder %s37, 7
      %p386 = por %p384, %p385
      %p387 = scmp.ne.s32.totalorder %s378, %s379
      %p388 = scmp.eq.s32.totalorder %s37, 0
      %p389 = por %p387, %p388
      %p390 = scmp.ne.s32.totalorder %s378, %s379
      %p391 = scmp.eq.s32.totalorder %s38, 7
      %p392 = por %p390, %p391
      %p394 = scmp.ne.s32.totalorder %s379, %s393
      %p395 = scmp.eq.s32.totalorder %s38, 0
      %p396 = por %p394, %p395
      %s398 = sadd.s32 %s397, 1
      %p401 = scmp.eq.s32.totalorder %s32, 7
      %p402 = scmp.ne.s32.totalorder %s397, %s399
      %p403 = scmp.eq.s32.totalorder %s32, 0
      %p404 = por %p402, %p403
      %p405 = scmp.ne.s32.totalorder %s397, %s399
      %p406 = scmp.eq.s32.totalorder %s37, 7
      %p407 = por %p405, %p406
      %p408 = scmp.ne.s32.totalorder %s399, %s400
      %p409 = scmp.eq.s32.totalorder %s37, 0
      %p410 = por %p408, %p409
      %p411 = scmp.ne.s32.totalorder %s399, %s400
      %p412 = scmp.eq.s32.totalorder %s38, 7
      %p413 = por %p411, %p412
      %p415 = scmp.ne.s32.totalorder %s400, %s414
      %p416 = scmp.eq.s32.totalorder %s38, 0
      %p417 = por %p415, %p416
      %s419 = sadd.s32 %s418, 1
      %p422 = scmp.eq.s32.totalorder %s32, 7
      %p423 = scmp.ne.s32.totalorder %s418, %s420
      %p424 = scmp.eq.s32.totalorder %s32, 0
      %p425 = por %p423, %p424
      %p426 = scmp.ne.s32.totalorder %s418, %s420
      %p427 = scmp.eq.s32.totalorder %s37, 7
      %p428 = por %p426, %p427
      %p429 = scmp.ne.s32.totalorder %s420, %s421
      %p430 = scmp.eq.s32.totalorder %s37, 0
      %p431 = por %p429, %p430
      %p432 = scmp.ne.s32.totalorder %s420, %s421
      %p433 = scmp.eq.s32.totalorder %s38, 7
      %p434 = por %p432, %p433
      %p436 = scmp.ne.s32.totalorder %s421, %s435
      %p437 = scmp.eq.s32.totalorder %s38, 0
      %p438 = por %p436, %p437
      %s440 = sadd.s32 %s439, 1
      %p443 = scmp.eq.s32.totalorder %s32, 7
      %p444 = scmp.ne.s32.totalorder %s439, %s441
      %p445 = scmp.eq.s32.totalorder %s32, 0
      %p446 = por %p444, %p445
      %p447 = scmp.ne.s32.totalorder %s439, %s441
      %p448 = scmp.eq.s32.totalorder %s37, 7
      %p449 = por %p447, %p448
      %p450 = scmp.ne.s32.totalorder %s441, %s442
      %p451 = scmp.eq.s32.totalorder %s37, 0
      %p452 = por %p450, %p451
      %p453 = scmp.ne.s32.totalorder %s441, %s442
      %p454 = scmp.eq.s32.totalorder %s38, 7
      %p455 = por %p453, %p454
      %p457 = scmp.ne.s32.totalorder %s442, %s456
      %p458 = scmp.eq.s32.totalorder %s38, 0
      %p459 = por %p457, %p458
      %s461 = sadd.s32 %s460, 1
      %p464 = scmp.eq.s32.totalorder %s32, 7
      %p465 = scmp.ne.s32.totalorder %s460, %s462
      %p466 = scmp.eq.s32.totalorder %s32, 0
      %p467 = por %p465, %p466
      %p468 = scmp.ne.s32.totalorder %s460, %s462
      %p469 = scmp.eq.s32.totalorder %s37, 7
      %p470 = por %p468, %p469
      %p471 = scmp.ne.s32.totalorder %s462, %s463
      %p472 = scmp.eq.s32.totalorder %s37, 0
      %p473 = por %p471, %p472
      %p474 = scmp.ne.s32.totalorder %s462, %s463
      %p475 = scmp.eq.s32.totalorder %s38, 7
      %p476 = por %p474, %p475
      %p478 = scmp.ne.s32.totalorder %s463, %s477
      %p479 = scmp.eq.s32.totalorder %s38, 0
      %p480 = por %p478, %p479
      %p481 = scmp.le.s32.totalorder 1, %s32
      %p482 = scmp.lt.s32.totalorder %s32, 9
      %p483 = pnand %p481, %p482
      %p484 = pneg %p483
      // Predicated region
      $region9: #{pointer_net_forward.1} parent=5 // pred_check
        _
      $region10: #{pointer_net_forward.1} parent=5 // pred_check_branch
        %486 = sbr.rel (%p483) target = $region12
      $region11: #{pointer_net_forward.1} parent=5 // pred_region
        %s487 = ssub.s32 %s32, 1
        // Predicated region
        $region13: #{pointer_net_forward.1} parent=11 // pred_check
          %p488 = pneg %p53
        $region14: #{pointer_net_forward.1} parent=11 // pred_check_branch
          %490 = sbr.rel (%p488) target = $region16
        $region15: #{pointer_net_forward.1} parent=11 // pred_region
          _
        $region16: #{pointer_net_forward.1} parent=11 // pred_fallthru
          _
        // Predicated region
        $region17: #{pointer_net_forward.1} parent=11 // pred_check
          %p491 = pneg %p74
        $region18: #{pointer_net_forward.1} parent=11 // pred_check_branch
          %493 = sbr.rel (%p491) target = $region20
        $region19: #{pointer_net_forward.1} parent=11 // pred_region
          _
        $region20: #{pointer_net_forward.1} parent=11 // pred_fallthru
          _
        // Predicated region
        $region21: #{pointer_net_forward.1} parent=11 // pred_check
          %p494 = pneg %p95
        $region22: #{pointer_net_forward.1} parent=11 // pred_check_branch
          %496 = sbr.rel (%p494) target = $region24
        $region23: #{pointer_net_forward.1} parent=11 // pred_region
          %s498 = ssub.s32 32, 32
          %499 = vsyncadd [#allocation10], %s498
          %s501 = sshll.u32 [#allocation9], 4
          %s502 = int_to_ptr.vmem [resolvable:$true] %s501
          %504 = dma.hbm_to_vmem [thread:$0]  %s2, 32, %s502, [#allocation10]
        $region24: #{pointer_net_forward.1} parent=11 // pred_fallthru
          _
        // Predicated region
        $region25: #{pointer_net_forward.1} parent=11 // pred_check
          %p505 = pneg %p116
        $region26: #{pointer_net_forward.1} parent=11 // pred_check_branch
          %507 = sbr.rel (%p505) target = $region28
        $region27: #{pointer_net_forward.1} parent=11 // pred_region
          _
        $region28: #{pointer_net_forward.1} parent=11 // pred_fallthru
          _
        // Predicated region
        $region29: #{pointer_net_forward.1} parent=11 // pred_check
          %p508 = pneg %p137
        $region30: #{pointer_net_forward.1} parent=11 // pred_check_branch
          %510 = sbr.rel (%p508) target = $region32
        $region31: #{pointer_net_forward.1} parent=11 // pred_region
          _
        $region32: #{pointer_net_forward.1} parent=11 // pred_fallthru
          _
        // Predicated region
        $region33: #{pointer_net_forward.1} parent=11 // pred_check
          %p511 = pneg %p158
        $region34: #{pointer_net_forward.1} parent=11 // pred_check_branch
          %513 = sbr.rel (%p511) target = $region36
        $region35: #{pointer_net_forward.1} parent=11 // pred_region
          _
        $region36: #{pointer_net_forward.1} parent=11 // pred_fallthru
          _
        // Predicated region
        $region37: #{pointer_net_forward.1} parent=11 // pred_check
          %p514 = pneg %p179
        $region38: #{pointer_net_forward.1} parent=11 // pred_check_branch
          %516 = sbr.rel (%p514) target = $region40
        $region39: #{pointer_net_forward.1} parent=11 // pred_region
          %s518 = ssub.s32 16, 16
          %519 = vsyncadd [#allocation13], %s518
          %s521 = sshll.u32 [#allocation12], 4
          %s522 = int_to_ptr.vmem [resolvable:$true] %s521
          %524 = dma.hbm_to_vmem [thread:$0]  %s6, 16, %s522, [#allocation13]
        $region40: #{pointer_net_forward.1} parent=11 // pred_fallthru
          _
        // Predicated region
        $region41: #{pointer_net_forward.1} parent=11 // pred_check
          %p525 = pneg %p200
        $region42: #{pointer_net_forward.1} parent=11 // pred_check_branch
          %527 = sbr.rel (%p525) target = $region44
        $region43: #{pointer_net_forward.1} parent=11 // pred_region
          _
        $region44: #{pointer_net_forward.1} parent=11 // pred_fallthru
          _
        // Predicated region
        $region45: #{pointer_net_forward.1} parent=11 // pred_check
          %p528 = pneg %p221
        $region46: #{pointer_net_forward.1} parent=11 // pred_check_branch
          %530 = sbr.rel (%p528) target = $region48
        $region47: #{pointer_net_forward.1} parent=11 // pred_region
          %s532 = ssub.s32 16, 16
          %533 = vsyncadd [#allocation13], %s532
          %s535 = sshll.u32 [#allocation14], 4
          %s536 = int_to_ptr.vmem [resolvable:$true] %s535
          %538 = dma.hbm_to_vmem [thread:$0]  %s8, 16, %s536, [#allocation13]
        $region48: #{pointer_net_forward.1} parent=11 // pred_fallthru
          _
        // Predicated region
        $region49: #{pointer_net_forward.1} parent=11 // pred_check
          %p539 = pneg %p242
        $region50: #{pointer_net_forward.1} parent=11 // pred_check_branch
          %541 = sbr.rel (%p539) target = $region52
        $region51: #{pointer_net_forward.1} parent=11 // pred_region
          _
        $region52: #{pointer_net_forward.1} parent=11 // pred_fallthru
          _
        // Predicated region
        $region53: #{pointer_net_forward.1} parent=11 // pred_check
          %p542 = pneg %p263
        $region54: #{pointer_net_forward.1} parent=11 // pred_check_branch
          %544 = sbr.rel (%p542) target = $region56
        $region55: #{pointer_net_forward.1} parent=11 // pred_region
          %s546 = ssub.s32 512, 512
          %547 = vsyncadd [#allocation16], %s546
          %s548 = sshll.u32 [#allocation15], 4
          %s549 = int_to_ptr.vmem [resolvable:$true] %s548
          %554 = dma.hbm_to_vmem [thread:$0]  %s10, 512, %s549, [#allocation16], 128, 128, 8
        $region56: #{pointer_net_forward.1} parent=11 // pred_fallthru
          _
        // Predicated region
        $region57: #{pointer_net_forward.1} parent=11 // pred_check
          %p555 = pneg %p284
        $region58: #{pointer_net_forward.1} parent=11 // pred_check_branch
          %557 = sbr.rel (%p555) target = $region60
        $region59: #{pointer_net_forward.1} parent=11 // pred_region
          _
        $region60: #{pointer_net_forward.1} parent=11 // pred_fallthru
          _
        // Predicated region
        $region61: #{pointer_net_forward.1} parent=11 // pred_check
          %p558 = pneg %p305
        $region62: #{pointer_net_forward.1} parent=11 // pred_check_branch
          %560 = sbr.rel (%p558) target = $region64
        $region63: #{pointer_net_forward.1} parent=11 // pred_region
          %s562 = ssub.s32 512, 512
          %563 = vsyncadd [#allocation16], %s562
          %s564 = sshll.u32 [#allocation17], 4
          %s565 = int_to_ptr.vmem [resolvable:$true] %s564
          %570 = dma.hbm_to_vmem [thread:$0]  %s12, 512, %s565, [#allocation16], 128, 128, 8
        $region64: #{pointer_net_forward.1} parent=11 // pred_fallthru
          _
        // Predicated region
        $region65: #{pointer_net_forward.1} parent=11 // pred_check
          %p571 = pneg %p326
        $region66: #{pointer_net_forward.1} parent=11 // pred_check_branch
          %573 = sbr.rel (%p571) target = $region68
        $region67: #{pointer_net_forward.1} parent=11 // pred_region
          _
        $region68: #{pointer_net_forward.1} parent=11 // pred_fallthru
          _
        // Predicated region
        $region69: #{pointer_net_forward.1} parent=11 // pred_check
          %p574 = pneg %p347
        $region70: #{pointer_net_forward.1} parent=11 // pred_check_branch
          %576 = sbr.rel (%p574) target = $region72
        $region71: #{pointer_net_forward.1} parent=11 // pred_region
          _
        $region72: #{pointer_net_forward.1} parent=11 // pred_fallthru
          _
        // Predicated region
        $region73: #{pointer_net_forward.1} parent=11 // pred_check
          %p577 = pneg %p368
        $region74: #{pointer_net_forward.1} parent=11 // pred_check_branch
          %579 = sbr.rel (%p577) target = $region76
        $region75: #{pointer_net_forward.1} parent=11 // pred_region
          %s581 = ssub.s32 512, 512
          %582 = vsyncadd [#allocation19], %s581
          %s583 = sshll.u32 [#allocation18], 4
          %s584 = int_to_ptr.vmem [resolvable:$true] %s583
          %589 = dma.hbm_to_vmem [thread:$0]  %s15, 512, %s584, [#allocation19], 128, 128, 8
        $region76: #{pointer_net_forward.1} parent=11 // pred_fallthru
          _
        // Predicated region
        $region77: #{pointer_net_forward.1} parent=11 // pred_check
          %p590 = pneg %p389
        $region78: #{pointer_net_forward.1} parent=11 // pred_check_branch
          %592 = sbr.rel (%p590) target = $region80
        $region79: #{pointer_net_forward.1} parent=11 // pred_region
          _
        $region80: #{pointer_net_forward.1} parent=11 // pred_fallthru
          _
        // Predicated region
        $region81: #{pointer_net_forward.1} parent=11 // pred_check
          %p593 = pneg %p410
        $region82: #{pointer_net_forward.1} parent=11 // pred_check_branch
          %595 = sbr.rel (%p593) target = $region84
        $region83: #{pointer_net_forward.1} parent=11 // pred_region
          _
        $region84: #{pointer_net_forward.1} parent=11 // pred_fallthru
          _
        // Predicated region
        $region85: #{pointer_net_forward.1} parent=11 // pred_check
          %p596 = pneg %p431
        $region86: #{pointer_net_forward.1} parent=11 // pred_check_branch
          %598 = sbr.rel (%p596) target = $region88
        $region87: #{pointer_net_forward.1} parent=11 // pred_region
          _
        $region88: #{pointer_net_forward.1} parent=11 // pred_fallthru
          _
      $region12: #{pointer_net_forward.1} parent=5 // pred_fallthru
        _
      %p599 = scmp.lt.s32.totalorder %s32, 8
      // Predicated region
      $region89: #{pointer_net_forward.1} parent=5 // pred_check
        %p600 = pneg %p599
      $region90: #{pointer_net_forward.1} parent=5 // pred_check_branch
        %602 = sbr.rel (%p600) target = $region92
      $region91: #{pointer_net_forward.1} parent=5 // pred_region
        _
      $region92: #{pointer_net_forward.1} parent=5 // pred_fallthru
        _
      %p603 = scmp.le.s32.totalorder 1, %s32
      %p604 = scmp.lt.s32.totalorder %s32, 9
      %p605 = pnand %p603, %p604
      %p606 = pneg %p605
      // Predicated region
      $region93: #{pointer_net_forward.1} parent=5 // pred_check
        _
      $region94: #{pointer_net_forward.1} parent=5 // pred_check_branch
        %608 = sbr.rel (%p605) target = $region96
      $region95: #{pointer_net_forward.1} parent=5 // pred_region
        %s609 = ssub.s32 %s32, 1
        // Predicated region
        $region97: #{pointer_net_forward.1} parent=95 // pred_check
          %p610 = pneg %p95
        $region98: #{pointer_net_forward.1} parent=95 // pred_check_branch
          %612 = sbr.rel (%p610) target = $region100
        $region99: #{pointer_net_forward.1} parent=95 // pred_region
          %613 = dma.done [#allocation10], 32
        $region100: #{pointer_net_forward.1} parent=95 // pred_fallthru
          _
        // Predicated region
        $region101: #{pointer_net_forward.1} parent=95 // pred_check
          %p614 = pneg %p179
        $region102: #{pointer_net_forward.1} parent=95 // pred_check_branch
          %616 = sbr.rel (%p614) target = $region104
        $region103: #{pointer_net_forward.1} parent=95 // pred_region
          %617 = dma.done [#allocation13], 16
        $region104: #{pointer_net_forward.1} parent=95 // pred_fallthru
          _
        // Predicated region
        $region105: #{pointer_net_forward.1} parent=95 // pred_check
          %p618 = pneg %p221
        $region106: #{pointer_net_forward.1} parent=95 // pred_check_branch
          %620 = sbr.rel (%p618) target = $region108
        $region107: #{pointer_net_forward.1} parent=95 // pred_region
          %621 = dma.done [#allocation13], 16
        $region108: #{pointer_net_forward.1} parent=95 // pred_fallthru
          _
        // Predicated region
        $region109: #{pointer_net_forward.1} parent=95 // pred_check
          %p622 = pneg %p263
        $region110: #{pointer_net_forward.1} parent=95 // pred_check_branch
          %624 = sbr.rel (%p622) target = $region112
        $region111: #{pointer_net_forward.1} parent=95 // pred_region
          %625 = dma.done [#allocation16], 512
        $region112: #{pointer_net_forward.1} parent=95 // pred_fallthru
          _
        // Predicated region
        $region113: #{pointer_net_forward.1} parent=95 // pred_check
          %p626 = pneg %p305
        $region114: #{pointer_net_forward.1} parent=95 // pred_check_branch
          %628 = sbr.rel (%p626) target = $region116
        $region115: #{pointer_net_forward.1} parent=95 // pred_region
          %629 = dma.done [#allocation16], 512
        $region116: #{pointer_net_forward.1} parent=95 // pred_fallthru
          _
        // Predicated region
        $region117: #{pointer_net_forward.1} parent=95 // pred_check
          %p630 = pneg %p368
        $region118: #{pointer_net_forward.1} parent=95 // pred_check_branch
          %632 = sbr.rel (%p630) target = $region120
        $region119: #{pointer_net_forward.1} parent=95 // pred_region
          %633 = dma.done [#allocation19], 512
        $region120: #{pointer_net_forward.1} parent=95 // pred_fallthru
          _
        %p634 = pneg %p53
        %p635 = pneg %p50
        %p636 = pneg %p74
        %p637 = pneg %p71
        %p638 = pneg %p95
        %p639 = pneg %p92
        %p640 = pneg %p116
        %p641 = pneg %p113
        %p642 = pneg %p137
        %p643 = pneg %p134
        %p644 = pneg %p158
        %p645 = pneg %p155
        %p646 = pneg %p179
        %p647 = pneg %p176
        %p648 = pneg %p200
        %p649 = pneg %p197
        %p650 = pneg %p221
        %p651 = pneg %p218
        %p652 = pneg %p242
        %p653 = pneg %p239
        %p654 = pneg %p263
        %p655 = pneg %p260
        %p656 = pneg %p284
        %p657 = pneg %p281
        %p658 = pneg %p305
        %p659 = pneg %p302
        %p660 = pneg %p326
        %p661 = pneg %p323
        %p662 = pneg %p347
        %p663 = pneg %p344
        %p664 = pneg %p368
        %p665 = pneg %p365
        %p666 = pneg %p389
        %p667 = pneg %p386
        %p668 = pneg %p410
        %p669 = pneg %p407
        %p670 = pneg %p431
        %p671 = pneg %p428
        %p672 = pneg %p452
        %p673 = pneg %p449
        %p674 = pneg %p473
        %p675 = pneg %p470
        %p676 = scmp.eq.s32.totalorder %s37, 0
        // Predicated region
        $region121: #{pointer_net_forward.1} parent=95 // pred_check
          %p677 = pneg %p676
        $region122: #{pointer_net_forward.1} parent=95 // pred_check_branch
          %679 = sbr.rel (%p677) target = $region124
        $region123: #{pointer_net_forward.1} parent=95 // pred_region
          %v680 = vld [vmem:[%s0] sm:$0xff]
          %v681 = vld [vmem:[%s0 + $0x8] sm:$0xff]
          %v682 = vld [vmem:[#allocation9] sm:$0x3]
          %v683 = vld [vmem:[%s3] sm:$0x1]
          %v685 = vlaneseq
          %v686 = vshrl.u32 %v685, 7
          %v687 = vsub.s32 0, %v686
          %v688 = vrot.slane %v683, %v687
          %vm690 = vcmask 15360
          %v692 = vsel %vm690, %v680, 0
          %v695 = vsel %vm690, %v681, 0
          %vm697 = vcmask 1041408
          %v699 = vsel %vm697, %v682, 0
          %701 = vmatprep.subr.mxu0 0.0
          %702 = vmatpush1.msra.mxu0 %v699
          %703 = vmatprep.subr.mxu0 0.0
          %704 = vmatpush1.msra.mxu0 0.0
          %705 = vmatprep.subr.mxu0 0.0
          %706 = vmatpush1.msra.mxu0 0.0
          %707 = vmatprep.subr.mxu0 0.0
          %708 = vmatpush1.msra.mxu0 0.0
          %709 = vmatprep.subr.mxu0 0.0
          %710 = vmatpush1.msra.mxu0 0.0
          %711 = vmatprep.subr.mxu0 0.0
          %712 = vmatpush1.msra.mxu0 0.0
          %713 = vmatprep.subr.mxu0 0.0
          %714 = vmatpush1.msra.mxu0 0.0
          %715 = vmatprep.subr.mxu0 0.0
          %716 = vmatpush1.msra.mxu0 0.0
          %717 = vmatprep.subr.mxu0 0.0
          %718 = vmatpush1.msra.mxu0 0.0
          %719 = vmatprep.subr.mxu0 0.0
          %720 = vmatpush1.msra.mxu0 0.0
          %721 = vmatprep.subr.mxu0 0.0
          %722 = vmatpush1.msra.mxu0 0.0
          %723 = vmatprep.subr.mxu0 0.0
          %724 = vmatpush1.msra.mxu0 0.0
          %725 = vmatprep.subr.mxu0 0.0
          %726 = vmatpush1.msra.mxu0 0.0
          %727 = vmatprep.subr.mxu0 0.0
          %728 = vmatpush1.msra.mxu0 0.0
          %729 = vmatprep.subr.mxu0 0.0
          %730 = vmatpush1.msra.mxu0 0.0
          %731 = vmatprep.subr.mxu0 0.0
          %732 = vmatpush1.msra.mxu0 0.0
          %733 = vmatprep.subr.mxu0 0.0
          %734 = vmatpush1.msra.mxu0 0.0
          %735 = vmatprep.subr.mxu0 0.0
          %736 = vmatpush1.msra.mxu0 0.0
          %737 = vmatprep.subr.mxu0 0.0
          %738 = vmatpush1.msra.mxu0 0.0
          %739 = vmatprep.subr.mxu0 0.0
          %740 = vmatpush1.msra.mxu0 0.0
          %741 = vmatprep.subr.mxu0 0.0
          %742 = vmatpush1.msra.mxu0 0.0
          %743 = vmatprep.subr.mxu0 0.0
          %744 = vmatpush1.msra.mxu0 0.0
          %745 = vmatprep.subr.mxu0 0.0
          %746 = vmatpush1.msra.mxu0 0.0
          %747 = vmatprep.subr.mxu0 0.0
          %748 = vmatpush1.msra.mxu0 0.0
          %749 = vmatprep.subr.mxu0 0.0
          %750 = vmatpush1.msra.mxu0 0.0
          %751 = vmatprep.subr.mxu0 0.0
          %752 = vmatpush1.msra.mxu0 0.0
          %753 = vmatprep.subr.mxu0 0.0
          %754 = vmatpush1.msra.mxu0 0.0
          %755 = vmatprep.subr.mxu0 0.0
          %756 = vmatpush1.msra.mxu0 0.0
          %757 = vmatprep.subr.mxu0 0.0
          %758 = vmatpush1.msra.mxu0 0.0
          %759 = vmatprep.subr.mxu0 0.0
          %760 = vmatpush1.msra.mxu0 0.0
          %761 = vmatprep.subr.mxu0 0.0
          %762 = vmatpush1.msra.mxu0 0.0
          %763 = vmatprep.subr.mxu0 0.0
          %764 = vmatpush1.msra.mxu0 0.0
          %765 = vmatprep.mubr.f32.mxu0 0.0
          %766 = vmatmul.mubr.f32.gmra.mrb[0].mxu0 %v692
          %v767 = vpop.f32.mrb[0].mxu0
          %v768 = vadd.f32 %v688, %v767
          %v769 = vpop.f32.mrb[0].mxu0
          %770 = vmatprep.mubr.f32.mxu0 0.0
          %771 = vmatmul.mubr.f32.gmra.mrb[0].mxu0 %v695
          %v772 = vpop.f32.mrb[0].mxu0
          %v773 = vadd.f32 %v688, %v772
          %v774 = vpop.f32.mrb[0].mxu0
          %775 = vdwg.mxu0
          %vm776 = vcmask 261120
          %777 = vst.msk [vmem:[#allocation2] sm:$0xff] %vm776, %v768
          %778 = vst.msk [vmem:[#allocation2 + $0x8] sm:$0xff] %vm776, %v773
          %v779 = vld [vmem:[%s4] sm:$0xff]
          %v780 = vld [vmem:[%s4 + $0x8] sm:$0xff]
          %v781 = vld [vmem:[%s4 + $0x10] sm:$0xff]
          %v782 = vld [vmem:[%s4 + $0x18] sm:$0xff]
          %v783 = vld [vmem:[%s5] sm:$0xff]
          %v784 = vld [vmem:[%s5 + $0x8] sm:$0xff]
          %v785 = vld [vmem:[%s5 + $0x10] sm:$0xff]
          %v786 = vld [vmem:[%s5 + $0x18] sm:$0xff]
          %v787 = vld [vmem:[#allocation12] sm:$0x1]
          %v789 = vsel %vm776, 0.0, 0
          %791 = vmatprep.subr.mxu0 0.0
          %792 = vmatpush1.msra.mxu0 %v783
          %793 = vmatprep.subr.mxu0 0.0
          %794 = vmatpush1.msra.mxu0 %v784
          %795 = vmatprep.subr.mxu0 0.0
          %796 = vmatpush1.msra.mxu0 %v785
          %797 = vmatprep.subr.mxu0 0.0
          %798 = vmatpush1.msra.mxu0 %v786
          %799 = vmatprep.subr.mxu0 0.0
          %800 = vmatpush1.msra.mxu0 0.0
          %801 = vmatprep.subr.mxu0 0.0
          %802 = vmatpush1.msra.mxu0 0.0
          %803 = vmatprep.subr.mxu0 0.0
          %804 = vmatpush1.msra.mxu0 0.0
          %805 = vmatprep.subr.mxu0 0.0
          %806 = vmatpush1.msra.mxu0 0.0
          %807 = vmatprep.subr.mxu0 0.0
          %808 = vmatpush1.msra.mxu0 0.0
          %809 = vmatprep.subr.mxu0 0.0
          %810 = vmatpush1.msra.mxu0 0.0
          %811 = vmatprep.subr.mxu0 0.0
          %812 = vmatpush1.msra.mxu0 0.0
          %813 = vmatprep.subr.mxu0 0.0
          %814 = vmatpush1.msra.mxu0 0.0
          %815 = vmatprep.subr.mxu0 0.0
          %816 = vmatpush1.msra.mxu0 0.0
          %817 = vmatprep.subr.mxu0 0.0
          %818 = vmatpush1.msra.mxu0 0.0
          %819 = vmatprep.subr.mxu0 0.0
          %820 = vmatpush1.msra.mxu0 0.0
          %821 = vmatprep.subr.mxu0 0.0
          %822 = vmatpush1.msra.mxu0 0.0
          %823 = vmatprep.subr.mxu0 0.0
          %824 = vmatpush1.msra.mxu0 0.0
          %825 = vmatprep.subr.mxu0 0.0
          %826 = vmatpush1.msra.mxu0 0.0
          %827 = vmatprep.subr.mxu0 0.0
          %828 = vmatpush1.msra.mxu0 0.0
          %829 = vmatprep.subr.mxu0 0.0
          %830 = vmatpush1.msra.mxu0 0.0
          %831 = vmatprep.subr.mxu0 0.0
          %832 = vmatpush1.msra.mxu0 0.0
          %833 = vmatprep.subr.mxu0 0.0
          %834 = vmatpush1.msra.mxu0 0.0
          %835 = vmatprep.subr.mxu0 0.0
          %836 = vmatpush1.msra.mxu0 0.0
          %837 = vmatprep.subr.mxu0 0.0
          %838 = vmatpush1.msra.mxu0 0.0
          %839 = vmatprep.subr.mxu0 0.0
          %840 = vmatpush1.msra.mxu0 0.0
          %841 = vmatprep.subr.mxu0 0.0
          %842 = vmatpush1.msra.mxu0 0.0
          %843 = vmatprep.subr.mxu0 0.0
          %844 = vmatpush1.msra.mxu0 0.0
          %845 = vmatprep.subr.mxu0 0.0
          %846 = vmatpush1.msra.mxu0 0.0
          %847 = vmatprep.subr.mxu0 0.0
          %848 = vmatpush1.msra.mxu0 0.0
          %849 = vmatprep.subr.mxu0 0.0
          %850 = vmatpush1.msra.mxu0 0.0
          %851 = vmatprep.subr.mxu0 0.0
          %852 = vmatpush1.msra.mxu0 0.0
          %853 = vmatprep.subr.mxu0 0.0
          %854 = vmatpush1.msra.mxu0 0.0
          %855 = vmatprep.mubr.f32.mxu0 0.0
          %856 = vmatmul.mubr.f32.gmra.mrb[0].mxu0 %v789
          %v857 = vpop.f32.mrb[0].mxu0
          %v858 = vadd.f32 0.0, %v857
          %v859 = vpop.f32.mrb[0].mxu0
          %860 = vdwg.mxu0
          %v863 = vrot.slane %v773, 7
          %vm864 = vcmask 1041409
          %v865 = vsel %vm864, %v863, %v768
          %v866 = vsel %vm776, %v865, 0
          %868 = vmatprep.subr.mxu0 0.0
          %869 = vmatpush1.msra.mxu0 %v779
          %870 = vmatprep.subr.mxu0 0.0
          %871 = vmatpush1.msra.mxu0 %v780
          %872 = vmatprep.subr.mxu0 0.0
          %873 = vmatpush1.msra.mxu0 %v781
          %874 = vmatprep.subr.mxu0 0.0
          %875 = vmatpush1.msra.mxu0 %v782
          %876 = vmatprep.subr.mxu0 0.0
          %877 = vmatpush1.msra.mxu0 0.0
          %878 = vmatprep.subr.mxu0 0.0
          %879 = vmatpush1.msra.mxu0 0.0
          %880 = vmatprep.subr.mxu0 0.0
          %881 = vmatpush1.msra.mxu0 0.0
          %882 = vmatprep.subr.mxu0 0.0
          %883 = vmatpush1.msra.mxu0 0.0
          %884 = vmatprep.subr.mxu0 0.0
          %885 = vmatpush1.msra.mxu0 0.0
          %886 = vmatprep.subr.mxu0 0.0
          %887 = vmatpush1.msra.mxu0 0.0
          %888 = vmatprep.subr.mxu0 0.0
          %889 = vmatpush1.msra.mxu0 0.0
          %890 = vmatprep.subr.mxu0 0.0
          %891 = vmatpush1.msra.mxu0 0.0
          %892 = vmatprep.subr.mxu0 0.0
          %893 = vmatpush1.msra.mxu0 0.0
          %894 = vmatprep.subr.mxu0 0.0
          %895 = vmatpush1.msra.mxu0 0.0
          %896 = vmatprep.subr.mxu0 0.0
          %897 = vmatpush1.msra.mxu0 0.0
          %898 = vmatprep.subr.mxu0 0.0
          %899 = vmatpush1.msra.mxu0 0.0
          %900 = vmatprep.subr.mxu0 0.0
          %901 = vmatpush1.msra.mxu0 0.0
          %902 = vmatprep.subr.mxu0 0.0
          %903 = vmatpush1.msra.mxu0 0.0
          %904 = vmatprep.subr.mxu0 0.0
          %905 = vmatpush1.msra.mxu0 0.0
          %906 = vmatprep.subr.mxu0 0.0
          %907 = vmatpush1.msra.mxu0 0.0
          %908 = vmatprep.subr.mxu0 0.0
          %909 = vmatpush1.msra.mxu0 0.0
          %910 = vmatprep.subr.mxu0 0.0
          %911 = vmatpush1.msra.mxu0 0.0
          %912 = vmatprep.subr.mxu0 0.0
          %913 = vmatpush1.msra.mxu0 0.0
          %914 = vmatprep.subr.mxu0 0.0
          %915 = vmatpush1.msra.mxu0 0.0
          %916 = vmatprep.subr.mxu0 0.0
          %917 = vmatpush1.msra.mxu0 0.0
          %918 = vmatprep.subr.mxu0 0.0
          %919 = vmatpush1.msra.mxu0 0.0
          %920 = vmatprep.subr.mxu0 0.0
          %921 = vmatpush1.msra.mxu0 0.0
          %922 = vmatprep.subr.mxu0 0.0
          %923 = vmatpush1.msra.mxu0 0.0
          %924 = vmatprep.subr.mxu0 0.0
          %925 = vmatpush1.msra.mxu0 0.0
          %926 = vmatprep.subr.mxu0 0.0
          %927 = vmatpush1.msra.mxu0 0.0
          %928 = vmatprep.subr.mxu0 0.0
          %929 = vmatpush1.msra.mxu0 0.0
          %930 = vmatprep.subr.mxu0 0.0
          %931 = vmatpush1.msra.mxu0 0.0
          %932 = vmatprep.mubr.f32.mxu0 0.0
          %933 = vmatmul.mubr.f32.gmra.mrb[0].mxu0 %v866
          %v934 = vpop.f32.mrb[0].mxu0
          %v935 = vadd.f32 %v858, %v934
          %v936 = vpop.f32.mrb[0].mxu0
          %937 = vdwg.mxu0
          %v939 = vlaneseq
          %v940 = vshrl.u32 %v939, 7
          %v941 = vsub.s32 0, %v940
          %v942 = vrot.slane %v787, %v941
          %v944 = vadd.f32 %v935, %v942
          %v945 = vxor.u32 %v944, 2147483648
          %v946 = vmul.f32 %v945, 1.442695
          %v947 = vpow.pop %v946
          %v948 = vadd.f32 %v947, 1.0
          %v949 = vrcp.pop %v948
          %v950 = vmul.f32 1.0, %v949
          %v951 = vtanh.pop %v944
          %v952 = vmul.f32 %v950, 0.0
          %954 = vrot.lane.b32.xlu0 %v951, 64
          %v955 = vpop.permute.xlu0 %954
          %v957 = vmul.f32 %v950, %v955
          %959 = vrot.lane.b32.xlu0 %v957, 32
          %v960 = vpop.permute.xlu0 %959
          %v962 = vadd.f32 %v952, %v960
          %v963 = vtanh.pop %v962
          %965 = vrot.lane.b32.xlu0 %v963, 64
          %v966 = vpop.permute.xlu0 %965
          %v968 = vmul.f32 %v950, %v966
          %970 = vrot.lane.b32.xlu0 %v968, 32
          %v971 = vpop.permute.xlu0 %970
          %v972 = vsel %vm776, %v971, 0
          %974 = vmatprep.subr.mxu0 0.0
          %975 = vmatpush1.msra.mxu0 %v783
          %976 = vmatprep.subr.mxu0 0.0
          %977 = vmatpush1.msra.mxu0 %v784
          %978 = vmatprep.subr.mxu0 0.0
          %979 = vmatpush1.msra.mxu0 %v785
          %980 = vmatprep.subr.mxu0 0.0
          %981 = vmatpush1.msra.mxu0 %v786
          %982 = vmatprep.subr.mxu0 0.0
          %983 = vmatpush1.msra.mxu0 0.0
          %984 = vmatprep.subr.mxu0 0.0
          %985 = vmatpush1.msra.mxu0 0.0
          %986 = vmatprep.subr.mxu0 0.0
          %987 = vmatpush1.msra.mxu0 0.0
          %988 = vmatprep.subr.mxu0 0.0
          %989 = vmatpush1.msra.mxu0 0.0
          %990 = vmatprep.subr.mxu0 0.0
          %991 = vmatpush1.msra.mxu0 0.0
          %992 = vmatprep.subr.mxu0 0.0
          %993 = vmatpush1.msra.mxu0 0.0
          %994 = vmatprep.subr.mxu0 0.0
          %995 = vmatpush1.msra.mxu0 0.0
          %996 = vmatprep.subr.mxu0 0.0
          %997 = vmatpush1.msra.mxu0 0.0
          %998 = vmatprep.subr.mxu0 0.0
          %999 = vmatpush1.msra.mxu0 0.0
          %1000 = vmatprep.subr.mxu0 0.0
          %1001 = vmatpush1.msra.mxu0 0.0
          %1002 = vmatprep.subr.mxu0 0.0
          %1003 = vmatpush1.msra.mxu0 0.0
          %1004 = vmatprep.subr.mxu0 0.0
          %1005 = vmatpush1.msra.mxu0 0.0
          %1006 = vmatprep.subr.mxu0 0.0
          %1007 = vmatpush1.msra.mxu0 0.0
          %1008 = vmatprep.subr.mxu0 0.0
          %1009 = vmatpush1.msra.mxu0 0.0
          %1010 = vmatprep.subr.mxu0 0.0
          %1011 = vmatpush1.msra.mxu0 0.0
          %1012 = vmatprep.subr.mxu0 0.0
          %1013 = vmatpush1.msra.mxu0 0.0
          %1014 = vmatprep.subr.mxu0 0.0
          %1015 = vmatpush1.msra.mxu0 0.0
          %1016 = vmatprep.subr.mxu0 0.0
          %1017 = vmatpush1.msra.mxu0 0.0
          %1018 = vmatprep.subr.mxu0 0.0
          %1019 = vmatpush1.msra.mxu0 0.0
          %1020 = vmatprep.subr.mxu0 0.0
          %1021 = vmatpush1.msra.mxu0 0.0
          %1022 = vmatprep.subr.mxu0 0.0
          %1023 = vmatpush1.msra.mxu0 0.0
          %1024 = vmatprep.subr.mxu0 0.0
          %1025 = vmatpush1.msra.mxu0 0.0
          %1026 = vmatprep.subr.mxu0 0.0
          %1027 = vmatpush1.msra.mxu0 0.0
          %1028 = vmatprep.subr.mxu0 0.0
          %1029 = vmatpush1.msra.mxu0 0.0
          %1030 = vmatprep.subr.mxu0 0.0
          %1031 = vmatpush1.msra.mxu0 0.0
          %1032 = vmatprep.subr.mxu0 0.0
          %1033 = vmatpush1.msra.mxu0 0.0
          %1034 = vmatprep.subr.mxu0 0.0
          %1035 = vmatpush1.msra.mxu0 0.0
          %1036 = vmatprep.subr.mxu0 0.0
          %1037 = vmatpush1.msra.mxu0 0.0
          %1038 = vmatprep.mubr.f32.mxu0 0.0
          %1039 = vmatmul.mubr.f32.gmra.mrb[0].mxu0 %v972
          %v1040 = vpop.f32.mrb[0].mxu0
          %v1041 = vadd.f32 0.0, %v1040
          %v1042 = vpop.f32.mrb[0].mxu0
          %1043 = vdwg.mxu0
          %v1044 = vrot.slane %v768, 1
          %v1045 = vsel %vm864, %v773, %v1044
          %v1046 = vsel %vm776, %v1045, 0
          %1048 = vmatprep.subr.mxu0 0.0
          %1049 = vmatpush1.msra.mxu0 %v779
          %1050 = vmatprep.subr.mxu0 0.0
          %1051 = vmatpush1.msra.mxu0 %v780
          %1052 = vmatprep.subr.mxu0 0.0
          %1053 = vmatpush1.msra.mxu0 %v781
          %1054 = vmatprep.subr.mxu0 0.0
          %1055 = vmatpush1.msra.mxu0 %v782
          %1056 = vmatprep.subr.mxu0 0.0
          %1057 = vmatpush1.msra.mxu0 0.0
          %1058 = vmatprep.subr.mxu0 0.0
          %1059 = vmatpush1.msra.mxu0 0.0
          %1060 = vmatprep.subr.mxu0 0.0
          %1061 = vmatpush1.msra.mxu0 0.0
          %1062 = vmatprep.subr.mxu0 0.0
          %1063 = vmatpush1.msra.mxu0 0.0
          %1064 = vmatprep.subr.mxu0 0.0
          %1065 = vmatpush1.msra.mxu0 0.0
          %1066 = vmatprep.subr.mxu0 0.0
          %1067 = vmatpush1.msra.mxu0 0.0
          %1068 = vmatprep.subr.mxu0 0.0
          %1069 = vmatpush1.msra.mxu0 0.0
          %1070 = vmatprep.subr.mxu0 0.0
          %1071 = vmatpush1.msra.mxu0 0.0
          %1072 = vmatprep.subr.mxu0 0.0
          %1073 = vmatpush1.msra.mxu0 0.0
          %1074 = vmatprep.subr.mxu0 0.0
          %1075 = vmatpush1.msra.mxu0 0.0
          %1076 = vmatprep.subr.mxu0 0.0
          %1077 = vmatpush1.msra.mxu0 0.0
          %1078 = vmatprep.subr.mxu0 0.0
          %1079 = vmatpush1.msra.mxu0 0.0
          %1080 = vmatprep.subr.mxu0 0.0
          %1081 = vmatpush1.msra.mxu0 0.0
          %1082 = vmatprep.subr.mxu0 0.0
          %1083 = vmatpush1.msra.mxu0 0.0
          %1084 = vmatprep.subr.mxu0 0.0
          %1085 = vmatpush1.msra.mxu0 0.0
          %1086 = vmatprep.subr.mxu0 0.0
          %1087 = vmatpush1.msra.mxu0 0.0
          %1088 = vmatprep.subr.mxu0 0.0
          %1089 = vmatpush1.msra.mxu0 0.0
          %1090 = vmatprep.subr.mxu0 0.0
          %1091 = vmatpush1.msra.mxu0 0.0
          %1092 = vmatprep.subr.mxu0 0.0
          %1093 = vmatpush1.msra.mxu0 0.0
          %1094 = vmatprep.subr.mxu0 0.0
          %1095 = vmatpush1.msra.mxu0 0.0
          %1096 = vmatprep.subr.mxu0 0.0
          %1097 = vmatpush1.msra.mxu0 0.0
          %1098 = vmatprep.subr.mxu0 0.0
          %1099 = vmatpush1.msra.mxu0 0.0
          %1100 = vmatprep.subr.mxu0 0.0
          %1101 = vmatpush1.msra.mxu0 0.0
          %1102 = vmatprep.subr.mxu0 0.0
          %1103 = vmatpush1.msra.mxu0 0.0
          %1104 = vmatprep.subr.mxu0 0.0
          %1105 = vmatpush1.msra.mxu0 0.0
          %1106 = vmatprep.subr.mxu0 0.0
          %1107 = vmatpush1.msra.mxu0 0.0
          %1108 = vmatprep.subr.mxu0 0.0
          %1109 = vmatpush1.msra.mxu0 0.0
          %1110 = vmatprep.subr.mxu0 0.0
          %1111 = vmatpush1.msra.mxu0 0.0
          %1112 = vmatprep.mubr.f32.mxu0 0.0
          %1113 = vmatmul.mubr.f32.gmra.mrb[0].mxu0 %v1046
          %v1114 = vpop.f32.mrb[0].mxu0
          %v1115 = vadd.f32 %v1041, %v1114
          %v1116 = vpop.f32.mrb[0].mxu0
          %1117 = vdwg.mxu0
          %v1118 = vadd.f32 %v1115, %v942
          %v1119 = vxor.u32 %v1118, 2147483648
          %v1120 = vmul.f32 %v1119, 1.442695
          %v1121 = vpow.pop %v1120
          %v1122 = vadd.f32 %v1121, 1.0
          %v1123 = vrcp.pop %v1122
          %v1124 = vmul.f32 1.0, %v1123
          %v1125 = vtanh.pop %v1118
          %v1126 = vmul.f32 %v1124, %v962
          %1128 = vrot.lane.b32.xlu0 %v1125, 64
          %v1129 = vpop.permute.xlu0 %1128
          %v1131 = vmul.f32 %v1124, %v1129
          %1133 = vrot.lane.b32.xlu0 %v1131, 32
          %v1134 = vpop.permute.xlu0 %1133
          %v1136 = vadd.f32 %v1126, %v1134
          %v1137 = vtanh.pop %v1136
          %1139 = vrot.lane.b32.xlu0 %v1137, 64
          %v1140 = vpop.permute.xlu0 %1139
          %v1142 = vmul.f32 %v1124, %v1140
          %1144 = vrot.lane.b32.xlu0 %v1142, 32
          %v1145 = vpop.permute.xlu0 %1144
          %v1146 = vsel %vm776, %v1145, 0
          %1148 = vmatprep.subr.mxu0 0.0
          %1149 = vmatpush1.msra.mxu0 %v783
          %1150 = vmatprep.subr.mxu0 0.0
          %1151 = vmatpush1.msra.mxu0 %v784
          %1152 = vmatprep.subr.mxu0 0.0
          %1153 = vmatpush1.msra.mxu0 %v785
          %1154 = vmatprep.subr.mxu0 0.0
          %1155 = vmatpush1.msra.mxu0 %v786
          %1156 = vmatprep.subr.mxu0 0.0
          %1157 = vmatpush1.msra.mxu0 0.0
          %1158 = vmatprep.subr.mxu0 0.0
          %1159 = vmatpush1.msra.mxu0 0.0
          %1160 = vmatprep.subr.mxu0 0.0
          %1161 = vmatpush1.msra.mxu0 0.0
          %1162 = vmatprep.subr.mxu0 0.0
          %1163 = vmatpush1.msra.mxu0 0.0
          %1164 = vmatprep.subr.mxu0 0.0
          %1165 = vmatpush1.msra.mxu0 0.0
          %1166 = vmatprep.subr.mxu0 0.0
          %1167 = vmatpush1.msra.mxu0 0.0
          %1168 = vmatprep.subr.mxu0 0.0
          %1169 = vmatpush1.msra.mxu0 0.0
          %1170 = vmatprep.subr.mxu0 0.0
          %1171 = vmatpush1.msra.mxu0 0.0
          %1172 = vmatprep.subr.mxu0 0.0
          %1173 = vmatpush1.msra.mxu0 0.0
          %1174 = vmatprep.subr.mxu0 0.0
          %1175 = vmatpush1.msra.mxu0 0.0
          %1176 = vmatprep.subr.mxu0 0.0
          %1177 = vmatpush1.msra.mxu0 0.0
          %1178 = vmatprep.subr.mxu0 0.0
          %1179 = vmatpush1.msra.mxu0 0.0
          %1180 = vmatprep.subr.mxu0 0.0
          %1181 = vmatpush1.msra.mxu0 0.0
          %1182 = vmatprep.subr.mxu0 0.0
          %1183 = vmatpush1.msra.mxu0 0.0
          %1184 = vmatprep.subr.mxu0 0.0
          %1185 = vmatpush1.msra.mxu0 0.0
          %1186 = vmatprep.subr.mxu0 0.0
          %1187 = vmatpush1.msra.mxu0 0.0
          %1188 = vmatprep.subr.mxu0 0.0
          %1189 = vmatpush1.msra.mxu0 0.0
          %1190 = vmatprep.subr.mxu0 0.0
          %1191 = vmatpush1.msra.mxu0 0.0
          %1192 = vmatprep.subr.mxu0 0.0
          %1193 = vmatpush1.msra.mxu0 0.0
          %1194 = vmatprep.subr.mxu0 0.0
          %1195 = vmatpush1.msra.mxu0 0.0
          %1196 = vmatprep.subr.mxu0 0.0
          %1197 = vmatpush1.msra.mxu0 0.0
          %1198 = vmatprep.subr.mxu0 0.0
          %1199 = vmatpush1.msra.mxu0 0.0
          %1200 = vmatprep.subr.mxu0 0.0
          %1201 = vmatpush1.msra.mxu0 0.0
          %1202 = vmatprep.subr.mxu0 0.0
          %1203 = vmatpush1.msra.mxu0 0.0
          %1204 = vmatprep.subr.mxu0 0.0
          %1205 = vmatpush1.msra.mxu0 0.0
          %1206 = vmatprep.subr.mxu0 0.0
          %1207 = vmatpush1.msra.mxu0 0.0
          %1208 = vmatprep.subr.mxu0 0.0
          %1209 = vmatpush1.msra.mxu0 0.0
          %1210 = vmatprep.subr.mxu0 0.0
          %1211 = vmatpush1.msra.mxu0 0.0
          %1212 = vmatprep.mubr.f32.mxu0 0.0
          %1213 = vmatmul.mubr.f32.gmra.mrb[0].mxu0 %v1146
          %v1214 = vpop.f32.mrb[0].mxu0
          %v1215 = vadd.f32 0.0, %v1214
          %v1216 = vpop.f32.mrb[0].mxu0
          %1217 = vdwg.mxu0
          %v1218 = vrot.slane %v768, 2
          %v1219 = vrot.slane %v773, 1
          %v1220 = vsel %vm864, %v1219, %v1218
          %v1221 = vsel %vm776, %v1220, 0
          %1223 = vmatprep.subr.mxu0 0.0
          %1224 = vmatpush1.msra.mxu0 %v779
          %1225 = vmatprep.subr.mxu0 0.0
          %1226 = vmatpush1.msra.mxu0 %v780
          %1227 = vmatprep.subr.mxu0 0.0
          %1228 = vmatpush1.msra.mxu0 %v781
          %1229 = vmatprep.subr.mxu0 0.0
          %1230 = vmatpush1.msra.mxu0 %v782
          %1231 = vmatprep.subr.mxu0 0.0
          %1232 = vmatpush1.msra.mxu0 0.0
          %1233 = vmatprep.subr.mxu0 0.0
          %1234 = vmatpush1.msra.mxu0 0.0
          %1235 = vmatprep.subr.mxu0 0.0
          %1236 = vmatpush1.msra.mxu0 0.0
          %1237 = vmatprep.subr.mxu0 0.0
          %1238 = vmatpush1.msra.mxu0 0.0
          %1239 = vmatprep.subr.mxu0 0.0
          %1240 = vmatpush1.msra.mxu0 0.0
          %1241 = vmatprep.subr.mxu0 0.0
          %1242 = vmatpush1.msra.mxu0 0.0
          %1243 = vmatprep.subr.mxu0 0.0
          %1244 = vmatpush1.msra.mxu0 0.0
          %1245 = vmatprep.subr.mxu0 0.0
          %1246 = vmatpush1.msra.mxu0 0.0
          %1247 = vmatprep.subr.mxu0 0.0
          %1248 = vmatpush1.msra.mxu0 0.0
          %1249 = vmatprep.subr.mxu0 0.0
          %1250 = vmatpush1.msra.mxu0 0.0
          %1251 = vmatprep.subr.mxu0 0.0
          %1252 = vmatpush1.msra.mxu0 0.0
          %1253 = vmatprep.subr.mxu0 0.0
          %1254 = vmatpush1.msra.mxu0 0.0
          %1255 = vmatprep.subr.mxu0 0.0
          %1256 = vmatpush1.msra.mxu0 0.0
          %1257 = vmatprep.subr.mxu0 0.0
          %1258 = vmatpush1.msra.mxu0 0.0
          %1259 = vmatprep.subr.mxu0 0.0
          %1260 = vmatpush1.msra.mxu0 0.0
          %1261 = vmatprep.subr.mxu0 0.0
          %1262 = vmatpush1.msra.mxu0 0.0
          %1263 = vmatprep.subr.mxu0 0.0
          %1264 = vmatpush1.msra.mxu0 0.0
          %1265 = vmatprep.subr.mxu0 0.0
          %1266 = vmatpush1.msra.mxu0 0.0
          %1267 = vmatprep.subr.mxu0 0.0
          %1268 = vmatpush1.msra.mxu0 0.0
          %1269 = vmatprep.subr.mxu0 0.0
          %1270 = vmatpush1.msra.mxu0 0.0
          %1271 = vmatprep.subr.mxu0 0.0
          %1272 = vmatpush1.msra.mxu0 0.0
          %1273 = vmatprep.subr.mxu0 0.0
          %1274 = vmatpush1.msra.mxu0 0.0
          %1275 = vmatprep.subr.mxu0 0.0
          %1276 = vmatpush1.msra.mxu0 0.0
          %1277 = vmatprep.subr.mxu0 0.0
          %1278 = vmatpush1.msra.mxu0 0.0
          %1279 = vmatprep.subr.mxu0 0.0
          %1280 = vmatpush1.msra.mxu0 0.0
          %1281 = vmatprep.subr.mxu0 0.0
          %1282 = vmatpush1.msra.mxu0 0.0
          %1283 = vmatprep.subr.mxu0 0.0
          %1284 = vmatpush1.msra.mxu0 0.0
          %1285 = vmatprep.subr.mxu0 0.0
          %1286 = vmatpush1.msra.mxu0 0.0
          %1287 = vmatprep.mubr.f32.mxu0 0.0
          %1288 = vmatmul.mubr.f32.gmra.mrb[0].mxu0 %v1221
          %v1289 = vpop.f32.mrb[0].mxu0
          %v1290 = vadd.f32 %v1215, %v1289
          %v1291 = vpop.f32.mrb[0].mxu0
          %1292 = vdwg.mxu0
          %v1293 = vadd.f32 %v1290, %v942
          %v1294 = vxor.u32 %v1293, 2147483648
          %v1295 = vmul.f32 %v1294, 1.442695
          %v1296 = vpow.pop %v1295
          %v1297 = vadd.f32 %v1296, 1.0
          %v1298 = vrcp.pop %v1297
          %v1299 = vmul.f32 1.0, %v1298
          %v1300 = vtanh.pop %v1293
          %v1301 = vmul.f32 %v1299, %v1136
          %1303 = vrot.lane.b32.xlu0 %v1300, 64
          %v1304 = vpop.permute.xlu0 %1303
          %v1306 = vmul.f32 %v1299, %v1304
          %1308 = vrot.lane.b32.xlu0 %v1306, 32
          %v1309 = vpop.permute.xlu0 %1308
          %v1311 = vadd.f32 %v1301, %v1309
          %v1312 = vtanh.pop %v1311
          %1314 = vrot.lane.b32.xlu0 %v1312, 64
          %v1315 = vpop.permute.xlu0 %1314
          %v1317 = vmul.f32 %v1299, %v1315
          %1319 = vrot.lane.b32.xlu0 %v1317, 32
          %v1320 = vpop.permute.xlu0 %1319
          %v1321 = vsel %vm776, %v1320, 0
          %1323 = vmatprep.subr.mxu0 0.0
          %1324 = vmatpush1.msra.mxu0 %v783
          %1325 = vmatprep.subr.mxu0 0.0
          %1326 = vmatpush1.msra.mxu0 %v784
          %1327 = vmatprep.subr.mxu0 0.0
          %1328 = vmatpush1.msra.mxu0 %v785
          %1329 = vmatprep.subr.mxu0 0.0
          %1330 = vmatpush1.msra.mxu0 %v786
          %1331 = vmatprep.subr.mxu0 0.0
          %1332 = vmatpush1.msra.mxu0 0.0
          %1333 = vmatprep.subr.mxu0 0.0
          %1334 = vmatpush1.msra.mxu0 0.0
          %1335 = vmatprep.subr.mxu0 0.0
          %1336 = vmatpush1.msra.mxu0 0.0
          %1337 = vmatprep.subr.mxu0 0.0
          %1338 = vmatpush1.msra.mxu0 0.0
          %1339 = vmatprep.subr.mxu0 0.0
          %1340 = vmatpush1.msra.mxu0 0.0
          %1341 = vmatprep.subr.mxu0 0.0
          %1342 = vmatpush1.msra.mxu0 0.0
          %1343 = vmatprep.subr.mxu0 0.0
          %1344 = vmatpush1.msra.mxu0 0.0
          %1345 = vmatprep.subr.mxu0 0.0
          %1346 = vmatpush1.msra.mxu0 0.0
          %1347 = vmatprep.subr.mxu0 0.0
          %1348 = vmatpush1.msra.mxu0 0.0
          %1349 = vmatprep.subr.mxu0 0.0
          %1350 = vmatpush1.msra.mxu0 0.0
          %1351 = vmatprep.subr.mxu0 0.0
          %1352 = vmatpush1.msra.mxu0 0.0
          %1353 = vmatprep.subr.mxu0 0.0
          %1354 = vmatpush1.msra.mxu0 0.0
          %1355 = vmatprep.subr.mxu0 0.0
          %1356 = vmatpush1.msra.mxu0 0.0
          %1357 = vmatprep.subr.mxu0 0.0
          %1358 = vmatpush1.msra.mxu0 0.0
          %1359 = vmatprep.subr.mxu0 0.0
          %1360 = vmatpush1.msra.mxu0 0.0
          %1361 = vmatprep.subr.mxu0 0.0
          %1362 = vmatpush1.msra.mxu0 0.0
          %1363 = vmatprep.subr.mxu0 0.0
          %1364 = vmatpush1.msra.mxu0 0.0
          %1365 = vmatprep.subr.mxu0 0.0
          %1366 = vmatpush1.msra.mxu0 0.0
          %1367 = vmatprep.subr.mxu0 0.0
          %1368 = vmatpush1.msra.mxu0 0.0
          %1369 = vmatprep.subr.mxu0 0.0
          %1370 = vmatpush1.msra.mxu0 0.0
          %1371 = vmatprep.subr.mxu0 0.0
          %1372 = vmatpush1.msra.mxu0 0.0
          %1373 = vmatprep.subr.mxu0 0.0
          %1374 = vmatpush1.msra.mxu0 0.0
          %1375 = vmatprep.subr.mxu0 0.0
          %1376 = vmatpush1.msra.mxu0 0.0
          %1377 = vmatprep.subr.mxu0 0.0
          %1378 = vmatpush1.msra.mxu0 0.0
          %1379 = vmatprep.subr.mxu0 0.0
          %1380 = vmatpush1.msra.mxu0 0.0
          %1381 = vmatprep.subr.mxu0 0.0
          %1382 = vmatpush1.msra.mxu0 0.0
          %1383 = vmatprep.subr.mxu0 0.0
          %1384 = vmatpush1.msra.mxu0 0.0
          %1385 = vmatprep.subr.mxu0 0.0
          %1386 = vmatpush1.msra.mxu0 0.0
          %1387 = vmatprep.mubr.f32.mxu0 0.0
          %1388 = vmatmul.mubr.f32.gmra.mrb[0].mxu0 %v1321
          %v1389 = vpop.f32.mrb[0].mxu0
          %v1390 = vadd.f32 0.0, %v1389
          %v1391 = vpop.f32.mrb[0].mxu0
          %1392 = vdwg.mxu0
          %v1393 = vrot.slane %v768, 3
          %v1394 = vrot.slane %v773, 2
          %v1395 = vsel %vm864, %v1394, %v1393
          %v1396 = vsel %vm776, %v1395, 0
          %1398 = vmatprep.subr.mxu0 0.0
          %1399 = vmatpush1.msra.mxu0 %v779
          %1400 = vmatprep.subr.mxu0 0.0
          %1401 = vmatpush1.msra.mxu0 %v780
          %1402 = vmatprep.subr.mxu0 0.0
          %1403 = vmatpush1.msra.mxu0 %v781
          %1404 = vmatprep.subr.mxu0 0.0
          %1405 = vmatpush1.msra.mxu0 %v782
          %1406 = vmatprep.subr.mxu0 0.0
          %1407 = vmatpush1.msra.mxu0 0.0
          %1408 = vmatprep.subr.mxu0 0.0
          %1409 = vmatpush1.msra.mxu0 0.0
          %1410 = vmatprep.subr.mxu0 0.0
          %1411 = vmatpush1.msra.mxu0 0.0
          %1412 = vmatprep.subr.mxu0 0.0
          %1413 = vmatpush1.msra.mxu0 0.0
          %1414 = vmatprep.subr.mxu0 0.0
          %1415 = vmatpush1.msra.mxu0 0.0
          %1416 = vmatprep.subr.mxu0 0.0
          %1417 = vmatpush1.msra.mxu0 0.0
          %1418 = vmatprep.subr.mxu0 0.0
          %1419 = vmatpush1.msra.mxu0 0.0
          %1420 = vmatprep.subr.mxu0 0.0
          %1421 = vmatpush1.msra.mxu0 0.0
          %1422 = vmatprep.subr.mxu0 0.0
          %1423 = vmatpush1.msra.mxu0 0.0
          %1424 = vmatprep.subr.mxu0 0.0
          %1425 = vmatpush1.msra.mxu0 0.0
          %1426 = vmatprep.subr.mxu0 0.0
          %1427 = vmatpush1.msra.mxu0 0.0
          %1428 = vmatprep.subr.mxu0 0.0
          %1429 = vmatpush1.msra.mxu0 0.0
          %1430 = vmatprep.subr.mxu0 0.0
          %1431 = vmatpush1.msra.mxu0 0.0
          %1432 = vmatprep.subr.mxu0 0.0
          %1433 = vmatpush1.msra.mxu0 0.0
          %1434 = vmatprep.subr.mxu0 0.0
          %1435 = vmatpush1.msra.mxu0 0.0
          %1436 = vmatprep.subr.mxu0 0.0
          %1437 = vmatpush1.msra.mxu0 0.0
          %1438 = vmatprep.subr.mxu0 0.0
          %1439 = vmatpush1.msra.mxu0 0.0
          %1440 = vmatprep.subr.mxu0 0.0
          %1441 = vmatpush1.msra.mxu0 0.0
          %1442 = vmatprep.subr.mxu0 0.0
          %1443 = vmatpush1.msra.mxu0 0.0
          %1444 = vmatprep.subr.mxu0 0.0
          %1445 = vmatpush1.msra.mxu0 0.0
          %1446 = vmatprep.subr.mxu0 0.0
          %1447 = vmatpush1.msra.mxu0 0.0
          %1448 = vmatprep.subr.mxu0 0.0
          %1449 = vmatpush1.msra.mxu0 0.0
          %1450 = vmatprep.subr.mxu0 0.0
          %1451 = vmatpush1.msra.mxu0 0.0
          %1452 = vmatprep.subr.mxu0 0.0
          %1453 = vmatpush1.msra.mxu0 0.0
          %1454 = vmatprep.subr.mxu0 0.0
          %1455 = vmatpush1.msra.mxu0 0.0
          %1456 = vmatprep.subr.mxu0 0.0
          %1457 = vmatpush1.msra.mxu0 0.0
          %1458 = vmatprep.subr.mxu0 0.0
          %1459 = vmatpush1.msra.mxu0 0.0
          %1460 = vmatprep.subr.mxu0 0.0
          %1461 = vmatpush1.msra.mxu0 0.0
          %1462 = vmatprep.mubr.f32.mxu0 0.0
          %1463 = vmatmul.mubr.f32.gmra.mrb[0].mxu0 %v1396
          %v1464 = vpop.f32.mrb[0].mxu0
          %v1465 = vadd.f32 %v1390, %v1464
          %v1466 = vpop.f32.mrb[0].mxu0
          %1467 = vdwg.mxu0
          %v1468 = vadd.f32 %v1465, %v942
          %v1469 = vxor.u32 %v1468, 2147483648
          %v1470 = vmul.f32 %v1469, 1.442695
          %v1471 = vpow.pop %v1470
          %v1472 = vadd.f32 %v1471, 1.0
          %v1473 = vrcp.pop %v1472
          %v1474 = vmul.f32 1.0, %v1473
          %v1475 = vtanh.pop %v1468
          %v1476 = vmul.f32 %v1474, %v1311
          %1478 = vrot.lane.b32.xlu0 %v1475, 64
          %v1479 = vpop.permute.xlu0 %1478
          %v1481 = vmul.f32 %v1474, %v1479
          %1483 = vrot.lane.b32.xlu0 %v1481, 32
          %v1484 = vpop.permute.xlu0 %1483
          %v1486 = vadd.f32 %v1476, %v1484
          %v1487 = vtanh.pop %v1486
          %1489 = vrot.lane.b32.xlu0 %v1487, 64
          %v1490 = vpop.permute.xlu0 %1489
          %v1492 = vmul.f32 %v1474, %v1490
          %1494 = vrot.lane.b32.xlu0 %v1492, 32
          %v1495 = vpop.permute.xlu0 %1494
          %v1496 = vsel %vm776, %v1495, 0
          %1498 = vmatprep.subr.mxu0 0.0
          %1499 = vmatpush1.msra.mxu0 %v783
          %1500 = vmatprep.subr.mxu0 0.0
          %1501 = vmatpush1.msra.mxu0 %v784
          %1502 = vmatprep.subr.mxu0 0.0
          %1503 = vmatpush1.msra.mxu0 %v785
          %1504 = vmatprep.subr.mxu0 0.0
          %1505 = vmatpush1.msra.mxu0 %v786
          %1506 = vmatprep.subr.mxu0 0.0
          %1507 = vmatpush1.msra.mxu0 0.0
          %1508 = vmatprep.subr.mxu0 0.0
          %1509 = vmatpush1.msra.mxu0 0.0
          %1510 = vmatprep.subr.mxu0 0.0
          %1511 = vmatpush1.msra.mxu0 0.0
          %1512 = vmatprep.subr.mxu0 0.0
          %1513 = vmatpush1.msra.mxu0 0.0
          %1514 = vmatprep.subr.mxu0 0.0
          %1515 = vmatpush1.msra.mxu0 0.0
          %1516 = vmatprep.subr.mxu0 0.0
          %1517 = vmatpush1.msra.mxu0 0.0
          %1518 = vmatprep.subr.mxu0 0.0
          %1519 = vmatpush1.msra.mxu0 0.0
          %1520 = vmatprep.subr.mxu0 0.0
          %1521 = vmatpush1.msra.mxu0 0.0
          %1522 = vmatprep.subr.mxu0 0.0
          %1523 = vmatpush1.msra.mxu0 0.0
          %1524 = vmatprep.subr.mxu0 0.0
          %1525 = vmatpush1.msra.mxu0 0.0
          %1526 = vmatprep.subr.mxu0 0.0
          %1527 = vmatpush1.msra.mxu0 0.0
          %1528 = vmatprep.subr.mxu0 0.0
          %1529 = vmatpush1.msra.mxu0 0.0
          %1530 = vmatprep.subr.mxu0 0.0
          %1531 = vmatpush1.msra.mxu0 0.0
          %1532 = vmatprep.subr.mxu0 0.0
          %1533 = vmatpush1.msra.mxu0 0.0
          %1534 = vmatprep.subr.mxu0 0.0
          %1535 = vmatpush1.msra.mxu0 0.0
          %1536 = vmatprep.subr.mxu0 0.0
          %1537 = vmatpush1.msra.mxu0 0.0
          %1538 = vmatprep.subr.mxu0 0.0
          %1539 = vmatpush1.msra.mxu0 0.0
          %1540 = vmatprep.subr.mxu0 0.0
          %1541 = vmatpush1.msra.mxu0 0.0
          %1542 = vmatprep.subr.mxu0 0.0
          %1543 = vmatpush1.msra.mxu0 0.0
          %1544 = vmatprep.subr.mxu0 0.0
          %1545 = vmatpush1.msra.mxu0 0.0
          %1546 = vmatprep.subr.mxu0 0.0
          %1547 = vmatpush1.msra.mxu0 0.0
          %1548 = vmatprep.subr.mxu0 0.0
          %1549 = vmatpush1.msra.mxu0 0.0
          %1550 = vmatprep.subr.mxu0 0.0
          %1551 = vmatpush1.msra.mxu0 0.0
          %1552 = vmatprep.subr.mxu0 0.0
          %1553 = vmatpush1.msra.mxu0 0.0
          %1554 = vmatprep.subr.mxu0 0.0
          %1555 = vmatpush1.msra.mxu0 0.0
          %1556 = vmatprep.subr.mxu0 0.0
          %1557 = vmatpush1.msra.mxu0 0.0
          %1558 = vmatprep.subr.mxu0 0.0
          %1559 = vmatpush1.msra.mxu0 0.0
          %1560 = vmatprep.subr.mxu0 0.0
          %1561 = vmatpush1.msra.mxu0 0.0
          %1562 = vmatprep.mubr.f32.mxu0 0.0
          %1563 = vmatmul.mubr.f32.gmra.mrb[0].mxu0 %v1496
          %v1564 = vpop.f32.mrb[0].mxu0
          %v1565 = vadd.f32 0.0, %v1564
          %v1566 = vpop.f32.mrb[0].mxu0
          %1567 = vdwg.mxu0
          %v1568 = vrot.slane %v768, 4
          %v1569 = vrot.slane %v773, 3
          %v1570 = vsel %vm864, %v1569, %v1568
          %v1571 = vsel %vm776, %v1570, 0
          %1573 = vmatprep.subr.mxu0 0.0
          %1574 = vmatpush1.msra.mxu0 %v779
          %1575 = vmatprep.subr.mxu0 0.0
          %1576 = vmatpush1.msra.mxu0 %v780
          %1577 = vmatprep.subr.mxu0 0.0
          %1578 = vmatpush1.msra.mxu0 %v781
          %1579 = vmatprep.subr.mxu0 0.0
          %1580 = vmatpush1.msra.mxu0 %v782
          %1581 = vmatprep.subr.mxu0 0.0
          %1582 = vmatpush1.msra.mxu0 0.0
          %1583 = vmatprep.subr.mxu0 0.0
          %1584 = vmatpush1.msra.mxu0 0.0
          %1585 = vmatprep.subr.mxu0 0.0
          %1586 = vmatpush1.msra.mxu0 0.0
          %1587 = vmatprep.subr.mxu0 0.0
          %1588 = vmatpush1.msra.mxu0 0.0
          %1589 = vmatprep.subr.mxu0 0.0
          %1590 = vmatpush1.msra.mxu0 0.0
          %1591 = vmatprep.subr.mxu0 0.0
          %1592 = vmatpush1.msra.mxu0 0.0
          %1593 = vmatprep.subr.mxu0 0.0
          %1594 = vmatpush1.msra.mxu0 0.0
          %1595 = vmatprep.subr.mxu0 0.0
          %1596 = vmatpush1.msra.mxu0 0.0
          %1597 = vmatprep.subr.mxu0 0.0
          %1598 = vmatpush1.msra.mxu0 0.0
          %1599 = vmatprep.subr.mxu0 0.0
          %1600 = vmatpush1.msra.mxu0 0.0
          %1601 = vmatprep.subr.mxu0 0.0
          %1602 = vmatpush1.msra.mxu0 0.0
          %1603 = vmatprep.subr.mxu0 0.0
          %1604 = vmatpush1.msra.mxu0 0.0
          %1605 = vmatprep.subr.mxu0 0.0
          %1606 = vmatpush1.msra.mxu0 0.0
          %1607 = vmatprep.subr.mxu0 0.0
          %1608 = vmatpush1.msra.mxu0 0.0
          %1609 = vmatprep.subr.mxu0 0.0
          %1610 = vmatpush1.msra.mxu0 0.0
          %1611 = vmatprep.subr.mxu0 0.0
          %1612 = vmatpush1.msra.mxu0 0.0
          %1613 = vmatprep.subr.mxu0 0.0
          %1614 = vmatpush1.msra.mxu0 0.0
          %1615 = vmatprep.subr.mxu0 0.0
          %1616 = vmatpush1.msra.mxu0 0.0
          %1617 = vmatprep.subr.mxu0 0.0
          %1618 = vmatpush1.msra.mxu0 0.0
          %1619 = vmatprep.subr.mxu0 0.0
          %1620 = vmatpush1.msra.mxu0 0.0
          %1621 = vmatprep.subr.mxu0 0.0
          %1622 = vmatpush1.msra.mxu0 0.0
          %1623 = vmatprep.subr.mxu0 0.0
          %1624 = vmatpush1.msra.mxu0 0.0
          %1625 = vmatprep.subr.mxu0 0.0
          %1626 = vmatpush1.msra.mxu0 0.0
          %1627 = vmatprep.subr.mxu0 0.0
          %1628 = vmatpush1.msra.mxu0 0.0
          %1629 = vmatprep.subr.mxu0 0.0
          %1630 = vmatpush1.msra.mxu0 0.0
          %1631 = vmatprep.subr.mxu0 0.0
          %1632 = vmatpush1.msra.mxu0 0.0
          %1633 = vmatprep.subr.mxu0 0.0
          %1634 = vmatpush1.msra.mxu0 0.0
          %1635 = vmatprep.subr.mxu0 0.0
          %1636 = vmatpush1.msra.mxu0 0.0
          %1637 = vmatprep.mubr.f32.mxu0 0.0
          %1638 = vmatmul.mubr.f32.gmra.mrb[0].mxu0 %v1571
          %v1639 = vpop.f32.mrb[0].mxu0
          %v1640 = vadd.f32 %v1565, %v1639
          %v1641 = vpop.f32.mrb[0].mxu0
          %1642 = vdwg.mxu0
          %v1643 = vadd.f32 %v1640, %v942
          %v1644 = vxor.u32 %v1643, 2147483648
          %v1645 = vmul.f32 %v1644, 1.442695
          %v1646 = vpow.pop %v1645
          %v1647 = vadd.f32 %v1646, 1.0
          %v1648 = vrcp.pop %v1647
          %v1649 = vmul.f32 1.0, %v1648
          %v1650 = vtanh.pop %v1643
          %v1651 = vmul.f32 %v1649, %v1486
          %1653 = vrot.lane.b32.xlu0 %v1650, 64
          %v1654 = vpop.permute.xlu0 %1653
          %v1656 = vmul.f32 %v1649, %v1654
          %1658 = vrot.lane.b32.xlu0 %v1656, 32
          %v1659 = vpop.permute.xlu0 %1658
          %v1661 = vadd.f32 %v1651, %v1659
          %v1662 = vtanh.pop %v1661
          %1664 = vrot.lane.b32.xlu0 %v1662, 64
          %v1665 = vpop.permute.xlu0 %1664
          %v1667 = vmul.f32 %v1649, %v1665
          %1669 = vrot.lane.b32.xlu0 %v1667, 32
          %v1670 = vpop.permute.xlu0 %1669
          %v1671 = vsel %vm776, %v1670, 0
          %1673 = vmatprep.subr.mxu0 0.0
          %1674 = vmatpush1.msra.mxu0 %v783
          %1675 = vmatprep.subr.mxu0 0.0
          %1676 = vmatpush1.msra.mxu0 %v784
          %1677 = vmatprep.subr.mxu0 0.0
          %1678 = vmatpush1.msra.mxu0 %v785
          %1679 = vmatprep.subr.mxu0 0.0
          %1680 = vmatpush1.msra.mxu0 %v786
          %1681 = vmatprep.subr.mxu0 0.0
          %1682 = vmatpush1.msra.mxu0 0.0
          %1683 = vmatprep.subr.mxu0 0.0
          %1684 = vmatpush1.msra.mxu0 0.0
          %1685 = vmatprep.subr.mxu0 0.0
          %1686 = vmatpush1.msra.mxu0 0.0
          %1687 = vmatprep.subr.mxu0 0.0
          %1688 = vmatpush1.msra.mxu0 0.0
          %1689 = vmatprep.subr.mxu0 0.0
          %1690 = vmatpush1.msra.mxu0 0.0
          %1691 = vmatprep.subr.mxu0 0.0
          %1692 = vmatpush1.msra.mxu0 0.0
          %1693 = vmatprep.subr.mxu0 0.0
          %1694 = vmatpush1.msra.mxu0 0.0
          %1695 = vmatprep.subr.mxu0 0.0
          %1696 = vmatpush1.msra.mxu0 0.0
          %1697 = vmatprep.subr.mxu0 0.0
          %1698 = vmatpush1.msra.mxu0 0.0
          %1699 = vmatprep.subr.mxu0 0.0
          %1700 = vmatpush1.msra.mxu0 0.0
          %1701 = vmatprep.subr.mxu0 0.0
          %1702 = vmatpush1.msra.mxu0 0.0
          %1703 = vmatprep.subr.mxu0 0.0
          %1704 = vmatpush1.msra.mxu0 0.0
          %1705 = vmatprep.subr.mxu0 0.0
          %1706 = vmatpush1.msra.mxu0 0.0
          %1707 = vmatprep.subr.mxu0 0.0
          %1708 = vmatpush1.msra.mxu0 0.0
          %1709 = vmatprep.subr.mxu0 0.0
          %1710 = vmatpush1.msra.mxu0 0.0
          %1711 = vmatprep.subr.mxu0 0.0
          %1712 = vmatpush1.msra.mxu0 0.0
          %1713 = vmatprep.subr.mxu0 0.0
          %1714 = vmatpush1.msra.mxu0 0.0
          %1715 = vmatprep.subr.mxu0 0.0
          %1716 = vmatpush1.msra.mxu0 0.0
          %1717 = vmatprep.subr.mxu0 0.0
          %1718 = vmatpush1.msra.mxu0 0.0
          %1719 = vmatprep.subr.mxu0 0.0
          %1720 = vmatpush1.msra.mxu0 0.0
          %1721 = vmatprep.subr.mxu0 0.0
          %1722 = vmatpush1.msra.mxu0 0.0
          %1723 = vmatprep.subr.mxu0 0.0
          %1724 = vmatpush1.msra.mxu0 0.0
          %1725 = vmatprep.subr.mxu0 0.0
          %1726 = vmatpush1.msra.mxu0 0.0
          %1727 = vmatprep.subr.mxu0 0.0
          %1728 = vmatpush1.msra.mxu0 0.0
          %1729 = vmatprep.subr.mxu0 0.0
          %1730 = vmatpush1.msra.mxu0 0.0
          %1731 = vmatprep.subr.mxu0 0.0
          %1732 = vmatpush1.msra.mxu0 0.0
          %1733 = vmatprep.subr.mxu0 0.0
          %1734 = vmatpush1.msra.mxu0 0.0
          %1735 = vmatprep.subr.mxu0 0.0
          %1736 = vmatpush1.msra.mxu0 0.0
          %1737 = vmatprep.mubr.f32.mxu0 0.0
          %1738 = vmatmul.mubr.f32.gmra.mrb[0].mxu0 %v1671
          %v1739 = vpop.f32.mrb[0].mxu0
          %v1740 = vadd.f32 0.0, %v1739
          %v1741 = vpop.f32.mrb[0].mxu0
          %1742 = vdwg.mxu0
          %v1743 = vrot.slane %v768, 5
          %v1744 = vrot.slane %v773, 4
          %v1745 = vsel %vm864, %v1744, %v1743
          %v1746 = vsel %vm776, %v1745, 0
          %1748 = vmatprep.subr.mxu0 0.0
          %1749 = vmatpush1.msra.mxu0 %v779
          %1750 = vmatprep.subr.mxu0 0.0
          %1751 = vmatpush1.msra.mxu0 %v780
          %1752 = vmatprep.subr.mxu0 0.0
          %1753 = vmatpush1.msra.mxu0 %v781
          %1754 = vmatprep.subr.mxu0 0.0
          %1755 = vmatpush1.msra.mxu0 %v782
          %1756 = vmatprep.subr.mxu0 0.0
          %1757 = vmatpush1.msra.mxu0 0.0
          %1758 = vmatprep.subr.mxu0 0.0
          %1759 = vmatpush1.msra.mxu0 0.0
          %1760 = vmatprep.subr.mxu0 0.0
          %1761 = vmatpush1.msra.mxu0 0.0
          %1762 = vmatprep.subr.mxu0 0.0
          %1763 = vmatpush1.msra.mxu0 0.0
          %1764 = vmatprep.subr.mxu0 0.0
          %1765 = vmatpush1.msra.mxu0 0.0
          %1766 = vmatprep.subr.mxu0 0.0
          %1767 = vmatpush1.msra.mxu0 0.0
          %1768 = vmatprep.subr.mxu0 0.0
          %1769 = vmatpush1.msra.mxu0 0.0
          %1770 = vmatprep.subr.mxu0 0.0
          %1771 = vmatpush1.msra.mxu0 0.0
          %1772 = vmatprep.subr.mxu0 0.0
          %1773 = vmatpush1.msra.mxu0 0.0
          %1774 = vmatprep.subr.mxu0 0.0
          %1775 = vmatpush1.msra.mxu0 0.0
          %1776 = vmatprep.subr.mxu0 0.0
          %1777 = vmatpush1.msra.mxu0 0.0
          %1778 = vmatprep.subr.mxu0 0.0
          %1779 = vmatpush1.msra.mxu0 0.0
          %1780 = vmatprep.subr.mxu0 0.0
          %1781 = vmatpush1.msra.mxu0 0.0
          %1782 = vmatprep.subr.mxu0 0.0
          %1783 = vmatpush1.msra.mxu0 0.0
          %1784 = vmatprep.subr.mxu0 0.0
          %1785 = vmatpush1.msra.mxu0 0.0
          %1786 = vmatprep.subr.mxu0 0.0
          %1787 = vmatpush1.msra.mxu0 0.0
          %1788 = vmatprep.subr.mxu0 0.0
          %1789 = vmatpush1.msra.mxu0 0.0
          %1790 = vmatprep.subr.mxu0 0.0
          %1791 = vmatpush1.msra.mxu0 0.0
          %1792 = vmatprep.subr.mxu0 0.0
          %1793 = vmatpush1.msra.mxu0 0.0
          %1794 = vmatprep.subr.mxu0 0.0
          %1795 = vmatpush1.msra.mxu0 0.0
          %1796 = vmatprep.subr.mxu0 0.0
          %1797 = vmatpush1.msra.mxu0 0.0
          %1798 = vmatprep.subr.mxu0 0.0
          %1799 = vmatpush1.msra.mxu0 0.0
          %1800 = vmatprep.subr.mxu0 0.0
          %1801 = vmatpush1.msra.mxu0 0.0
          %1802 = vmatprep.subr.mxu0 0.0
          %1803 = vmatpush1.msra.mxu0 0.0
          %1804 = vmatprep.subr.mxu0 0.0
          %1805 = vmatpush1.msra.mxu0 0.0
          %1806 = vmatprep.subr.mxu0 0.0
          %1807 = vmatpush1.msra.mxu0 0.0
          %1808 = vmatprep.subr.mxu0 0.0
          %1809 = vmatpush1.msra.mxu0 0.0
          %1810 = vmatprep.subr.mxu0 0.0
          %1811 = vmatpush1.msra.mxu0 0.0
          %1812 = vmatprep.mubr.f32.mxu0 0.0
          %1813 = vmatmul.mubr.f32.gmra.mrb[0].mxu0 %v1746
          %v1814 = vpop.f32.mrb[0].mxu0
          %v1815 = vadd.f32 %v1740, %v1814
          %v1816 = vpop.f32.mrb[0].mxu0
          %1817 = vdwg.mxu0
          %v1818 = vadd.f32 %v1815, %v942
          %v1819 = vxor.u32 %v1818, 2147483648
          %v1820 = vmul.f32 %v1819, 1.442695
          %v1821 = vpow.pop %v1820
          %v1822 = vadd.f32 %v1821, 1.0
          %v1823 = vrcp.pop %v1822
          %v1824 = vmul.f32 1.0, %v1823
          %v1825 = vtanh.pop %v1818
          %v1826 = vmul.f32 %v1824, %v1661
          %1828 = vrot.lane.b32.xlu0 %v1825, 64
          %v1829 = vpop.permute.xlu0 %1828
          %v1831 = vmul.f32 %v1824, %v1829
          %1833 = vrot.lane.b32.xlu0 %v1831, 32
          %v1834 = vpop.permute.xlu0 %1833
          %v1836 = vadd.f32 %v1826, %v1834
          %v1837 = vtanh.pop %v1836
          %1839 = vrot.lane.b32.xlu0 %v1837, 64
          %v1840 = vpop.permute.xlu0 %1839
          %v1842 = vmul.f32 %v1824, %v1840
          %1844 = vrot.lane.b32.xlu0 %v1842, 32
          %v1845 = vpop.permute.xlu0 %1844
          %v1846 = vsel %vm776, %v1845, 0
          %1848 = vmatprep.subr.mxu0 0.0
          %1849 = vmatpush1.msra.mxu0 %v783
          %1850 = vmatprep.subr.mxu0 0.0
          %1851 = vmatpush1.msra.mxu0 %v784
          %1852 = vmatprep.subr.mxu0 0.0
          %1853 = vmatpush1.msra.mxu0 %v785
          %1854 = vmatprep.subr.mxu0 0.0
          %1855 = vmatpush1.msra.mxu0 %v786
          %1856 = vmatprep.subr.mxu0 0.0
          %1857 = vmatpush1.msra.mxu0 0.0
          %1858 = vmatprep.subr.mxu0 0.0
          %1859 = vmatpush1.msra.mxu0 0.0
          %1860 = vmatprep.subr.mxu0 0.0
          %1861 = vmatpush1.msra.mxu0 0.0
          %1862 = vmatprep.subr.mxu0 0.0
          %1863 = vmatpush1.msra.mxu0 0.0
          %1864 = vmatprep.subr.mxu0 0.0
          %1865 = vmatpush1.msra.mxu0 0.0
          %1866 = vmatprep.subr.mxu0 0.0
          %1867 = vmatpush1.msra.mxu0 0.0
          %1868 = vmatprep.subr.mxu0 0.0
          %1869 = vmatpush1.msra.mxu0 0.0
          %1870 = vmatprep.subr.mxu0 0.0
          %1871 = vmatpush1.msra.mxu0 0.0
          %1872 = vmatprep.subr.mxu0 0.0
          %1873 = vmatpush1.msra.mxu0 0.0
          %1874 = vmatprep.subr.mxu0 0.0
          %1875 = vmatpush1.msra.mxu0 0.0
          %1876 = vmatprep.subr.mxu0 0.0
          %1877 = vmatpush1.msra.mxu0 0.0
          %1878 = vmatprep.subr.mxu0 0.0
          %1879 = vmatpush1.msra.mxu0 0.0
          %1880 = vmatprep.subr.mxu0 0.0
          %1881 = vmatpush1.msra.mxu0 0.0
          %1882 = vmatprep.subr.mxu0 0.0
          %1883 = vmatpush1.msra.mxu0 0.0
          %1884 = vmatprep.subr.mxu0 0.0
          %1885 = vmatpush1.msra.mxu0 0.0
          %1886 = vmatprep.subr.mxu0 0.0
          %1887 = vmatpush1.msra.mxu0 0.0
          %1888 = vmatprep.subr.mxu0 0.0
          %1889 = vmatpush1.msra.mxu0 0.0
          %1890 = vmatprep.subr.mxu0 0.0
          %1891 = vmatpush1.msra.mxu0 0.0
          %1892 = vmatprep.subr.mxu0 0.0
          %1893 = vmatpush1.msra.mxu0 0.0
          %1894 = vmatprep.subr.mxu0 0.0
          %1895 = vmatpush1.msra.mxu0 0.0
          %1896 = vmatprep.subr.mxu0 0.0
          %1897 = vmatpush1.msra.mxu0 0.0
          %1898 = vmatprep.subr.mxu0 0.0
          %1899 = vmatpush1.msra.mxu0 0.0
          %1900 = vmatprep.subr.mxu0 0.0
          %1901 = vmatpush1.msra.mxu0 0.0
          %1902 = vmatprep.subr.mxu0 0.0
          %1903 = vmatpush1.msra.mxu0 0.0
          %1904 = vmatprep.subr.mxu0 0.0
          %1905 = vmatpush1.msra.mxu0 0.0
          %1906 = vmatprep.subr.mxu0 0.0
          %1907 = vmatpush1.msra.mxu0 0.0
          %1908 = vmatprep.subr.mxu0 0.0
          %1909 = vmatpush1.msra.mxu0 0.0
          %1910 = vmatprep.subr.mxu0 0.0
          %1911 = vmatpush1.msra.mxu0 0.0
          %1912 = vmatprep.mubr.f32.mxu0 0.0
          %1913 = vmatmul.mubr.f32.gmra.mrb[0].mxu0 %v1846
          %v1914 = vpop.f32.mrb[0].mxu0
          %v1915 = vadd.f32 0.0, %v1914
          %v1916 = vpop.f32.mrb[0].mxu0
          %1917 = vdwg.mxu0
          %v1918 = vrot.slane %v768, 6
          %v1919 = vrot.slane %v773, 5
          %v1920 = vsel %vm864, %v1919, %v1918
          %v1921 = vsel %vm776, %v1920, 0
          %1923 = vmatprep.subr.mxu0 0.0
          %1924 = vmatpush1.msra.mxu0 %v779
          %1925 = vmatprep.subr.mxu0 0.0
          %1926 = vmatpush1.msra.mxu0 %v780
          %1927 = vmatprep.subr.mxu0 0.0
          %1928 = vmatpush1.msra.mxu0 %v781
          %1929 = vmatprep.subr.mxu0 0.0
          %1930 = vmatpush1.msra.mxu0 %v782
          %1931 = vmatprep.subr.mxu0 0.0
          %1932 = vmatpush1.msra.mxu0 0.0
          %1933 = vmatprep.subr.mxu0 0.0
          %1934 = vmatpush1.msra.mxu0 0.0
          %1935 = vmatprep.subr.mxu0 0.0
          %1936 = vmatpush1.msra.mxu0 0.0
          %1937 = vmatprep.subr.mxu0 0.0
          %1938 = vmatpush1.msra.mxu0 0.0
          %1939 = vmatprep.subr.mxu0 0.0
          %1940 = vmatpush1.msra.mxu0 0.0
          %1941 = vmatprep.subr.mxu0 0.0
          %1942 = vmatpush1.msra.mxu0 0.0
          %1943 = vmatprep.subr.mxu0 0.0
          %1944 = vmatpush1.msra.mxu0 0.0
          %1945 = vmatprep.subr.mxu0 0.0
          %1946 = vmatpush1.msra.mxu0 0.0
          %1947 = vmatprep.subr.mxu0 0.0
          %1948 = vmatpush1.msra.mxu0 0.0
          %1949 = vmatprep.subr.mxu0 0.0
          %1950 = vmatpush1.msra.mxu0 0.0
          %1951 = vmatprep.subr.mxu0 0.0
          %1952 = vmatpush1.msra.mxu0 0.0
          %1953 = vmatprep.subr.mxu0 0.0
          %1954 = vmatpush1.msra.mxu0 0.0
          %1955 = vmatprep.subr.mxu0 0.0
          %1956 = vmatpush1.msra.mxu0 0.0
          %1957 = vmatprep.subr.mxu0 0.0
          %1958 = vmatpush1.msra.mxu0 0.0
          %1959 = vmatprep.subr.mxu0 0.0
          %1960 = vmatpush1.msra.mxu0 0.0
          %1961 = vmatprep.subr.mxu0 0.0
          %1962 = vmatpush1.msra.mxu0 0.0
          %1963 = vmatprep.subr.mxu0 0.0
          %1964 = vmatpush1.msra.mxu0 0.0
          %1965 = vmatprep.subr.mxu0 0.0
          %1966 = vmatpush1.msra.mxu0 0.0
          %1967 = vmatprep.subr.mxu0 0.0
          %1968 = vmatpush1.msra.mxu0 0.0
          %1969 = vmatprep.subr.mxu0 0.0
          %1970 = vmatpush1.msra.mxu0 0.0
          %1971 = vmatprep.subr.mxu0 0.0
          %1972 = vmatpush1.msra.mxu0 0.0
          %1973 = vmatprep.subr.mxu0 0.0
          %1974 = vmatpush1.msra.mxu0 0.0
          %1975 = vmatprep.subr.mxu0 0.0
          %1976 = vmatpush1.msra.mxu0 0.0
          %1977 = vmatprep.subr.mxu0 0.0
          %1978 = vmatpush1.msra.mxu0 0.0
          %1979 = vmatprep.subr.mxu0 0.0
          %1980 = vmatpush1.msra.mxu0 0.0
          %1981 = vmatprep.subr.mxu0 0.0
          %1982 = vmatpush1.msra.mxu0 0.0
          %1983 = vmatprep.subr.mxu0 0.0
          %1984 = vmatpush1.msra.mxu0 0.0
          %1985 = vmatprep.subr.mxu0 0.0
          %1986 = vmatpush1.msra.mxu0 0.0
          %1987 = vmatprep.mubr.f32.mxu0 0.0
          %1988 = vmatmul.mubr.f32.gmra.mrb[0].mxu0 %v1921
          %v1989 = vpop.f32.mrb[0].mxu0
          %v1990 = vadd.f32 %v1915, %v1989
          %v1991 = vpop.f32.mrb[0].mxu0
          %1992 = vdwg.mxu0
          %v1993 = vadd.f32 %v1990, %v942
          %v1994 = vxor.u32 %v1993, 2147483648
          %v1995 = vmul.f32 %v1994, 1.442695
          %v1996 = vpow.pop %v1995
          %v1997 = vadd.f32 %v1996, 1.0
          %v1998 = vrcp.pop %v1997
          %v1999 = vmul.f32 1.0, %v1998
          %v2000 = vtanh.pop %v1993
          %v2001 = vmul.f32 %v1999, %v1836
          %2003 = vrot.lane.b32.xlu0 %v2000, 64
          %v2004 = vpop.permute.xlu0 %2003
          %v2006 = vmul.f32 %v1999, %v2004
          %2008 = vrot.lane.b32.xlu0 %v2006, 32
          %v2009 = vpop.permute.xlu0 %2008
          %v2011 = vadd.f32 %v2001, %v2009
          %v2012 = vtanh.pop %v2011
          %2014 = vrot.lane.b32.xlu0 %v2012, 64
          %v2015 = vpop.permute.xlu0 %2014
          %v2017 = vmul.f32 %v1999, %v2015
          %2019 = vrot.lane.b32.xlu0 %v2017, 32
          %v2020 = vpop.permute.xlu0 %2019
          %v2021 = vsel %vm776, %v2020, 0
          %2023 = vmatprep.subr.mxu0 0.0
          %2024 = vmatpush1.msra.mxu0 %v783
          %2025 = vmatprep.subr.mxu0 0.0
          %2026 = vmatpush1.msra.mxu0 %v784
          %2027 = vmatprep.subr.mxu0 0.0
          %2028 = vmatpush1.msra.mxu0 %v785
          %2029 = vmatprep.subr.mxu0 0.0
          %2030 = vmatpush1.msra.mxu0 %v786
          %2031 = vmatprep.subr.mxu0 0.0
          %2032 = vmatpush1.msra.mxu0 0.0
          %2033 = vmatprep.subr.mxu0 0.0
          %2034 = vmatpush1.msra.mxu0 0.0
          %2035 = vmatprep.subr.mxu0 0.0
          %2036 = vmatpush1.msra.mxu0 0.0
          %2037 = vmatprep.subr.mxu0 0.0
          %2038 = vmatpush1.msra.mxu0 0.0
          %2039 = vmatprep.subr.mxu0 0.0
          %2040 = vmatpush1.msra.mxu0 0.0
          %2041 = vmatprep.subr.mxu0 0.0
          %2042 = vmatpush1.msra.mxu0 0.0
          %2043 = vmatprep.subr.mxu0 0.0
          %2044 = vmatpush1.msra.mxu0 0.0
          %2045 = vmatprep.subr.mxu0 0.0
          %2046 = vmatpush1.msra.mxu0 0.0
          %2047 = vmatprep.subr.mxu0 0.0
          %2048 = vmatpush1.msra.mxu0 0.0
          %2049 = vmatprep.subr.mxu0 0.0
          %2050 = vmatpush1.msra.mxu0 0.0
          %2051 = vmatprep.subr.mxu0 0.0
          %2052 = vmatpush1.msra.mxu0 0.0
          %2053 = vmatprep.subr.mxu0 0.0
          %2054 = vmatpush1.msra.mxu0 0.0
          %2055 = vmatprep.subr.mxu0 0.0
          %2056 = vmatpush1.msra.mxu0 0.0
          %2057 = vmatprep.subr.mxu0 0.0
          %2058 = vmatpush1.msra.mxu0 0.0
          %2059 = vmatprep.subr.mxu0 0.0
          %2060 = vmatpush1.msra.mxu0 0.0
          %2061 = vmatprep.subr.mxu0 0.0
          %2062 = vmatpush1.msra.mxu0 0.0
          %2063 = vmatprep.subr.mxu0 0.0
          %2064 = vmatpush1.msra.mxu0 0.0
          %2065 = vmatprep.subr.mxu0 0.0
          %2066 = vmatpush1.msra.mxu0 0.0
          %2067 = vmatprep.subr.mxu0 0.0
          %2068 = vmatpush1.msra.mxu0 0.0
          %2069 = vmatprep.subr.mxu0 0.0
          %2070 = vmatpush1.msra.mxu0 0.0
          %2071 = vmatprep.subr.mxu0 0.0
          %2072 = vmatpush1.msra.mxu0 0.0
          %2073 = vmatprep.subr.mxu0 0.0
          %2074 = vmatpush1.msra.mxu0 0.0
          %2075 = vmatprep.subr.mxu0 0.0
          %2076 = vmatpush1.msra.mxu0 0.0
          %2077 = vmatprep.subr.mxu0 0.0
          %2078 = vmatpush1.msra.mxu0 0.0
          %2079 = vmatprep.subr.mxu0 0.0
          %2080 = vmatpush1.msra.mxu0 0.0
          %2081 = vmatprep.subr.mxu0 0.0
          %2082 = vmatpush1.msra.mxu0 0.0
          %2083 = vmatprep.subr.mxu0 0.0
          %2084 = vmatpush1.msra.mxu0 0.0
          %2085 = vmatprep.subr.mxu0 0.0
          %2086 = vmatpush1.msra.mxu0 0.0
          %2087 = vmatprep.mubr.f32.mxu0 0.0
          %2088 = vmatmul.mubr.f32.gmra.mrb[0].mxu0 %v2021
          %v2089 = vpop.f32.mrb[0].mxu0
          %v2090 = vadd.f32 0.0, %v2089
          %v2091 = vpop.f32.mrb[0].mxu0
          %2092 = vdwg.mxu0
          %v2093 = vrot.slane %v768, 7
          %v2094 = vrot.slane %v773, 6
          %v2095 = vsel %vm864, %v2094, %v2093
          %v2096 = vsel %vm776, %v2095, 0
          %2098 = vmatprep.subr.mxu0 0.0
          %2099 = vmatpush1.msra.mxu0 %v779
          %2100 = vmatprep.subr.mxu0 0.0
          %2101 = vmatpush1.msra.mxu0 %v780
          %2102 = vmatprep.subr.mxu0 0.0
          %2103 = vmatpush1.msra.mxu0 %v781
          %2104 = vmatprep.subr.mxu0 0.0
          %2105 = vmatpush1.msra.mxu0 %v782
          %2106 = vmatprep.subr.mxu0 0.0
          %2107 = vmatpush1.msra.mxu0 0.0
          %2108 = vmatprep.subr.mxu0 0.0
          %2109 = vmatpush1.msra.mxu0 0.0
          %2110 = vmatprep.subr.mxu0 0.0
          %2111 = vmatpush1.msra.mxu0 0.0
          %2112 = vmatprep.subr.mxu0 0.0
          %2113 = vmatpush1.msra.mxu0 0.0
          %2114 = vmatprep.subr.mxu0 0.0
          %2115 = vmatpush1.msra.mxu0 0.0
          %2116 = vmatprep.subr.mxu0 0.0
          %2117 = vmatpush1.msra.mxu0 0.0
          %2118 = vmatprep.subr.mxu0 0.0
          %2119 = vmatpush1.msra.mxu0 0.0
          %2120 = vmatprep.subr.mxu0 0.0
          %2121 = vmatpush1.msra.mxu0 0.0
          %2122 = vmatprep.subr.mxu0 0.0
          %2123 = vmatpush1.msra.mxu0 0.0
          %2124 = vmatprep.subr.mxu0 0.0
          %2125 = vmatpush1.msra.mxu0 0.0
          %2126 = vmatprep.subr.mxu0 0.0
          %2127 = vmatpush1.msra.mxu0 0.0
          %2128 = vmatprep.subr.mxu0 0.0
          %2129 = vmatpush1.msra.mxu0 0.0
          %2130 = vmatprep.subr.mxu0 0.0
          %2131 = vmatpush1.msra.mxu0 0.0
          %2132 = vmatprep.subr.mxu0 0.0
          %2133 = vmatpush1.msra.mxu0 0.0
          %2134 = vmatprep.subr.mxu0 0.0
          %2135 = vmatpush1.msra.mxu0 0.0
          %2136 = vmatprep.subr.mxu0 0.0
          %2137 = vmatpush1.msra.mxu0 0.0
          %2138 = vmatprep.subr.mxu0 0.0
          %2139 = vmatpush1.msra.mxu0 0.0
          %2140 = vmatprep.subr.mxu0 0.0
          %2141 = vmatpush1.msra.mxu0 0.0
          %2142 = vmatprep.subr.mxu0 0.0
          %2143 = vmatpush1.msra.mxu0 0.0
          %2144 = vmatprep.subr.mxu0 0.0
          %2145 = vmatpush1.msra.mxu0 0.0
          %2146 = vmatprep.subr.mxu0 0.0
          %2147 = vmatpush1.msra.mxu0 0.0
          %2148 = vmatprep.subr.mxu0 0.0
          %2149 = vmatpush1.msra.mxu0 0.0
          %2150 = vmatprep.subr.mxu0 0.0
          %2151 = vmatpush1.msra.mxu0 0.0
          %2152 = vmatprep.subr.mxu0 0.0
          %2153 = vmatpush1.msra.mxu0 0.0
          %2154 = vmatprep.subr.mxu0 0.0
          %2155 = vmatpush1.msra.mxu0 0.0
          %2156 = vmatprep.subr.mxu0 0.0
          %2157 = vmatpush1.msra.mxu0 0.0
          %2158 = vmatprep.subr.mxu0 0.0
          %2159 = vmatpush1.msra.mxu0 0.0
          %2160 = vmatprep.subr.mxu0 0.0
          %2161 = vmatpush1.msra.mxu0 0.0
          %2162 = vmatprep.mubr.f32.mxu0 0.0
          %2163 = vmatmul.mubr.f32.gmra.mrb[0].mxu0 %v2096
          %v2164 = vpop.f32.mrb[0].mxu0
          %v2165 = vadd.f32 %v2090, %v2164
          %v2166 = vpop.f32.mrb[0].mxu0
          %2167 = vdwg.mxu0
          %v2168 = vadd.f32 %v2165, %v942
          %v2169 = vxor.u32 %v2168, 2147483648
          %v2170 = vmul.f32 %v2169, 1.442695
          %v2171 = vpow.pop %v2170
          %v2172 = vadd.f32 %v2171, 1.0
          %v2173 = vrcp.pop %v2172
          %v2174 = vmul.f32 1.0, %v2173
          %v2175 = vtanh.pop %v2168
          %v2176 = vmul.f32 %v2174, %v2011
          %2178 = vrot.lane.b32.xlu0 %v2175, 64
          %v2179 = vpop.permute.xlu0 %2178
          %v2181 = vmul.f32 %v2174, %v2179
          %2183 = vrot.lane.b32.xlu0 %v2181, 32
          %v2184 = vpop.permute.xlu0 %2183
          %v2186 = vadd.f32 %v2176, %v2184
          %v2187 = vtanh.pop %v2186
          %2189 = vrot.lane.b32.xlu0 %v2187, 64
          %v2190 = vpop.permute.xlu0 %2189
          %v2192 = vmul.f32 %v2174, %v2190
          %2194 = vrot.lane.b32.xlu0 %v2192, 32
          %v2195 = vpop.permute.xlu0 %2194
          %vm2197 = vcmask 254976
          %2198 = vst.msk [vmem:[#allocation5] sm:$0x3] %vm2197, %v2195
          %2200 = vrot.lane.b32.xlu0 %v2186, 96
          %v2201 = vpop.permute.xlu0 %2200
          %2203 = vst.msk [vmem:[#allocation6] sm:$0x3] %vm2197, %v2201
          %v2205 = vunpack.c.l.s4 1966171168
          %v2206 = vunpack.c.0.s8 %v2205
          %v2207 = vlaneseq
          %v2208 = vshrl.u32 %v2207, 7
          %v2209 = vsub.s32 %v2206, %v2208
          %v2210 = vrot.slane %v968, %v2209
          %v2211 = vcombine.high %v2210, %v2210
          %v2213 = vunpack.c.l.s4 1966171168
          %v2214 = vunpack.c.0.s8 %v2213
          %v2215 = vlaneseq
          %v2216 = vshrl.u32 %v2215, 7
          %v2217 = vsub.s32 %v2214, %v2216
          %v2218 = vrot.slane %v2210, %v2217
          %v2220 = vunpack.c.l.s4 1966171168
          %v2221 = vunpack.c.0.s8 %v2220
          %v2222 = vlaneseq
          %v2223 = vshrl.u32 %v2222, 7
          %v2224 = vsub.s32 %v2221, %v2223
          %v2225 = vrot.slane %v2211, %v2224
          %v2229 = vunpack.c.l.s4 1966171168
          %v2230 = vunpack.c.0.s8 %v2229
          %v2231 = vlaneseq
          %v2232 = vshrl.u32 %v2231, 7
          %v2233 = vsub.s32 %v2230, %v2232
          %v2234 = vrot.slane %v1142, %v2233
          %v2235 = vcombine.high %v2234, %v2234
          %v2237 = vunpack.c.l.s4 1966171168
          %v2238 = vunpack.c.0.s8 %v2237
          %v2239 = vlaneseq
          %v2240 = vshrl.u32 %v2239, 7
          %v2241 = vsub.s32 %v2238, %v2240
          %v2242 = vrot.slane %v2234, %v2241
          %v2244 = vunpack.c.l.s4 1966171168
          %v2245 = vunpack.c.0.s8 %v2244
          %v2246 = vlaneseq
          %v2247 = vshrl.u32 %v2246, 7
          %v2248 = vsub.s32 %v2245, %v2247
          %v2249 = vrot.slane %v2235, %v2248
          %v2251 = vunpack.c.l.s4 1966171168
          %v2252 = vunpack.c.0.s8 %v2251
          %v2253 = vlaneseq
          %v2254 = vshrl.u32 %v2253, 7
          %v2255 = vsub.s32 %v2252, %v2254
          %v2256 = vrot.slane %v1317, %v2255
          %v2257 = vcombine.high %v2256, %v2256
          %v2259 = vunpack.c.l.s4 1966171168
          %v2260 = vunpack.c.0.s8 %v2259
          %v2261 = vlaneseq
          %v2262 = vshrl.u32 %v2261, 7
          %v2263 = vsub.s32 %v2260, %v2262
          %v2264 = vrot.slane %v2256, %v2263
          %v2266 = vunpack.c.l.s4 1966171168
          %v2267 = vunpack.c.0.s8 %v2266
          %v2268 = vlaneseq
          %v2269 = vshrl.u32 %v2268, 7
          %v2270 = vsub.s32 %v2267, %v2269
          %v2271 = vrot.slane %v2257, %v2270
          %v2273 = vunpack.c.l.s4 1966171168
          %v2274 = vunpack.c.0.s8 %v2273
          %v2275 = vlaneseq
          %v2276 = vshrl.u32 %v2275, 7
          %v2277 = vsub.s32 %v2274, %v2276
          %v2278 = vrot.slane %v1492, %v2277
          %v2279 = vcombine.high %v2278, %v2278
          %v2281 = vunpack.c.l.s4 1966171168
          %v2282 = vunpack.c.0.s8 %v2281
          %v2283 = vlaneseq
          %v2284 = vshrl.u32 %v2283, 7
          %v2285 = vsub.s32 %v2282, %v2284
          %v2286 = vrot.slane %v2278, %v2285
          %v2288 = vunpack.c.l.s4 1966171168
          %v2289 = vunpack.c.0.s8 %v2288
          %v2290 = vlaneseq
          %v2291 = vshrl.u32 %v2290, 7
          %v2292 = vsub.s32 %v2289, %v2291
          %v2293 = vrot.slane %v2279, %v2292
          %v2295 = vunpack.c.l.s4 1966171168
          %v2296 = vunpack.c.0.s8 %v2295
          %v2297 = vlaneseq
          %v2298 = vshrl.u32 %v2297, 7
          %v2299 = vsub.s32 %v2296, %v2298
          %v2300 = vrot.slane %v1667, %v2299
          %v2301 = vcombine.high %v2300, %v2300
          %v2303 = vunpack.c.l.s4 1966171168
          %v2304 = vunpack.c.0.s8 %v2303
          %v2305 = vlaneseq
          %v2306 = vshrl.u32 %v2305, 7
          %v2307 = vsub.s32 %v2304, %v2306
          %v2308 = vrot.slane %v2300, %v2307
          %v2310 = vunpack.c.l.s4 1966171168
          %v2311 = vunpack.c.0.s8 %v2310
          %v2312 = vlaneseq
          %v2313 = vshrl.u32 %v2312, 7
          %v2314 = vsub.s32 %v2311, %v2313
          %v2315 = vrot.slane %v2301, %v2314
          %v2317 = vunpack.c.l.s4 1966171168
          %v2318 = vunpack.c.0.s8 %v2317
          %v2319 = vlaneseq
          %v2320 = vshrl.u32 %v2319, 7
          %v2321 = vsub.s32 %v2318, %v2320
          %v2322 = vrot.slane %v1842, %v2321
          %v2323 = vcombine.high %v2322, %v2322
          %v2325 = vunpack.c.l.s4 1966171168
          %v2326 = vunpack.c.0.s8 %v2325
          %v2327 = vlaneseq
          %v2328 = vshrl.u32 %v2327, 7
          %v2329 = vsub.s32 %v2326, %v2328
          %v2330 = vrot.slane %v2322, %v2329
          %v2332 = vunpack.c.l.s4 1966171168
          %v2333 = vunpack.c.0.s8 %v2332
          %v2334 = vlaneseq
          %v2335 = vshrl.u32 %v2334, 7
          %v2336 = vsub.s32 %v2333, %v2335
          %v2337 = vrot.slane %v2323, %v2336
          %v2339 = vunpack.c.l.s4 1966171168
          %v2340 = vunpack.c.0.s8 %v2339
          %v2341 = vlaneseq
          %v2342 = vshrl.u32 %v2341, 7
          %v2343 = vsub.s32 %v2340, %v2342
          %v2344 = vrot.slane %v2017, %v2343
          %v2345 = vcombine.high %v2344, %v2344
          %v2347 = vunpack.c.l.s4 1966171168
          %v2348 = vunpack.c.0.s8 %v2347
          %v2349 = vlaneseq
          %v2350 = vshrl.u32 %v2349, 7
          %v2351 = vsub.s32 %v2348, %v2350
          %v2352 = vrot.slane %v2344, %v2351
          %v2354 = vunpack.c.l.s4 1966171168
          %v2355 = vunpack.c.0.s8 %v2354
          %v2356 = vlaneseq
          %v2357 = vshrl.u32 %v2356, 7
          %v2358 = vsub.s32 %v2355, %v2357
          %v2359 = vrot.slane %v2345, %v2358
          %v2361 = vunpack.c.l.s4 1966171168
          %v2362 = vunpack.c.0.s8 %v2361
          %v2363 = vlaneseq
          %v2364 = vshrl.u32 %v2363, 7
          %v2365 = vsub.s32 %v2362, %v2364
          %v2366 = vrot.slane %v2192, %v2365
          %v2367 = vcombine.high %v2366, %v2366
          %v2369 = vunpack.c.l.s4 1966171168
          %v2370 = vunpack.c.0.s8 %v2369
          %v2371 = vlaneseq
          %v2372 = vshrl.u32 %v2371, 7
          %v2373 = vsub.s32 %v2370, %v2372
          %v2374 = vrot.slane %v2366, %v2373
          %v2376 = vunpack.c.l.s4 1966171168
          %v2377 = vunpack.c.0.s8 %v2376
          %v2378 = vlaneseq
          %v2379 = vshrl.u32 %v2378, 7
          %v2380 = vsub.s32 %v2377, %v2379
          %v2381 = vrot.slane %v2367, %v2380
          %v2382 = vlaneseq
          %v2383 = vshrl.u32 %v2382, 7
          %v2384 = vsub.s32 0, %v2383
          %v2385 = vrot.slane %v2242, %v2384
          %v2386 = vlaneseq
          %v2387 = vshrl.u32 %v2386, 7
          %v2388 = vsub.s32 0, %v2387
          %v2389 = vrot.slane %v2249, %v2388
          %v2392 = vlaneseq
          %v2393 = vshrl.u32 %v2392, 7
          %v2394 = vsub.s32 0, %v2393
          %v2395 = vrot.slane %v2264, %v2394
          %v2396 = vlaneseq
          %v2397 = vshrl.u32 %v2396, 7
          %v2398 = vsub.s32 0, %v2397
          %v2399 = vrot.slane %v2271, %v2398
          %v2402 = vlaneseq
          %v2403 = vshrl.u32 %v2402, 7
          %v2404 = vsub.s32 0, %v2403
          %v2405 = vrot.slane %v2286, %v2404
          %v2406 = vlaneseq
          %v2407 = vshrl.u32 %v2406, 7
          %v2408 = vsub.s32 0, %v2407
          %v2409 = vrot.slane %v2293, %v2408
          %v2412 = vlaneseq
          %v2413 = vshrl.u32 %v2412, 7
          %v2414 = vsub.s32 0, %v2413
          %v2415 = vrot.slane %v2308, %v2414
          %v2416 = vlaneseq
          %v2417 = vshrl.u32 %v2416, 7
          %v2418 = vsub.s32 0, %v2417
          %v2419 = vrot.slane %v2315, %v2418
          %v2422 = vlaneseq
          %v2423 = vshrl.u32 %v2422, 7
          %v2424 = vsub.s32 0, %v2423
          %v2425 = vrot.slane %v2330, %v2424
          %v2426 = vlaneseq
          %v2427 = vshrl.u32 %v2426, 7
          %v2428 = vsub.s32 0, %v2427
          %v2429 = vrot.slane %v2337, %v2428
          %v2432 = vlaneseq
          %v2433 = vshrl.u32 %v2432, 7
          %v2434 = vsub.s32 0, %v2433
          %v2435 = vrot.slane %v2352, %v2434
          %v2436 = vlaneseq
          %v2437 = vshrl.u32 %v2436, 7
          %v2438 = vsub.s32 0, %v2437
          %v2439 = vrot.slane %v2359, %v2438
          %v2442 = vlaneseq
          %v2443 = vshrl.u32 %v2442, 7
          %v2444 = vsub.s32 0, %v2443
          %v2445 = vrot.slane %v2374, %v2444
          %v2446 = vlaneseq
          %v2447 = vshrl.u32 %v2446, 7
          %v2448 = vsub.s32 0, %v2447
          %v2449 = vrot.slane %v2381, %v2448
          %vm2452 = vcmask 1040384
          %v2453 = vsel %vm2452, %v2218, %v2385
          %v2454 = vsel %vm2452, %v2225, %v2389
          %v2455 = vsel %vm697, %v2453, %v2395
          %v2456 = vsel %vm697, %v2454, %v2399
          %vm2457 = vcmask 1042432
          %v2458 = vsel %vm2457, %v2455, %v2405
          %v2459 = vsel %vm2457, %v2456, %v2409
          %vm2460 = vcmask 1043456
          %v2461 = vsel %vm2460, %v2458, %v2415
          %v2462 = vsel %vm2460, %v2459, %v2419
          %vm2463 = vcmask 1044480
          %v2464 = vsel %vm2463, %v2461, %v2425
          %v2465 = vsel %vm2463, %v2462, %v2429
          %vm2466 = vcmask 1045504
          %v2467 = vsel %vm2466, %v2464, %v2435
          %v2468 = vsel %vm2466, %v2465, %v2439
          %vm2469 = vcmask 1046528
          %v2470 = vsel %vm2469, %v2467, %v2445
          %v2471 = vsel %vm2469, %v2468, %v2449
          %v2472 = vld [vmem:[%s7] sm:$0xff]
          %v2473 = vld [vmem:[%s7 + $0x8] sm:$0xff]
          %v2474 = vld [vmem:[%s7 + $0x10] sm:$0xff]
          %v2475 = vld [vmem:[%s7 + $0x18] sm:$0xff]
          %v2476 = vld [vmem:[#allocation14] sm:$0x1]
          %v2478 = vlaneseq
          %v2479 = vshrl.u32 %v2478, 7
          %v2480 = vsub.s32 0, %v2479
          %v2481 = vrot.slane %v2476, %v2480
          %2485 = vrot.lane.b32.xlu0 %v2470, 32
          %v2486 = vpop.permute.xlu0 %2485
          %2487 = vrot.lane.b32.xlu0 %v2471, 32
          %v2488 = vpop.permute.xlu0 %2487
          %v2489 = vsel %vm776, %v2486, 0
          %v2491 = vsel %vm776, %v2488, 0
          %2493 = vmatprep.subr.mxu0 0.0
          %2494 = vmatpush1.msra.mxu0 %v2472
          %2495 = vmatprep.subr.mxu0 0.0
          %2496 = vmatpush1.msra.mxu0 %v2473
          %2497 = vmatprep.subr.mxu0 0.0
          %2498 = vmatpush1.msra.mxu0 %v2474
          %2499 = vmatprep.subr.mxu0 0.0
          %2500 = vmatpush1.msra.mxu0 %v2475
          %2501 = vmatprep.subr.mxu0 0.0
          %2502 = vmatpush1.msra.mxu0 0.0
          %2503 = vmatprep.subr.mxu0 0.0
          %2504 = vmatpush1.msra.mxu0 0.0
          %2505 = vmatprep.subr.mxu0 0.0
          %2506 = vmatpush1.msra.mxu0 0.0
          %2507 = vmatprep.subr.mxu0 0.0
          %2508 = vmatpush1.msra.mxu0 0.0
          %2509 = vmatprep.subr.mxu0 0.0
          %2510 = vmatpush1.msra.mxu0 0.0
          %2511 = vmatprep.subr.mxu0 0.0
          %2512 = vmatpush1.msra.mxu0 0.0
          %2513 = vmatprep.subr.mxu0 0.0
          %2514 = vmatpush1.msra.mxu0 0.0
          %2515 = vmatprep.subr.mxu0 0.0
          %2516 = vmatpush1.msra.mxu0 0.0
          %2517 = vmatprep.subr.mxu0 0.0
          %2518 = vmatpush1.msra.mxu0 0.0
          %2519 = vmatprep.subr.mxu0 0.0
          %2520 = vmatpush1.msra.mxu0 0.0
          %2521 = vmatprep.subr.mxu0 0.0
          %2522 = vmatpush1.msra.mxu0 0.0
          %2523 = vmatprep.subr.mxu0 0.0
          %2524 = vmatpush1.msra.mxu0 0.0
          %2525 = vmatprep.subr.mxu0 0.0
          %2526 = vmatpush1.msra.mxu0 0.0
          %2527 = vmatprep.subr.mxu0 0.0
          %2528 = vmatpush1.msra.mxu0 0.0
          %2529 = vmatprep.subr.mxu0 0.0
          %2530 = vmatpush1.msra.mxu0 0.0
          %2531 = vmatprep.subr.mxu0 0.0
          %2532 = vmatpush1.msra.mxu0 0.0
          %2533 = vmatprep.subr.mxu0 0.0
          %2534 = vmatpush1.msra.mxu0 0.0
          %2535 = vmatprep.subr.mxu0 0.0
          %2536 = vmatpush1.msra.mxu0 0.0
          %2537 = vmatprep.subr.mxu0 0.0
          %2538 = vmatpush1.msra.mxu0 0.0
          %2539 = vmatprep.subr.mxu0 0.0
          %2540 = vmatpush1.msra.mxu0 0.0
          %2541 = vmatprep.subr.mxu0 0.0
          %2542 = vmatpush1.msra.mxu0 0.0
          %2543 = vmatprep.subr.mxu0 0.0
          %2544 = vmatpush1.msra.mxu0 0.0
          %2545 = vmatprep.subr.mxu0 0.0
          %2546 = vmatpush1.msra.mxu0 0.0
          %2547 = vmatprep.subr.mxu0 0.0
          %2548 = vmatpush1.msra.mxu0 0.0
          %2549 = vmatprep.subr.mxu0 0.0
          %2550 = vmatpush1.msra.mxu0 0.0
          %2551 = vmatprep.subr.mxu0 0.0
          %2552 = vmatpush1.msra.mxu0 0.0
          %2553 = vmatprep.subr.mxu0 0.0
          %2554 = vmatpush1.msra.mxu0 0.0
          %2555 = vmatprep.subr.mxu0 0.0
          %2556 = vmatpush1.msra.mxu0 0.0
          %2557 = vmatprep.mubr.f32.mxu0 0.0
          %2558 = vmatmul.mubr.f32.gmra.mrb[0].mxu0 %v2489
          %v2559 = vpop.f32.mrb[0].mxu0
          %v2560 = vadd.f32 %v2481, %v2559
          %v2561 = vpop.f32.mrb[0].mxu0
          %2562 = vmatprep.mubr.f32.mxu0 0.0
          %2563 = vmatmul.mubr.f32.gmra.mrb[0].mxu0 %v2491
          %v2564 = vpop.f32.mrb[0].mxu0
          %v2565 = vadd.f32 %v2481, %v2564
          %v2566 = vpop.f32.mrb[0].mxu0
          %2567 = vdwg.mxu0
          %2568 = vst.msk [vmem:[#allocation3] sm:$0xff] %vm776, %v2560
          %2569 = vst.msk [vmem:[#allocation3 + $0x8] sm:$0xff] %vm776, %v2565
          %2572 = vrot.lane.b32.xlu0 %v2560, 96
          %v2573 = vpop.permute.xlu0 %2572
          %2574 = vrot.lane.b32.xlu0 %v2565, 96
          %v2575 = vpop.permute.xlu0 %2574
          %2578 = vst.msk [vmem:[#allocation4] sm:$0xff] %vm776, %v2573
          %2579 = vst.msk [vmem:[#allocation4 + $0x8] sm:$0xff] %vm776, %v2575
          %vm2580 = vcmask 58368
          %2581 = vst.msk [vmem:[#allocation7] sm:$0x3] %vm2580, 0.0
          %v2582 = vld [vmem:[%s18] sm:$0x1]
          %v2584 = vlaneseq
          %v2585 = vshrl.u32 %v2584, 7
          %v2586 = vsub.s32 0, %v2585
          %v2587 = vrot.slane %v2582, %v2586
          %2589 = vst.msk [vmem:[#allocation8] sm:$0x3] %vm2197, %v2587
        $region124: #{pointer_net_forward.1} parent=95 // pred_fallthru
          _
        %v2590 = vld [vmem:[#allocation8] sm:$0x3]
        %v2591 = vld [vmem:[#allocation5] sm:$0x3]
        %v2592 = vld [vmem:[#allocation6] sm:$0x3]
        %v2593 = vld [vmem:[%s9] sm:$0xff]
        %v2594 = vld [vmem:[%s9 + $0x8] sm:$0xff]
        %v2595 = vld [vmem:[%s9 + $0x10] sm:$0xff]
        %v2596 = vld [vmem:[%s9 + $0x18] sm:$0xff]
        %v2597 = vld [vmem:[#allocation15] sm:$0xff]
        %v2598 = vld [vmem:[#allocation15 + $0x8] sm:$0xff]
        %v2599 = vld [vmem:[#allocation15 + $0x10] sm:$0xff]
        %v2600 = vld [vmem:[#allocation15 + $0x18] sm:$0xff]
        %v2601 = vld [vmem:[%s11] sm:$0x1]
        %vm2602 = vcmask 261120
        %v2604 = vsel %vm2602, %v2591, 0
        %2606 = vmatprep.subr.mxu0 0.0
        %2607 = vmatpush1.msra.mxu0 %v2597
        %2608 = vmatprep.subr.mxu0 0.0
        %2609 = vmatpush1.msra.mxu0 %v2598
        %2610 = vmatprep.subr.mxu0 0.0
        %2611 = vmatpush1.msra.mxu0 %v2599
        %2612 = vmatprep.subr.mxu0 0.0
        %2613 = vmatpush1.msra.mxu0 %v2600
        %2614 = vmatprep.subr.mxu0 0.0
        %2615 = vmatpush1.msra.mxu0 0.0
        %2616 = vmatprep.subr.mxu0 0.0
        %2617 = vmatpush1.msra.mxu0 0.0
        %2618 = vmatprep.subr.mxu0 0.0
        %2619 = vmatpush1.msra.mxu0 0.0
        %2620 = vmatprep.subr.mxu0 0.0
        %2621 = vmatpush1.msra.mxu0 0.0
        %2622 = vmatprep.subr.mxu0 0.0
        %2623 = vmatpush1.msra.mxu0 0.0
        %2624 = vmatprep.subr.mxu0 0.0
        %2625 = vmatpush1.msra.mxu0 0.0
        %2626 = vmatprep.subr.mxu0 0.0
        %2627 = vmatpush1.msra.mxu0 0.0
        %2628 = vmatprep.subr.mxu0 0.0
        %2629 = vmatpush1.msra.mxu0 0.0
        %2630 = vmatprep.subr.mxu0 0.0
        %2631 = vmatpush1.msra.mxu0 0.0
        %2632 = vmatprep.subr.mxu0 0.0
        %2633 = vmatpush1.msra.mxu0 0.0
        %2634 = vmatprep.subr.mxu0 0.0
        %2635 = vmatpush1.msra.mxu0 0.0
        %2636 = vmatprep.subr.mxu0 0.0
        %2637 = vmatpush1.msra.mxu0 0.0
        %2638 = vmatprep.subr.mxu0 0.0
        %2639 = vmatpush1.msra.mxu0 0.0
        %2640 = vmatprep.subr.mxu0 0.0
        %2641 = vmatpush1.msra.mxu0 0.0
        %2642 = vmatprep.subr.mxu0 0.0
        %2643 = vmatpush1.msra.mxu0 0.0
        %2644 = vmatprep.subr.mxu0 0.0
        %2645 = vmatpush1.msra.mxu0 0.0
        %2646 = vmatprep.subr.mxu0 0.0
        %2647 = vmatpush1.msra.mxu0 0.0
        %2648 = vmatprep.subr.mxu0 0.0
        %2649 = vmatpush1.msra.mxu0 0.0
        %2650 = vmatprep.subr.mxu0 0.0
        %2651 = vmatpush1.msra.mxu0 0.0
        %2652 = vmatprep.subr.mxu0 0.0
        %2653 = vmatpush1.msra.mxu0 0.0
        %2654 = vmatprep.subr.mxu0 0.0
        %2655 = vmatpush1.msra.mxu0 0.0
        %2656 = vmatprep.subr.mxu0 0.0
        %2657 = vmatpush1.msra.mxu0 0.0
        %2658 = vmatprep.subr.mxu0 0.0
        %2659 = vmatpush1.msra.mxu0 0.0
        %2660 = vmatprep.subr.mxu0 0.0
        %2661 = vmatpush1.msra.mxu0 0.0
        %2662 = vmatprep.subr.mxu0 0.0
        %2663 = vmatpush1.msra.mxu0 0.0
        %2664 = vmatprep.subr.mxu0 0.0
        %2665 = vmatpush1.msra.mxu0 0.0
        %2666 = vmatprep.subr.mxu0 0.0
        %2667 = vmatpush1.msra.mxu0 0.0
        %2668 = vmatprep.subr.mxu0 0.0
        %2669 = vmatpush1.msra.mxu0 0.0
        %2670 = vmatprep.mubr.f32.mxu0 0.0
        %2671 = vmatmul.mubr.f32.gmra.mrb[0].mxu0 %v2604
        %v2672 = vpop.f32.mrb[0].mxu0
        %v2673 = vadd.f32 0.0, %v2672
        %v2674 = vpop.f32.mrb[0].mxu0
        %2675 = vdwg.mxu0
        %v2677 = vsel %vm2602, %v2590, 0
        %2679 = vmatprep.subr.mxu0 0.0
        %2680 = vmatpush1.msra.mxu0 %v2593
        %2681 = vmatprep.subr.mxu0 0.0
        %2682 = vmatpush1.msra.mxu0 %v2594
        %2683 = vmatprep.subr.mxu0 0.0
        %2684 = vmatpush1.msra.mxu0 %v2595
        %2685 = vmatprep.subr.mxu0 0.0
        %2686 = vmatpush1.msra.mxu0 %v2596
        %2687 = vmatprep.subr.mxu0 0.0
        %2688 = vmatpush1.msra.mxu0 0.0
        %2689 = vmatprep.subr.mxu0 0.0
        %2690 = vmatpush1.msra.mxu0 0.0
        %2691 = vmatprep.subr.mxu0 0.0
        %2692 = vmatpush1.msra.mxu0 0.0
        %2693 = vmatprep.subr.mxu0 0.0
        %2694 = vmatpush1.msra.mxu0 0.0
        %2695 = vmatprep.subr.mxu0 0.0
        %2696 = vmatpush1.msra.mxu0 0.0
        %2697 = vmatprep.subr.mxu0 0.0
        %2698 = vmatpush1.msra.mxu0 0.0
        %2699 = vmatprep.subr.mxu0 0.0
        %2700 = vmatpush1.msra.mxu0 0.0
        %2701 = vmatprep.subr.mxu0 0.0
        %2702 = vmatpush1.msra.mxu0 0.0
        %2703 = vmatprep.subr.mxu0 0.0
        %2704 = vmatpush1.msra.mxu0 0.0
        %2705 = vmatprep.subr.mxu0 0.0
        %2706 = vmatpush1.msra.mxu0 0.0
        %2707 = vmatprep.subr.mxu0 0.0
        %2708 = vmatpush1.msra.mxu0 0.0
        %2709 = vmatprep.subr.mxu0 0.0
        %2710 = vmatpush1.msra.mxu0 0.0
        %2711 = vmatprep.subr.mxu0 0.0
        %2712 = vmatpush1.msra.mxu0 0.0
        %2713 = vmatprep.subr.mxu0 0.0
        %2714 = vmatpush1.msra.mxu0 0.0
        %2715 = vmatprep.subr.mxu0 0.0
        %2716 = vmatpush1.msra.mxu0 0.0
        %2717 = vmatprep.subr.mxu0 0.0
        %2718 = vmatpush1.msra.mxu0 0.0
        %2719 = vmatprep.subr.mxu0 0.0
        %2720 = vmatpush1.msra.mxu0 0.0
        %2721 = vmatprep.subr.mxu0 0.0
        %2722 = vmatpush1.msra.mxu0 0.0
        %2723 = vmatprep.subr.mxu0 0.0
        %2724 = vmatpush1.msra.mxu0 0.0
        %2725 = vmatprep.subr.mxu0 0.0
        %2726 = vmatpush1.msra.mxu0 0.0
        %2727 = vmatprep.subr.mxu0 0.0
        %2728 = vmatpush1.msra.mxu0 0.0
        %2729 = vmatprep.subr.mxu0 0.0
        %2730 = vmatpush1.msra.mxu0 0.0
        %2731 = vmatprep.subr.mxu0 0.0
        %2732 = vmatpush1.msra.mxu0 0.0
        %2733 = vmatprep.subr.mxu0 0.0
        %2734 = vmatpush1.msra.mxu0 0.0
        %2735 = vmatprep.subr.mxu0 0.0
        %2736 = vmatpush1.msra.mxu0 0.0
        %2737 = vmatprep.subr.mxu0 0.0
        %2738 = vmatpush1.msra.mxu0 0.0
        %2739 = vmatprep.subr.mxu0 0.0
        %2740 = vmatpush1.msra.mxu0 0.0
        %2741 = vmatprep.subr.mxu0 0.0
        %2742 = vmatpush1.msra.mxu0 0.0
        %2743 = vmatprep.mubr.f32.mxu0 0.0
        %2744 = vmatmul.mubr.f32.gmra.mrb[0].mxu0 %v2677
        %v2745 = vpop.f32.mrb[0].mxu0
        %v2746 = vadd.f32 %v2673, %v2745
        %v2747 = vpop.f32.mrb[0].mxu0
        %2748 = vdwg.mxu0
        %v2750 = vlaneseq
        %v2751 = vshrl.u32 %v2750, 7
        %v2752 = vsub.s32 0, %v2751
        %v2753 = vrot.slane %v2601, %v2752
        %v2755 = vadd.f32 %v2746, %v2753
        %v2756 = vxor.u32 %v2755, 2147483648
        %v2757 = vmul.f32 %v2756, 1.442695
        %v2758 = vpow.pop %v2757
        %v2759 = vadd.f32 %v2758, 1.0
        %v2760 = vrcp.pop %v2759
        %v2761 = vmul.f32 1.0, %v2760
        %v2762 = vtanh.pop %v2755
        %2764 = vrot.lane.b32.xlu0 %v2592, 32
        %v2765 = vpop.permute.xlu0 %2764
        %v2767 = vmul.f32 %v2761, %v2765
        %2769 = vrot.lane.b32.xlu0 %v2762, 64
        %v2770 = vpop.permute.xlu0 %2769
        %v2772 = vmul.f32 %v2761, %v2770
        %2774 = vrot.lane.b32.xlu0 %v2772, 32
        %v2775 = vpop.permute.xlu0 %2774
        %v2777 = vadd.f32 %v2767, %v2775
        %v2778 = vtanh.pop %v2777
        %2780 = vrot.lane.b32.xlu0 %v2778, 64
        %v2781 = vpop.permute.xlu0 %2780
        %v2783 = vmul.f32 %v2761, %v2781
        %2785 = vrot.lane.b32.xlu0 %v2783, 32
        %v2786 = vpop.permute.xlu0 %2785
        %vm2788 = vcmask 254976
        %2789 = vst.msk [vmem:[#allocation5] sm:$0x3] %vm2788, %v2786
        %2791 = vrot.lane.b32.xlu0 %v2777, 96
        %v2792 = vpop.permute.xlu0 %2791
        %2794 = vst.msk [vmem:[#allocation6] sm:$0x3] %vm2788, %v2792
        %v2795 = vld [vmem:[#allocation7] sm:$0x3]
        %v2796 = vmul.f32 %v2795, -1e+09
        %v2797 = vld [vmem:[#allocation3] sm:$0xff]
        %v2798 = vld [vmem:[#allocation3 + $0x8] sm:$0xff]
        %v2799 = vld [vmem:[#allocation4] sm:$0xff]
        %v2800 = vld [vmem:[#allocation4 + $0x8] sm:$0xff]
        %v2801 = vld [vmem:[#allocation17] sm:$0xff]
        %v2802 = vld [vmem:[#allocation17 + $0x8] sm:$0xff]
        %v2803 = vld [vmem:[#allocation17 + $0x10] sm:$0xff]
        %v2804 = vld [vmem:[#allocation17 + $0x18] sm:$0xff]
        %v2805 = vld [vmem:[%s13] sm:$0x1]
        %v2807 = vlaneseq
        %v2808 = vshrl.u32 %v2807, 7
        %v2809 = vsub.s32 0, %v2808
        %v2810 = vrot.slane %v2805, %v2809
        %v2812 = vsel %vm2602, %v2786, 0
        %2814 = vmatprep.subr.mxu0 0.0
        %2815 = vmatpush1.msra.mxu0 %v2801
        %2816 = vmatprep.subr.mxu0 0.0
        %2817 = vmatpush1.msra.mxu0 %v2802
        %2818 = vmatprep.subr.mxu0 0.0
        %2819 = vmatpush1.msra.mxu0 %v2803
        %2820 = vmatprep.subr.mxu0 0.0
        %2821 = vmatpush1.msra.mxu0 %v2804
        %2822 = vmatprep.subr.mxu0 0.0
        %2823 = vmatpush1.msra.mxu0 0.0
        %2824 = vmatprep.subr.mxu0 0.0
        %2825 = vmatpush1.msra.mxu0 0.0
        %2826 = vmatprep.subr.mxu0 0.0
        %2827 = vmatpush1.msra.mxu0 0.0
        %2828 = vmatprep.subr.mxu0 0.0
        %2829 = vmatpush1.msra.mxu0 0.0
        %2830 = vmatprep.subr.mxu0 0.0
        %2831 = vmatpush1.msra.mxu0 0.0
        %2832 = vmatprep.subr.mxu0 0.0
        %2833 = vmatpush1.msra.mxu0 0.0
        %2834 = vmatprep.subr.mxu0 0.0
        %2835 = vmatpush1.msra.mxu0 0.0
        %2836 = vmatprep.subr.mxu0 0.0
        %2837 = vmatpush1.msra.mxu0 0.0
        %2838 = vmatprep.subr.mxu0 0.0
        %2839 = vmatpush1.msra.mxu0 0.0
        %2840 = vmatprep.subr.mxu0 0.0
        %2841 = vmatpush1.msra.mxu0 0.0
        %2842 = vmatprep.subr.mxu0 0.0
        %2843 = vmatpush1.msra.mxu0 0.0
        %2844 = vmatprep.subr.mxu0 0.0
        %2845 = vmatpush1.msra.mxu0 0.0
        %2846 = vmatprep.subr.mxu0 0.0
        %2847 = vmatpush1.msra.mxu0 0.0
        %2848 = vmatprep.subr.mxu0 0.0
        %2849 = vmatpush1.msra.mxu0 0.0
        %2850 = vmatprep.subr.mxu0 0.0
        %2851 = vmatpush1.msra.mxu0 0.0
        %2852 = vmatprep.subr.mxu0 0.0
        %2853 = vmatpush1.msra.mxu0 0.0
        %2854 = vmatprep.subr.mxu0 0.0
        %2855 = vmatpush1.msra.mxu0 0.0
        %2856 = vmatprep.subr.mxu0 0.0
        %2857 = vmatpush1.msra.mxu0 0.0
        %2858 = vmatprep.subr.mxu0 0.0
        %2859 = vmatpush1.msra.mxu0 0.0
        %2860 = vmatprep.subr.mxu0 0.0
        %2861 = vmatpush1.msra.mxu0 0.0
        %2862 = vmatprep.subr.mxu0 0.0
        %2863 = vmatpush1.msra.mxu0 0.0
        %2864 = vmatprep.subr.mxu0 0.0
        %2865 = vmatpush1.msra.mxu0 0.0
        %2866 = vmatprep.subr.mxu0 0.0
        %2867 = vmatpush1.msra.mxu0 0.0
        %2868 = vmatprep.subr.mxu0 0.0
        %2869 = vmatpush1.msra.mxu0 0.0
        %2870 = vmatprep.subr.mxu0 0.0
        %2871 = vmatpush1.msra.mxu0 0.0
        %2872 = vmatprep.subr.mxu0 0.0
        %2873 = vmatpush1.msra.mxu0 0.0
        %2874 = vmatprep.subr.mxu0 0.0
        %2875 = vmatpush1.msra.mxu0 0.0
        %2876 = vmatprep.subr.mxu0 0.0
        %2877 = vmatpush1.msra.mxu0 0.0
        %2878 = vmatprep.mubr.f32.mxu0 0.0
        %2879 = vmatmul.mubr.f32.gmra.mrb[0].mxu0 %v2812
        %v2880 = vpop.f32.mrb[0].mxu0
        %v2881 = vadd.f32 %v2810, %v2880
        %v2882 = vpop.f32.mrb[0].mxu0
        %2883 = vdwg.mxu0
        %v2886 = vunpack.c.l.s4 1966171168
        %v2887 = vunpack.c.0.s8 %v2886
        %v2888 = vlaneseq
        %v2889 = vshrl.u32 %v2888, 7
        %v2890 = vsub.s32 %v2887, %v2889
        %v2891 = vrot.slane %v2881, %v2890
        %v2892 = vcombine.high %v2891, %v2891
        %v2894 = vunpack.c.l.s4 1966171168
        %v2895 = vunpack.c.0.s8 %v2894
        %v2896 = vlaneseq
        %v2897 = vshrl.u32 %v2896, 7
        %v2898 = vsub.s32 %v2895, %v2897
        %v2899 = vrot.slane %v2891, %v2898
        %v2901 = vunpack.c.l.s4 1966171168
        %v2902 = vunpack.c.0.s8 %v2901
        %v2903 = vlaneseq
        %v2904 = vshrl.u32 %v2903, 7
        %v2905 = vsub.s32 %v2902, %v2904
        %v2906 = vrot.slane %v2892, %v2905
        %v2907 = vlaneseq
        %v2908 = vshrl.u32 %v2907, 7
        %v2909 = vsub.s32 0, %v2908
        %v2910 = vrot.slane %v2899, %v2909
        %v2911 = vlaneseq
        %v2912 = vshrl.u32 %v2911, 7
        %v2913 = vsub.s32 0, %v2912
        %v2914 = vrot.slane %v2906, %v2913
        %v2917 = vadd.f32 %v2910, %v2797
        %v2918 = vadd.f32 %v2914, %v2798
        %v2919 = vtanh.pop %v2917
        %v2920 = vtanh.pop %v2918
        %v2921 = vld [vmem:[%s14] sm:$0x1]
        %v2923 = vlaneseq
        %v2924 = vshrl.u32 %v2923, 7
        %v2925 = vsub.s32 0, %v2924
        %v2926 = vrot.slane %v2921, %v2925
        %v2928 = vmul.f32 %v2919, %v2926
        %v2929 = vmul.f32 %v2920, %v2926
        %v2930 = vsel %vm2602, %v2928, 0.0
        %2931 = vadd.xlane.f32.xlu0 %v2930
        %v2932 = vpop.xlane.xlu0 %2931
        %v2933 = vsel %vm2602, %v2929, 0.0
        %2934 = vadd.xlane.f32.xlu0 %v2933
        %v2935 = vpop.xlane.xlu0 %2934
        %v2937 = vlaneseq
        %v2938 = vshrl.u32 %v2937, 7
        %v2939 = vsub.s32 0, %v2938
        %v2940 = vrot.slane %v2796, %v2939
        %2942 = vbcast.lane.b32.xlu0 %v2940, 256
        %v2943 = vpop.permute.xlu0 %2942
        %v2944 = vlaneseq
        %v2945 = vshrl.u32 %v2944, 7
        %v2946 = vsub.s32 1, %v2945
        %v2947 = vrot.slane %v2796, %v2946
        %2949 = vbcast.lane.b32.xlu0 %v2947, 256
        %v2950 = vpop.permute.xlu0 %2949
        %v2953 = vadd.f32 %v2932, %v2943
        %v2954 = vadd.f32 %v2935, %v2950
        %2957 = vset.pattern.permute.xlu0 0
        %2958 = vperm.xlu0 %2957, %v2953
        %v2959 = vpop.permute.xlu0 %2958
        %2960 = vset.pattern.permute.xlu0 0
        %2961 = vperm.xlu0 %2960, %v2954
        %v2962 = vpop.permute.xlu0 %2961
        %v2963 = vlaneseq
        %v2964 = vand.u32 %v2963, 127
        %v2965 = vlaneseq
        %v2966 = vshrl.u32 %v2965, 7
        %v2967 = vsub.s32 %v2964, %v2966
        %v2968 = vrot.slane %v2959, %v2967
        %v2969 = vlaneseq
        %v2970 = vshrl.u32 %v2969, 7
        %v2971 = vsub.s32 %v2964, %v2970
        %v2972 = vrot.slane %v2962, %v2971
        %vm2973 = vcmask 1041409
        %v2974 = vsel %vm2973, %v2972, %v2968
        %vm2976 = vcmask 58368
        %v2977 = vsel %vm2976, %v2974, -inf
        %2978 = vmax.xlane.f32.xlu0 %v2977
        %v2979 = vpop.xlane.xlu0 %2978
        %v2981 = vlaneseq
        %v2982 = vshrl.u32 %v2981, 7
        %v2983 = vsub.s32 0, %v2982
        %v2984 = vrot.slane %v2979, %v2983
        %v2985 = vlaneseq
        %v2986 = vshrl.u32 %v2985, 7
        %v2987 = vsub.s32 1, %v2986
        %v2988 = vrot.slane %v2979, %v2987
        %v2991 = vsub.f32 %v2953, %v2984
        %v2992 = vsub.f32 %v2954, %v2988
        %v2993 = vmul.f32 %v2991, 1.442695
        %v2994 = vpow.pop %v2993
        %v2995 = vmul.f32 %v2992, 1.442695
        %v2996 = vpow.pop %v2995
        %2999 = vset.pattern.permute.xlu0 0
        %3000 = vperm.xlu0 %2999, %v2994
        %v3001 = vpop.permute.xlu0 %3000
        %3002 = vset.pattern.permute.xlu0 0
        %3003 = vperm.xlu0 %3002, %v2996
        %v3004 = vpop.permute.xlu0 %3003
        %v3005 = vlaneseq
        %v3006 = vshrl.u32 %v3005, 7
        %v3007 = vsub.s32 %v2964, %v3006
        %v3008 = vrot.slane %v3001, %v3007
        %v3009 = vlaneseq
        %v3010 = vshrl.u32 %v3009, 7
        %v3011 = vsub.s32 %v2964, %v3010
        %v3012 = vrot.slane %v3004, %v3011
        %v3013 = vsel %vm2973, %v3012, %v3008
        %v3015 = vsel %vm2976, %v3013, 0.0
        %3016 = vadd.xlane.f32.xlu0 %v3015
        %v3017 = vpop.xlane.xlu0 %3016
        %v3019 = vlaneseq
        %v3020 = vshrl.u32 %v3019, 7
        %v3021 = vsub.s32 0, %v3020
        %v3022 = vrot.slane %v3017, %v3021
        %v3023 = vlaneseq
        %v3024 = vshrl.u32 %v3023, 7
        %v3025 = vsub.s32 1, %v3024
        %v3026 = vrot.slane %v3017, %v3025
        %v3029 = vrcp.pop %v3022
        %v3030 = vmul.f32 %v2994, %v3029
        %v3031 = vrcp.pop %v3026
        %v3032 = vmul.f32 %v2996, %v3031
        %3034 = vset.pattern.permute.xlu0 0
        %3035 = vperm.xlu0 %3034, %v3030
        %v3036 = vpop.permute.xlu0 %3035
        %3039 = vset.pattern.permute.xlu0 0
        %3040 = vperm.xlu0 %3039, %v3032
        %v3041 = vpop.permute.xlu0 %3040
        %v3043 = vmul.f32 %v2797, %v3036
        %v3044 = vmul.f32 %v2798, %v3041
        %v3045 = vsel %vm2602, %v3043, 0.0
        %v3046 = vrot.slane %v3045, 4
        %v3047 = vadd.f32 %v3045, %v3046
        %v3048 = vrot.slane %v3047, 2
        %v3049 = vadd.f32 %v3047, %v3048
        %v3050 = vrot.slane %v3049, 1
        %v3051 = vadd.f32 %v3049, %v3050
        %v3052 = vsel %vm2602, %v3044, 0.0
        %v3053 = vrot.slane %v3052, 4
        %v3054 = vadd.f32 %v3052, %v3053
        %v3055 = vrot.slane %v3054, 2
        %v3056 = vadd.f32 %v3054, %v3055
        %v3057 = vrot.slane %v3056, 1
        %v3058 = vadd.f32 %v3056, %v3057
        %v3059 = vld [vmem:[#allocation18] sm:$0xff]
        %v3060 = vld [vmem:[#allocation18 + $0x8] sm:$0xff]
        %v3061 = vld [vmem:[#allocation18 + $0x10] sm:$0xff]
        %v3062 = vld [vmem:[#allocation18 + $0x18] sm:$0xff]
        %v3063 = vld [vmem:[%s16] sm:$0x1]
        %v3065 = vlaneseq
        %v3066 = vshrl.u32 %v3065, 7
        %v3067 = vsub.s32 0, %v3066
        %v3068 = vrot.slane %v3063, %v3067
        %v3072 = vsel %vm2973, %v3058, %v3051
        %v3073 = vsel %vm2602, %v3072, 0
        %3075 = vmatprep.subr.mxu0 0.0
        %3076 = vmatpush1.msra.mxu0 %v3059
        %3077 = vmatprep.subr.mxu0 0.0
        %3078 = vmatpush1.msra.mxu0 %v3060
        %3079 = vmatprep.subr.mxu0 0.0
        %3080 = vmatpush1.msra.mxu0 %v3061
        %3081 = vmatprep.subr.mxu0 0.0
        %3082 = vmatpush1.msra.mxu0 %v3062
        %3083 = vmatprep.subr.mxu0 0.0
        %3084 = vmatpush1.msra.mxu0 0.0
        %3085 = vmatprep.subr.mxu0 0.0
        %3086 = vmatpush1.msra.mxu0 0.0
        %3087 = vmatprep.subr.mxu0 0.0
        %3088 = vmatpush1.msra.mxu0 0.0
        %3089 = vmatprep.subr.mxu0 0.0
        %3090 = vmatpush1.msra.mxu0 0.0
        %3091 = vmatprep.subr.mxu0 0.0
        %3092 = vmatpush1.msra.mxu0 0.0
        %3093 = vmatprep.subr.mxu0 0.0
        %3094 = vmatpush1.msra.mxu0 0.0
        %3095 = vmatprep.subr.mxu0 0.0
        %3096 = vmatpush1.msra.mxu0 0.0
        %3097 = vmatprep.subr.mxu0 0.0
        %3098 = vmatpush1.msra.mxu0 0.0
        %3099 = vmatprep.subr.mxu0 0.0
        %3100 = vmatpush1.msra.mxu0 0.0
        %3101 = vmatprep.subr.mxu0 0.0
        %3102 = vmatpush1.msra.mxu0 0.0
        %3103 = vmatprep.subr.mxu0 0.0
        %3104 = vmatpush1.msra.mxu0 0.0
        %3105 = vmatprep.subr.mxu0 0.0
        %3106 = vmatpush1.msra.mxu0 0.0
        %3107 = vmatprep.subr.mxu0 0.0
        %3108 = vmatpush1.msra.mxu0 0.0
        %3109 = vmatprep.subr.mxu0 0.0
        %3110 = vmatpush1.msra.mxu0 0.0
        %3111 = vmatprep.subr.mxu0 0.0
        %3112 = vmatpush1.msra.mxu0 0.0
        %3113 = vmatprep.subr.mxu0 0.0
        %3114 = vmatpush1.msra.mxu0 0.0
        %3115 = vmatprep.subr.mxu0 0.0
        %3116 = vmatpush1.msra.mxu0 0.0
        %3117 = vmatprep.subr.mxu0 0.0
        %3118 = vmatpush1.msra.mxu0 0.0
        %3119 = vmatprep.subr.mxu0 0.0
        %3120 = vmatpush1.msra.mxu0 0.0
        %3121 = vmatprep.subr.mxu0 0.0
        %3122 = vmatpush1.msra.mxu0 0.0
        %3123 = vmatprep.subr.mxu0 0.0
        %3124 = vmatpush1.msra.mxu0 0.0
        %3125 = vmatprep.subr.mxu0 0.0
        %3126 = vmatpush1.msra.mxu0 0.0
        %3127 = vmatprep.subr.mxu0 0.0
        %3128 = vmatpush1.msra.mxu0 0.0
        %3129 = vmatprep.subr.mxu0 0.0
        %3130 = vmatpush1.msra.mxu0 0.0
        %3131 = vmatprep.subr.mxu0 0.0
        %3132 = vmatpush1.msra.mxu0 0.0
        %3133 = vmatprep.subr.mxu0 0.0
        %3134 = vmatpush1.msra.mxu0 0.0
        %3135 = vmatprep.subr.mxu0 0.0
        %3136 = vmatpush1.msra.mxu0 0.0
        %3137 = vmatprep.subr.mxu0 0.0
        %3138 = vmatpush1.msra.mxu0 0.0
        %3139 = vmatprep.mubr.f32.mxu0 0.0
        %3140 = vmatmul.mubr.f32.gmra.mrb[0].mxu0 %v3073
        %v3141 = vpop.f32.mrb[0].mxu0
        %v3142 = vadd.f32 %v3068, %v3141
        %v3143 = vpop.f32.mrb[0].mxu0
        %3144 = vdwg.mxu0
        %v3147 = vunpack.c.l.s4 1966171168
        %v3148 = vunpack.c.0.s8 %v3147
        %v3149 = vlaneseq
        %v3150 = vshrl.u32 %v3149, 7
        %v3151 = vsub.s32 %v3148, %v3150
        %v3152 = vrot.slane %v3142, %v3151
        %v3153 = vcombine.high %v3152, %v3152
        %v3155 = vunpack.c.l.s4 1966171168
        %v3156 = vunpack.c.0.s8 %v3155
        %v3157 = vlaneseq
        %v3158 = vshrl.u32 %v3157, 7
        %v3159 = vsub.s32 %v3156, %v3158
        %v3160 = vrot.slane %v3152, %v3159
        %v3162 = vunpack.c.l.s4 1966171168
        %v3163 = vunpack.c.0.s8 %v3162
        %v3164 = vlaneseq
        %v3165 = vshrl.u32 %v3164, 7
        %v3166 = vsub.s32 %v3163, %v3165
        %v3167 = vrot.slane %v3153, %v3166
        %v3168 = vlaneseq
        %v3169 = vshrl.u32 %v3168, 7
        %v3170 = vsub.s32 0, %v3169
        %v3171 = vrot.slane %v3160, %v3170
        %v3172 = vlaneseq
        %v3173 = vshrl.u32 %v3172, 7
        %v3174 = vsub.s32 0, %v3173
        %v3175 = vrot.slane %v3167, %v3174
        %v3178 = vadd.f32 %v3171, %v2799
        %v3179 = vadd.f32 %v3175, %v2800
        %v3180 = vtanh.pop %v3178
        %v3181 = vtanh.pop %v3179
        %v3182 = vld [vmem:[%s17] sm:$0x1]
        %v3184 = vlaneseq
        %v3185 = vshrl.u32 %v3184, 7
        %v3186 = vsub.s32 0, %v3185
        %v3187 = vrot.slane %v3182, %v3186
        %v3189 = vmul.f32 %v3180, %v3187
        %v3190 = vmul.f32 %v3181, %v3187
        %v3191 = vsel %vm2602, %v3189, 0.0
        %3192 = vadd.xlane.f32.xlu0 %v3191
        %v3193 = vpop.xlane.xlu0 %3192
        %v3194 = vsel %vm2602, %v3190, 0.0
        %3195 = vadd.xlane.f32.xlu0 %v3194
        %v3196 = vpop.xlane.xlu0 %3195
        %v3197 = vtanh.pop %v3193
        %v3198 = vtanh.pop %v3196
        %v3199 = vmul.f32 %v3197, 10.0
        %v3200 = vmul.f32 %v3198, 10.0
        %v3201 = vadd.f32 %v3199, %v2943
        %v3202 = vadd.f32 %v3200, %v2950
        %3205 = vset.pattern.permute.xlu0 0
        %3206 = vperm.xlu0 %3205, %v3201
        %v3207 = vpop.permute.xlu0 %3206
        %3208 = vset.pattern.permute.xlu0 0
        %3209 = vperm.xlu0 %3208, %v3202
        %v3210 = vpop.permute.xlu0 %3209
        %v3211 = vlaneseq
        %v3212 = vshrl.u32 %v3211, 7
        %v3213 = vsub.s32 %v2964, %v3212
        %v3214 = vrot.slane %v3207, %v3213
        %v3215 = vlaneseq
        %v3216 = vshrl.u32 %v3215, 7
        %v3217 = vsub.s32 %v2964, %v3216
        %v3218 = vrot.slane %v3210, %v3217
        %v3219 = vsel %vm2973, %v3218, %v3214
        %v3221 = vsel %vm2976, %v3219, -inf
        %3222 = vmax.xlane.f32.xlu0 %v3221
        %v3223 = vpop.xlane.xlu0 %3222
        %v3225 = vlaneseq
        %v3226 = vshrl.u32 %v3225, 7
        %v3227 = vsub.s32 0, %v3226
        %v3228 = vrot.slane %v3223, %v3227
        %v3229 = vlaneseq
        %v3230 = vshrl.u32 %v3229, 7
        %v3231 = vsub.s32 1, %v3230
        %v3232 = vrot.slane %v3223, %v3231
        %v3235 = vsub.f32 %v3201, %v3228
        %v3236 = vsub.f32 %v3202, %v3232
        %v3237 = vmul.f32 %v3235, 1.442695
        %v3238 = vpow.pop %v3237
        %v3239 = vmul.f32 %v3236, 1.442695
        %v3240 = vpow.pop %v3239
        %3243 = vset.pattern.permute.xlu0 0
        %3244 = vperm.xlu0 %3243, %v3238
        %v3245 = vpop.permute.xlu0 %3244
        %3246 = vset.pattern.permute.xlu0 0
        %3247 = vperm.xlu0 %3246, %v3240
        %v3248 = vpop.permute.xlu0 %3247
        %v3249 = vlaneseq
        %v3250 = vshrl.u32 %v3249, 7
        %v3251 = vsub.s32 %v2964, %v3250
        %v3252 = vrot.slane %v3245, %v3251
        %v3253 = vlaneseq
        %v3254 = vshrl.u32 %v3253, 7
        %v3255 = vsub.s32 %v2964, %v3254
        %v3256 = vrot.slane %v3248, %v3255
        %v3257 = vsel %vm2973, %v3256, %v3252
        %v3259 = vsel %vm2976, %v3257, 0.0
        %3260 = vadd.xlane.f32.xlu0 %v3259
        %v3261 = vpop.xlane.xlu0 %3260
        %v3263 = vlaneseq
        %v3264 = vshrl.u32 %v3263, 7
        %v3265 = vsub.s32 0, %v3264
        %v3266 = vrot.slane %v3261, %v3265
        %v3267 = vlaneseq
        %v3268 = vshrl.u32 %v3267, 7
        %v3269 = vsub.s32 1, %v3268
        %v3270 = vrot.slane %v3261, %v3269
        %v3273 = vrcp.pop %v3266
        %v3274 = vmul.f32 %v3238, %v3273
        %v3275 = vrcp.pop %v3270
        %v3276 = vmul.f32 %v3240, %v3275
        %3279 = vset.pattern.permute.xlu0 0
        %3280 = vperm.xlu0 %3279, %v3274
        %v3281 = vpop.permute.xlu0 %3280
        %3282 = vset.pattern.permute.xlu0 0
        %3283 = vperm.xlu0 %3282, %v3276
        %v3284 = vpop.permute.xlu0 %3283
        %v3285 = vlaneseq
        %v3286 = vshrl.u32 %v3285, 7
        %v3287 = vsub.s32 %v2964, %v3286
        %v3288 = vrot.slane %v3281, %v3287
        %v3289 = vlaneseq
        %v3290 = vshrl.u32 %v3289, 7
        %v3291 = vsub.s32 %v2964, %v3290
        %v3292 = vrot.slane %v3284, %v3291
        %v3293 = vsel %vm2973, %v3292, %v3288
        %s3295 = smul.u32 %s37, 2
        %s3296 = scalar_lea.vmem [#allocation20], %s3295
        %3297 = vst.msk [vmem:[%s3296] sm:$0x3] %vm2976, %v3293
        %s3298 = scalar_lea.vmem %s1, %s3295
        %v3299 = vld [vmem:[%s3298] sm:$0x3]
        %v3301 = vlaneseq
        %v3302 = vshrl.u32 %v3301, 7
        %v3303 = vsub.s32 0, %v3302
        %v3304 = vrot.slane %v3299, %v3303
        %3306 = vbcast.lane.b32.xlu0 %v3304, 256
        %v3307 = vpop.permute.xlu0 %3306
        %v3308 = vlaneseq
        %v3309 = vshrl.u32 %v3308, 7
        %v3310 = vsub.s32 1, %v3309
        %v3311 = vrot.slane %v3299, %v3310
        %3313 = vbcast.lane.b32.xlu0 %v3311, 256
        %v3314 = vpop.permute.xlu0 %3313
        %v3317 = vadd.f32 %v3201, %v3307
        %v3318 = vadd.f32 %v3202, %v3314
        %3321 = vset.pattern.permute.xlu0 0
        %3322 = vperm.xlu0 %3321, %v3317
        %v3323 = vpop.permute.xlu0 %3322
        %3324 = vset.pattern.permute.xlu0 0
        %3325 = vperm.xlu0 %3324, %v3318
        %v3326 = vpop.permute.xlu0 %3325
        %v3327 = vlaneseq
        %v3328 = vshrl.u32 %v3327, 7
        %v3329 = vsub.s32 %v2964, %v3328
        %v3330 = vrot.slane %v3323, %v3329
        %v3331 = vlaneseq
        %v3332 = vshrl.u32 %v3331, 7
        %v3333 = vsub.s32 %v2964, %v3332
        %v3334 = vrot.slane %v3326, %v3333
        %v3335 = vsel %vm2973, %v3334, %v3330
        %v3337 = vsel %vm2976, %v3335, -inf
        %3338 = vmax.xlane.f32.xlu0 %v3337
        %v3339 = vpop.xlane.xlu0 %3338
        %v3341 = vlaneseq
        %v3342 = vshrl.u32 %v3341, 7
        %v3343 = vsub.s32 0, %v3342
        %v3344 = vrot.slane %v3339, %v3343
        %v3345 = vlaneseq
        %v3346 = vshrl.u32 %v3345, 7
        %v3347 = vsub.s32 1, %v3346
        %v3348 = vrot.slane %v3339, %v3347
        %vm3351 = vcmp.ge.f32.partialorder %v3317, %v3344
        %vm3352 = vcmp.ge.f32.partialorder %v3318, %v3348
        %3354 = vbcast.lane.b32.xlu0 %v2964, 256
        %v3355 = vpop.permute.xlu0 %3354
        %v3356 = vsel %vm3351, %v3355, 8
        %v3357 = vsel %vm3352, %v3355, 8
        %3358 = vset.pattern.permute.xlu0 0
        %3359 = vperm.xlu0 %3358, %v3356
        %v3360 = vpop.permute.xlu0 %3359
        %3361 = vset.pattern.permute.xlu0 0
        %3362 = vperm.xlu0 %3361, %v3357
        %v3363 = vpop.permute.xlu0 %3362
        %v3364 = vlaneseq
        %v3365 = vshrl.u32 %v3364, 7
        %v3366 = vsub.s32 %v2964, %v3365
        %v3367 = vrot.slane %v3360, %v3366
        %v3368 = vlaneseq
        %v3369 = vshrl.u32 %v3368, 7
        %v3370 = vsub.s32 %v2964, %v3369
        %v3371 = vrot.slane %v3363, %v3370
        %v3372 = vsel %vm2973, %v3371, %v3367
        %v3373 = vsel %vm2976, %v3372, 2147483647
        %v3374 = vand.u32 %v3373, 65535
        %v3375 = vshra.s32 %v3373, 16
        %v3376 = vcvt.s32.f32 %v3374
        %v3377 = vcvt.s32.f32 %v3375
        %3378 = vmin.xlane.f32.xlu0 %v3377
        %v3379 = vpop.xlane.xlu0 %3378
        %vm3380 = vcmp.eq.f32.partialorder %v3377, %v3379
        %v3381 = vsel %vm3380, %v3376, inf
        %3382 = vmin.xlane.f32.xlu0 %v3381
        %v3383 = vpop.xlane.xlu0 %3382
        %v3384 = vcvt.f32.s32 %v3383
        %v3385 = vcvt.f32.s32 %v3379
        %v3386 = vshll.u32 %v3385, 16
        %v3387 = vadd.s32 %v3386, %v3384
        %s3388 = scalar_lea.vmem %s20, %s3295
        %vm3389 = vcmask 1024
        %3390 = vst.msk [vmem:[%s3388] sm:$0x3] %vm3389, %v3387
        %vm3391 = vcmp.eq.s32.totalorder %v2964, %v3387
        %v3392 = vsel %vm3391, 1, 0
        %v3393 = vcvt.s32.f32 %v3392
        %v3394 = vmax.f32 %v2795, %v3393
        %3395 = vst.msk [vmem:[#allocation7] sm:$0x3] %vm2976, %v3394
        %v3396 = vld [vmem:[#allocation2] sm:$0xff]
        %v3397 = vld [vmem:[#allocation2 + $0x8] sm:$0xff]
        %v3398 = vlaneseq
        %v3399 = vshrl.u32 %v3398, 7
        %v3400 = vsub.s32 0, %v3399
        %v3401 = vrot.slane %v3393, %v3400
        %3403 = vbcast.lane.b32.xlu0 %v3401, 256
        %v3404 = vpop.permute.xlu0 %3403
        %v3405 = vlaneseq
        %v3406 = vshrl.u32 %v3405, 7
        %v3407 = vsub.s32 1, %v3406
        %v3408 = vrot.slane %v3393, %v3407
        %3410 = vbcast.lane.b32.xlu0 %v3408, 256
        %v3411 = vpop.permute.xlu0 %3410
        %v3412 = vmul.f32 %v3396, %v3404
        %v3413 = vmul.f32 %v3397, %v3411
        %v3414 = vsel %vm2602, %v3412, 0.0
        %v3415 = vrot.slane %v3414, 4
        %v3416 = vadd.f32 %v3414, %v3415
        %v3417 = vrot.slane %v3416, 2
        %v3418 = vadd.f32 %v3416, %v3417
        %v3419 = vrot.slane %v3418, 1
        %v3420 = vadd.f32 %v3418, %v3419
        %v3421 = vsel %vm2602, %v3413, 0.0
        %v3422 = vrot.slane %v3421, 4
        %v3423 = vadd.f32 %v3421, %v3422
        %v3424 = vrot.slane %v3423, 2
        %v3425 = vadd.f32 %v3423, %v3424
        %v3426 = vrot.slane %v3425, 1
        %v3427 = vadd.f32 %v3425, %v3426
        %v3430 = vsel %vm2973, %v3427, %v3420
        %3432 = vst.msk [vmem:[#allocation8] sm:$0x3] %vm2788, %v3430
        // Predicated region
        $region125: #{pointer_net_forward.1} parent=95 // pred_check
          %p3433 = pneg %p449
        $region126: #{pointer_net_forward.1} parent=95 // pred_check_branch
          %3435 = sbr.rel (%p3433) target = $region128
        $region127: #{pointer_net_forward.1} parent=95 // pred_region
          %s3437 = ssub.s32 256, 256
          %3438 = vsyncadd [#allocation11], %s3437
          %s3439 = sshll.u32 [#allocation20], 4
          %s3440 = int_to_ptr.vmem [resolvable:$true] %s3439
          %3445 = dma.vmem_to_hbm [thread:$0]  %s3440, 256, %s19, [#allocation11], 32, 32, 2
        $region128: #{pointer_net_forward.1} parent=95 // pred_fallthru
          _
        // Predicated region
        $region129: #{pointer_net_forward.1} parent=95 // pred_check
          %p3446 = pneg %p470
        $region130: #{pointer_net_forward.1} parent=95 // pred_check_branch
          %3448 = sbr.rel (%p3446) target = $region132
        $region131: #{pointer_net_forward.1} parent=95 // pred_region
          _
        $region132: #{pointer_net_forward.1} parent=95 // pred_fallthru
          _
        // Predicated region
        $region133: #{pointer_net_forward.1} parent=95 // pred_check
          %p3449 = pneg %p449
        $region134: #{pointer_net_forward.1} parent=95 // pred_check_branch
          %3451 = sbr.rel (%p3449) target = $region136
        $region135: #{pointer_net_forward.1} parent=95 // pred_region
          %3452 = dma.done [#allocation11], 256
        $region136: #{pointer_net_forward.1} parent=95 // pred_fallthru
          _
        // Predicated region
        $region137: #{pointer_net_forward.1} parent=95 // pred_check
          %p3453 = pneg %p470
        $region138: #{pointer_net_forward.1} parent=95 // pred_check_branch
          %3455 = sbr.rel (%p3453) target = $region140
        $region139: #{pointer_net_forward.1} parent=95 // pred_region
          _
        $region140: #{pointer_net_forward.1} parent=95 // pred_fallthru
          _
      $region96: #{pointer_net_forward.1} parent=5 // pred_fallthru
        _
      %p3456 = scmp.le.s32.totalorder 2, %s32
      // Predicated region
      $region141: #{pointer_net_forward.1} parent=5 // pred_check
        %p3457 = pneg %p3456
      $region142: #{pointer_net_forward.1} parent=5 // pred_check_branch
        %3459 = sbr.rel (%p3457) target = $region144
      $region143: #{pointer_net_forward.1} parent=5 // pred_region
        %s3460 = ssub.s32 %s32, 2
      $region144: #{pointer_net_forward.1} parent=5 // pred_fallthru
        _
    $region6: #{pointer_net_forward.1} parent=1 // loop_footer
      %s36 = sadd.s32 1, %s32
    $region7: #{pointer_net_forward.1} parent=1 // loop_footer_branch
      %31 = sbr.rel target = $region3
    $region8: #{pointer_net_forward.1} parent=1 // loop_exit
      _
    %3461 = vsyncpa [#allocation10], 1
    %s3462 = scalar_lea.sflag [#allocation10], 1
    %3463 = vsyncpa %s3462, 1
    %3464 = vsyncpa [#allocation13], 1
    %3465 = vsyncpa [#allocation16], 1
    %3466 = vsyncpa [#allocation19], 1
    %3467 = vsyncpa [#allocation11], 1
    %s3468 = scalar_lea.sflag [#allocation11], 1
    %3469 = vsyncpa %s3468, 1

</llo_original>
